<compile_context>
chip_gen: v7x
topology: tpu7x:2x2x1
jax: 0.10.0
libtpu: 0.0.40
codegen_flags: <defaults>
</compile_context>

<pallas_src>
import functools

import jax
import jax.numpy as jnp
from jax.experimental import pallas as pl
from jax.experimental.pallas import tpu as pltpu

_NEG = -1e30


def _vmem_specs(n):
    return [pl.BlockSpec(memory_space=pltpu.MemorySpace.VMEM) for _ in range(n)]


def _round_up(x, m):
    return ((x + m - 1) // m) * m


# ----------------------------------------------------------------------------
# Fused encoder + greedy-decoder kernel (single invocation).
#
# Inputs (all VMEM-resident for the whole call):
#   ids_ref:      (S*Bp, 1) int32   source token ids, time-major, batch-padded
#   enc_emb_ref:  (Vin_p, E) bf16   encoder embedding table (rows >= Vin zero)
#   enc_wx_ref:   (E, 3H)   bf16    encoder W_ih^T, columns [r|z|n]
#   enc_wh_ref:   (H, 3H)   bf16    encoder W_hh^T, columns [r|z|n]
#   enc_bx_ref:   (1, 3H)   f32     [b_ih_r+b_hh_r | b_ih_z+b_hh_z | b_ih_n]
#   enc_bhn_ref:  (1, H)    f32     b_hh_n (stays inside the r gate)
#   dec_*:        same layout for the decoder GRU
#   wout_ref:     (H, Vp)   bf16    output projection (cols >= V are zero)
#   bout_ref:     (1, Vp)   f32     output bias (cols >= V are -1e30)
# Outputs:
#   logp_ref:     (T, Bp, Vp) f32   per-step log-softmax
#   h_out_ref:    (Bp, H)   f32     final decoder hidden state
# ----------------------------------------------------------------------------
def seq2seq_kernel(ids_ref, enc_emb_ref, enc_wx_ref, enc_wh_ref, enc_bx_ref,
                   enc_bhn_ref, dec_emb_ref, dec_wx_ref, dec_wh_ref,
                   dec_bx_ref, dec_bhn_ref, wout_ref, bout_ref,
                   logp_ref, h_out_ref):
    T, Bp, Vp = logp_ref.shape
    H = h_out_ref.shape[1]
    E = enc_emb_ref.shape[1]
    SB = ids_ref.shape[0]
    S = SB // Bp
    Vin_p = enc_emb_ref.shape[0]
    bf16 = jnp.bfloat16

    # ---------------- Encoder ------------------------------------------------
    # One-hot gather of ALL source embeddings (exact: 1.0 * bf16 value), then
    # the input->hidden projection for every timestep hoisted into a single
    # (S*Bp, E) @ (E, 3H) matmul (one big MXU push instead of S tiny M=8 ones).
    lane_in = jax.lax.broadcasted_iota(jnp.int32, (SB, Vin_p), 1)
    onehot_src = (lane_in == ids_ref[...]).astype(bf16)             # (SB, Vin_p)
    x_all = jnp.dot(onehot_src, enc_emb_ref[...],
                    preferred_element_type=jnp.float32)             # (SB, E)
    gi_all = jnp.dot(x_all.astype(bf16), enc_wx_ref[...],
                     preferred_element_type=jnp.float32) + enc_bx_ref[...]

    enc_wh = enc_wh_ref[...]
    enc_bhn = enc_bhn_ref[...]

    # Serial recurrence: only h @ Wh + gate math per step (static unroll, S small).
    h = jnp.zeros((Bp, H), jnp.float32)
    for t in range(S):
        gx = gi_all[t * Bp:(t + 1) * Bp, :]                         # (Bp, 3H)
        gh = jnp.dot(h.astype(bf16), enc_wh,
                     preferred_element_type=jnp.float32)            # (Bp, 3H)
        r = jax.nn.sigmoid(gx[:, 0:H] + gh[:, 0:H])
        z = jax.nn.sigmoid(gx[:, H:2 * H] + gh[:, H:2 * H])
        n = jnp.tanh(gx[:, 2 * H:3 * H] + r * (gh[:, 2 * H:3 * H] + enc_bhn))
        h = (1.0 - z) * n + z * h

    # ---------------- Greedy decoder -----------------------------------------
    dec_emb = dec_emb_ref[...]
    dec_wx = dec_wx_ref[...]
    dec_wh = dec_wh_ref[...]
    dec_bx = dec_bx_ref[...]
    dec_bhn = dec_bhn_ref[...]
    wout = wout_ref[...]
    bout = bout_ref[...]

    lane_out = jax.lax.broadcasted_iota(jnp.int32, (Bp, Vp), 1)
    # SOS token id = 0 for every batch row -> broadcast embedding row 0.
    x = jnp.broadcast_to(dec_emb[0:1, :], (Bp, E))                  # bf16

    for t in range(T):
        gx = jnp.dot(x, dec_wx, preferred_element_type=jnp.float32) + dec_bx
        gh = jnp.dot(h.astype(bf16), dec_wh,
                     preferred_element_type=jnp.float32)
        r = jax.nn.sigmoid(gx[:, 0:H] + gh[:, 0:H])
        z = jax.nn.sigmoid(gx[:, H:2 * H] + gh[:, H:2 * H])
        n = jnp.tanh(gx[:, 2 * H:3 * H] + r * (gh[:, 2 * H:3 * H] + dec_bhn))
        h = (1.0 - z) * n + z * h

        logits = (jnp.dot(h.astype(bf16), wout,
                          preferred_element_type=jnp.float32) + bout)
        # log-softmax in f32 (padded lanes carry -1e30 bias -> zero prob mass).
        m = jnp.max(logits, axis=-1, keepdims=True)
        s = logits - m
        lse = jnp.log(jnp.sum(jnp.exp(s), axis=-1, keepdims=True))
        logp_ref[t] = s - lse

        # Greedy next token: first-occurrence argmax (matches jnp.argmax),
        # then a one-hot MXU gather of the next input embedding.
        idx = jnp.min(jnp.where(logits >= m, lane_out, Vp),
                      axis=-1, keepdims=True)
        onehot = (lane_out == idx).astype(bf16)                     # (Bp, Vp)
        x = jnp.dot(onehot, dec_emb,
                    preferred_element_type=jnp.float32).astype(bf16)

    h_out_ref[...] = h


# ----------------------------------------------------------------------------
# Parameter packing: PyTorch-convention weights -> fused kernel layout.
#   MXU operands (weights, embedding tables, wout) are cast to bf16 once here;
#   biases stay f32.
# ----------------------------------------------------------------------------
def _pack_gru(wih, whh, bih, bhh):
    """wih: (3H, E), whh: (3H, H), bih/bhh: (3H,) -> wx, wh, bx, bhn."""
    H = whh.shape[1]
    wx = wih.T.astype(jnp.bfloat16)                                 # (E, 3H)
    wh = whh.T.astype(jnp.bfloat16)                                 # (H, 3H)
    bx = jnp.concatenate([bih[0:H] + bhh[0:H],
                          bih[H:2 * H] + bhh[H:2 * H],
                          bih[2 * H:3 * H]])[None, :].astype(jnp.float32)
    bhn = bhh[2 * H:3 * H][None, :].astype(jnp.float32)
    return wx, wh, bx, bhn


def pack_params(raw):
    vin, emb = raw["enc_embedding"].shape
    vout = raw["dec_embedding"].shape[0]
    hid = raw["enc_whh"].shape[1]
    vin_p = _round_up(vin, 128)
    vp = _round_up(vout, 128)

    enc_wx, enc_wh, enc_bx, enc_bhn = _pack_gru(
        raw["enc_wih"], raw["enc_whh"], raw["enc_bih"], raw["enc_bhh"])
    dec_wx, dec_wh, dec_bx, dec_bhn = _pack_gru(
        raw["dec_wih"], raw["dec_whh"], raw["dec_bih"], raw["dec_bhh"])

    params = {
        "enc_emb": jnp.pad(raw["enc_embedding"],
                           ((0, vin_p - vin), (0, 0))).astype(jnp.bfloat16),
        "enc_wx": enc_wx, "enc_wh": enc_wh,
        "enc_bx": enc_bx, "enc_bhn": enc_bhn,
        "dec_emb": jnp.pad(raw["dec_embedding"],
                           ((0, vp - vout), (0, 0))).astype(jnp.bfloat16),
        "dec_wx": dec_wx, "dec_wh": dec_wh,
        "dec_bx": dec_bx, "dec_bhn": dec_bhn,
        "wout": jnp.pad(raw["dec_wout"].T,
                        ((0, 0), (0, vp - vout))).astype(jnp.bfloat16),
        "bout": jnp.pad(raw["dec_bout"][None, :].astype(jnp.float32),
                        ((0, 0), (0, vp - vout)), constant_values=_NEG),
    }
    meta = {"out_vocab": vout, "hidden": hid, "embed": emb}
    return params, meta


# ----------------------------------------------------------------------------
# Full Model.forward equivalent (greedy decoding, targets=None).
# ----------------------------------------------------------------------------
def model_forward(params, inputs, *, max_seq_len, out_vocab):
    B, S = inputs.shape
    H = params["dec_wh"].shape[0]
    Vp = params["wout"].shape[1]
    Bp = _round_up(B, 8)                  # f32 sublane tile

    # Only glue: time-major, batch-padded int32 ids (a few dozen scalars).
    ids = jnp.zeros((S, Bp), jnp.int32).at[:, :B].set(inputs.T.astype(jnp.int32))
    ids_flat = ids.reshape(S * Bp, 1)

    logp, h_dec = pl.pallas_call(
        seq2seq_kernel,
        out_shape=(jax.ShapeDtypeStruct((max_seq_len, Bp, Vp), jnp.float32),
                   jax.ShapeDtypeStruct((Bp, H), jnp.float32)),
        in_specs=_vmem_specs(13),
        out_specs=(pl.BlockSpec(memory_space=pltpu.MemorySpace.VMEM),
                   pl.BlockSpec(memory_space=pltpu.MemorySpace.VMEM)),
    )(ids_flat,
      params["enc_emb"], params["enc_wx"], params["enc_wh"],
      params["enc_bx"], params["enc_bhn"],
      params["dec_emb"], params["dec_wx"], params["dec_wh"],
      params["dec_bx"], params["dec_bhn"],
      params["wout"], params["bout"])

    decoder_outputs = jnp.transpose(logp[:, :B, :out_vocab], (1, 0, 2))  # (B,T,V)
    decoder_hidden = h_dec[None, :B, :]                                  # (1,B,H)
    return decoder_outputs, decoder_hidden, None


# ----------------------------------------------------------------------------
# Raw (PyTorch-convention) parameter init + pure-JAX reference for validation.
# The reference mirrors the bf16-MXU-operand / f32-accumulate arithmetic of
# the kernel (gates, biases and softmax in f32), i.e. the same forward pass.
# ----------------------------------------------------------------------------
def init_raw_params(key, input_size, output_size, embedding_size, hidden_size):
    ks = jax.random.split(key, 12)
    s = 1.0 / jnp.sqrt(hidden_size)

    def u(k, shape):
        return jax.random.uniform(k, shape, jnp.float32, -s, s)

    return {
        "enc_embedding": jax.random.normal(ks[0], (input_size, embedding_size), jnp.float32),
        "enc_wih": u(ks[1], (3 * hidden_size, embedding_size)),
        "enc_whh": u(ks[2], (3 * hidden_size, hidden_size)),
        "enc_bih": u(ks[3], (3 * hidden_size,)),
        "enc_bhh": u(ks[4], (3 * hidden_size,)),
        "dec_embedding": jax.random.normal(ks[5], (output_size, embedding_size), jnp.float32),
        "dec_wih": u(ks[6], (3 * hidden_size, embedding_size)),
        "dec_whh": u(ks[7], (3 * hidden_size, hidden_size)),
        "dec_bih": u(ks[8], (3 * hidden_size,)),
        "dec_bhh": u(ks[9], (3 * hidden_size,)),
        "dec_wout": u(ks[10], (output_size, hidden_size)),
        "dec_bout": u(ks[11], (output_size,)),
    }


def reference_forward(raw, inputs, max_seq_len):
    def mm(a, b):  # bf16 MXU operands, f32 accumulate (same as the kernel)
        return jnp.dot(a.astype(jnp.bfloat16), b.astype(jnp.bfloat16),
                       preferred_element_type=jnp.float32)

    def gru_cell(x, h, wih, whh, bih, bhh):
        H = h.shape[1]
        gi = mm(x, wih.T) + bih
        gh = mm(h, whh.T) + bhh
        r = jax.nn.sigmoid(gi[:, :H] + gh[:, :H])
        z = jax.nn.sigmoid(gi[:, H:2 * H] + gh[:, H:2 * H])
        n = jnp.tanh(gi[:, 2 * H:] + r * gh[:, 2 * H:])
        return (1.0 - z) * n + z * h

    B, S = inputs.shape
    H = raw["enc_whh"].shape[1]
    emb = raw["enc_embedding"][inputs]
    h = jnp.zeros((B, H), jnp.float32)
    for t in range(S):
        h = gru_cell(emb[:, t], h, raw["enc_wih"], raw["enc_whh"],
                     raw["enc_bih"], raw["enc_bhh"])
    dec_h = h
    tok = jnp.zeros((B,), jnp.int32)
    outs = []
    for _ in range(max_seq_len):
        x = raw["dec_embedding"][tok]
        dec_h = gru_cell(x, dec_h, raw["dec_wih"], raw["dec_whh"],
                         raw["dec_bih"], raw["dec_bhh"])
        logits = mm(dec_h, raw["dec_wout"].T) + raw["dec_bout"]
        logp = jax.nn.log_softmax(logits, axis=-1)
        outs.append(logp[:, None, :])
        tok = jnp.argmax(logits, axis=-1).astype(jnp.int32)
    return jnp.concatenate(outs, axis=1), dec_h[None]


if __name__ == "__main__":
    INPUT_SIZE = 16        # source vocab
    OUTPUT_SIZE = 16       # target vocab
    EMBEDDING_SIZE = 128
    HIDDEN_SIZE = 128
    BATCH = 2
    SRC_SEQ_LEN = 8
    MAX_SEQ_LEN = 8

    key = jax.random.PRNGKey(0)
    pkey, ikey = jax.random.split(key)
    raw = init_raw_params(pkey, INPUT_SIZE, OUTPUT_SIZE, EMBEDDING_SIZE, HIDDEN_SIZE)
    params, meta = pack_params(raw)
    inputs = jax.random.randint(ikey, (BATCH, SRC_SEQ_LEN), 0, INPUT_SIZE, jnp.int32)

    fwd = jax.jit(functools.partial(model_forward, max_seq_len=MAX_SEQ_LEN,
                                    out_vocab=meta["out_vocab"]))
    decoder_outputs, decoder_hidden, _ = fwd(params, inputs)
    jax.block_until_ready((decoder_outputs, decoder_hidden))

    assert decoder_outputs.shape == (BATCH, MAX_SEQ_LEN, OUTPUT_SIZE)
    assert decoder_hidden.shape == (1, BATCH, HIDDEN_SIZE)

    # Validate against a pure-JAX reference of the same forward pass.
    ref_out, ref_hid = reference_forward(raw, inputs, MAX_SEQ_LEN)
    assert jnp.allclose(decoder_outputs, ref_out, atol=2e-3, rtol=2e-3)
    assert jnp.allclose(decoder_hidden, ref_hid, atol=2e-3, rtol=2e-3)

    print("KERNEL_OK")
</pallas_src>

<mosaic_0001>
module attributes {stable_mosaic.version = 11 : i64} {
  func.func @seq2seq_kernel(%arg0: memref<64x1xi32, #tpu.memory_space<vmem>>, %arg1: memref<128x128xbf16, #tpu.memory_space<vmem>>, %arg2: memref<128x384xbf16, #tpu.memory_space<vmem>>, %arg3: memref<128x384xbf16, #tpu.memory_space<vmem>>, %arg4: memref<1x384xf32, #tpu.memory_space<vmem>>, %arg5: memref<1x128xf32, #tpu.memory_space<vmem>>, %arg6: memref<128x128xbf16, #tpu.memory_space<vmem>>, %arg7: memref<128x384xbf16, #tpu.memory_space<vmem>>, %arg8: memref<128x384xbf16, #tpu.memory_space<vmem>>, %arg9: memref<1x384xf32, #tpu.memory_space<vmem>>, %arg10: memref<1x128xf32, #tpu.memory_space<vmem>>, %arg11: memref<128x128xbf16, #tpu.memory_space<vmem>>, %arg12: memref<1x128xf32, #tpu.memory_space<vmem>>, %arg13: memref<8x8x128xf32, #tpu.memory_space<vmem>>, %arg14: memref<8x128xf32, #tpu.memory_space<vmem>>) attributes {dimension_semantics = [], scalar_prefetch = 0 : i64, scratch_operands = 0 : i64, tpu.core_type = #tpu.core_type<tc>} {
    %0 = tpu.iota {dimensions = array<i32: 1>} : vector<64x128xi32>
    %c0 = arith.constant 0 : index
    %c0_0 = arith.constant 0 : index
    %1 = vector.load %arg0[%c0, %c0_0] : memref<64x1xi32, #tpu.memory_space<vmem>>, vector<64x1xi32>
    %2 = vector.broadcast %1 : vector<64x1xi32> to vector<64x128xi32>
    %3 = arith.cmpi eq, %0, %2 : vector<64x128xi32>
    %4 = arith.extui %3 : vector<64x128xi1> to vector<64x128xi32>
    %5 = arith.sitofp %4 : vector<64x128xi32> to vector<64x128xf32>
    %6 = arith.truncf %5 : vector<64x128xf32> to vector<64x128xbf16>
    %c0_1 = arith.constant 0 : index
    %c0_2 = arith.constant 0 : index
    %7 = vector.load %arg1[%c0_1, %c0_2] : memref<128x128xbf16, #tpu.memory_space<vmem>>, vector<128x128xbf16>
    %cst = arith.constant dense<0.000000e+00> : vector<64x128xf32>
    %8 = tpu.matmul %6, %7, %cst {dimension_numbers = #tpu.dot_dimension_numbers<[1], [0], [0], [1], [0, 0, 1, 1], [], []>} : vector<64x128xbf16>, vector<128x128xbf16>, vector<64x128xf32> -> vector<64x128xf32>
    %9 = arith.truncf %8 : vector<64x128xf32> to vector<64x128xbf16>
    %c0_3 = arith.constant 0 : index
    %c0_4 = arith.constant 0 : index
    %10 = vector.load %arg2[%c0_3, %c0_4] : memref<128x384xbf16, #tpu.memory_space<vmem>>, vector<128x384xbf16>
    %cst_5 = arith.constant dense<0.000000e+00> : vector<64x384xf32>
    %11 = tpu.matmul %9, %10, %cst_5 {dimension_numbers = #tpu.dot_dimension_numbers<[1], [0], [0], [1], [0, 0, 1, 1], [], []>} : vector<64x128xbf16>, vector<128x384xbf16>, vector<64x384xf32> -> vector<64x384xf32>
    %c0_6 = arith.constant 0 : index
    %c0_7 = arith.constant 0 : index
    %12 = vector.load %arg4[%c0_6, %c0_7] : memref<1x384xf32, #tpu.memory_space<vmem>>, vector<1x384xf32>
    %13 = vector.broadcast %12 : vector<1x384xf32> to vector<64x384xf32>
    %14 = arith.addf %11, %13 : vector<64x384xf32>
    %c0_8 = arith.constant 0 : index
    %c0_9 = arith.constant 0 : index
    %15 = vector.load %arg3[%c0_8, %c0_9] : memref<128x384xbf16, #tpu.memory_space<vmem>>, vector<128x384xbf16>
    %c0_10 = arith.constant 0 : index
    %c0_11 = arith.constant 0 : index
    %16 = vector.load %arg5[%c0_10, %c0_11] : memref<1x128xf32, #tpu.memory_space<vmem>>, vector<1x128xf32>
    %cst_12 = arith.constant 0.000000e+00 : f32
    %17 = vector.broadcast %cst_12 : f32 to vector<8x128xf32>
    %18 = vector.extract_strided_slice %14 {offsets = [0, 0], sizes = [8, 384], strides = [1, 1]} : vector<64x384xf32> to vector<8x384xf32>
    %19 = arith.truncf %17 : vector<8x128xf32> to vector<8x128xbf16>
    %cst_13 = arith.constant dense<0.000000e+00> : vector<8x384xf32>
    %20 = tpu.matmul %19, %15, %cst_13 {dimension_numbers = #tpu.dot_dimension_numbers<[1], [0], [0], [1], [0, 0, 1, 1], [], []>} : vector<8x128xbf16>, vector<128x384xbf16>, vector<8x384xf32> -> vector<8x384xf32>
    %21 = vector.extract_strided_slice %18 {offsets = [0, 0], sizes = [8, 128], strides = [1, 1]} : vector<8x384xf32> to vector<8x128xf32>
    %22 = vector.extract_strided_slice %20 {offsets = [0, 0], sizes = [8, 128], strides = [1, 1]} : vector<8x384xf32> to vector<8x128xf32>
    %23 = arith.addf %21, %22 : vector<8x128xf32>
    %24 = arith.negf %23 : vector<8x128xf32>
    %25 = math.exp %24 : vector<8x128xf32>
    %cst_14 = arith.constant 1.000000e+00 : f32
    %26 = vector.broadcast %cst_14 : f32 to vector<8x128xf32>
    %27 = arith.addf %26, %25 : vector<8x128xf32>
    %28 = arith.divf %26, %27 : vector<8x128xf32>
    %29 = vector.extract_strided_slice %18 {offsets = [0, 128], sizes = [8, 128], strides = [1, 1]} : vector<8x384xf32> to vector<8x128xf32>
    %30 = vector.extract_strided_slice %20 {offsets = [0, 128], sizes = [8, 128], strides = [1, 1]} : vector<8x384xf32> to vector<8x128xf32>
    %31 = arith.addf %29, %30 : vector<8x128xf32>
    %32 = arith.negf %31 : vector<8x128xf32>
    %33 = math.exp %32 : vector<8x128xf32>
    %cst_15 = arith.constant 1.000000e+00 : f32
    %34 = vector.broadcast %cst_15 : f32 to vector<8x128xf32>
    %35 = arith.addf %34, %33 : vector<8x128xf32>
    %36 = arith.divf %34, %35 : vector<8x128xf32>
    %37 = vector.extract_strided_slice %18 {offsets = [0, 256], sizes = [8, 128], strides = [1, 1]} : vector<8x384xf32> to vector<8x128xf32>
    %38 = vector.extract_strided_slice %20 {offsets = [0, 256], sizes = [8, 128], strides = [1, 1]} : vector<8x384xf32> to vector<8x128xf32>
    %39 = vector.broadcast %16 : vector<1x128xf32> to vector<8x128xf32>
    %40 = arith.addf %38, %39 : vector<8x128xf32>
    %41 = arith.mulf %28, %40 : vector<8x128xf32>
    %42 = arith.addf %37, %41 : vector<8x128xf32>
    %43 = math.tanh %42 : vector<8x128xf32>
    %cst_16 = arith.constant 1.000000e+00 : f32
    %44 = vector.broadcast %cst_16 : f32 to vector<8x128xf32>
    %45 = arith.subf %44, %36 : vector<8x128xf32>
    %46 = arith.mulf %45, %43 : vector<8x128xf32>
    %47 = arith.mulf %36, %17 : vector<8x128xf32>
    %48 = arith.addf %46, %47 : vector<8x128xf32>
    %49 = vector.extract_strided_slice %14 {offsets = [8, 0], sizes = [8, 384], strides = [1, 1]} : vector<64x384xf32> to vector<8x384xf32>
    %50 = arith.truncf %48 : vector<8x128xf32> to vector<8x128xbf16>
    %cst_17 = arith.constant dense<0.000000e+00> : vector<8x384xf32>
    %51 = tpu.matmul %50, %15, %cst_17 {dimension_numbers = #tpu.dot_dimension_numbers<[1], [0], [0], [1], [0, 0, 1, 1], [], []>} : vector<8x128xbf16>, vector<128x384xbf16>, vector<8x384xf32> -> vector<8x384xf32>
    %52 = vector.extract_strided_slice %49 {offsets = [0, 0], sizes = [8, 128], strides = [1, 1]} : vector<8x384xf32> to vector<8x128xf32>
    %53 = vector.extract_strided_slice %51 {offsets = [0, 0], sizes = [8, 128], strides = [1, 1]} : vector<8x384xf32> to vector<8x128xf32>
    %54 = arith.addf %52, %53 : vector<8x128xf32>
    %55 = arith.negf %54 : vector<8x128xf32>
    %56 = math.exp %55 : vector<8x128xf32>
    %cst_18 = arith.constant 1.000000e+00 : f32
    %57 = vector.broadcast %cst_18 : f32 to vector<8x128xf32>
    %58 = arith.addf %57, %56 : vector<8x128xf32>
    %59 = arith.divf %57, %58 : vector<8x128xf32>
    %60 = vector.extract_strided_slice %49 {offsets = [0, 128], sizes = [8, 128], strides = [1, 1]} : vector<8x384xf32> to vector<8x128xf32>
    %61 = vector.extract_strided_slice %51 {offsets = [0, 128], sizes = [8, 128], strides = [1, 1]} : vector<8x384xf32> to vector<8x128xf32>
    %62 = arith.addf %60, %61 : vector<8x128xf32>
    %63 = arith.negf %62 : vector<8x128xf32>
    %64 = math.exp %63 : vector<8x128xf32>
    %cst_19 = arith.constant 1.000000e+00 : f32
    %65 = vector.broadcast %cst_19 : f32 to vector<8x128xf32>
    %66 = arith.addf %65, %64 : vector<8x128xf32>
    %67 = arith.divf %65, %66 : vector<8x128xf32>
    %68 = vector.extract_strided_slice %49 {offsets = [0, 256], sizes = [8, 128], strides = [1, 1]} : vector<8x384xf32> to vector<8x128xf32>
    %69 = vector.extract_strided_slice %51 {offsets = [0, 256], sizes = [8, 128], strides = [1, 1]} : vector<8x384xf32> to vector<8x128xf32>
    %70 = vector.broadcast %16 : vector<1x128xf32> to vector<8x128xf32>
    %71 = arith.addf %69, %70 : vector<8x128xf32>
    %72 = arith.mulf %59, %71 : vector<8x128xf32>
    %73 = arith.addf %68, %72 : vector<8x128xf32>
    %74 = math.tanh %73 : vector<8x128xf32>
    %cst_20 = arith.constant 1.000000e+00 : f32
    %75 = vector.broadcast %cst_20 : f32 to vector<8x128xf32>
    %76 = arith.subf %75, %67 : vector<8x128xf32>
    %77 = arith.mulf %76, %74 : vector<8x128xf32>
    %78 = arith.mulf %67, %48 : vector<8x128xf32>
    %79 = arith.addf %77, %78 : vector<8x128xf32>
    %80 = vector.extract_strided_slice %14 {offsets = [16, 0], sizes = [8, 384], strides = [1, 1]} : vector<64x384xf32> to vector<8x384xf32>
    %81 = arith.truncf %79 : vector<8x128xf32> to vector<8x128xbf16>
    %cst_21 = arith.constant dense<0.000000e+00> : vector<8x384xf32>
    %82 = tpu.matmul %81, %15, %cst_21 {dimension_numbers = #tpu.dot_dimension_numbers<[1], [0], [0], [1], [0, 0, 1, 1], [], []>} : vector<8x128xbf16>, vector<128x384xbf16>, vector<8x384xf32> -> vector<8x384xf32>
    %83 = vector.extract_strided_slice %80 {offsets = [0, 0], sizes = [8, 128], strides = [1, 1]} : vector<8x384xf32> to vector<8x128xf32>
    %84 = vector.extract_strided_slice %82 {offsets = [0, 0], sizes = [8, 128], strides = [1, 1]} : vector<8x384xf32> to vector<8x128xf32>
    %85 = arith.addf %83, %84 : vector<8x128xf32>
    %86 = arith.negf %85 : vector<8x128xf32>
    %87 = math.exp %86 : vector<8x128xf32>
    %cst_22 = arith.constant 1.000000e+00 : f32
    %88 = vector.broadcast %cst_22 : f32 to vector<8x128xf32>
    %89 = arith.addf %88, %87 : vector<8x128xf32>
    %90 = arith.divf %88, %89 : vector<8x128xf32>
    %91 = vector.extract_strided_slice %80 {offsets = [0, 128], sizes = [8, 128], strides = [1, 1]} : vector<8x384xf32> to vector<8x128xf32>
    %92 = vector.extract_strided_slice %82 {offsets = [0, 128], sizes = [8, 128], strides = [1, 1]} : vector<8x384xf32> to vector<8x128xf32>
    %93 = arith.addf %91, %92 : vector<8x128xf32>
    %94 = arith.negf %93 : vector<8x128xf32>
    %95 = math.exp %94 : vector<8x128xf32>
    %cst_23 = arith.constant 1.000000e+00 : f32
    %96 = vector.broadcast %cst_23 : f32 to vector<8x128xf32>
    %97 = arith.addf %96, %95 : vector<8x128xf32>
    %98 = arith.divf %96, %97 : vector<8x128xf32>
    %99 = vector.extract_strided_slice %80 {offsets = [0, 256], sizes = [8, 128], strides = [1, 1]} : vector<8x384xf32> to vector<8x128xf32>
    %100 = vector.extract_strided_slice %82 {offsets = [0, 256], sizes = [8, 128], strides = [1, 1]} : vector<8x384xf32> to vector<8x128xf32>
    %101 = vector.broadcast %16 : vector<1x128xf32> to vector<8x128xf32>
    %102 = arith.addf %100, %101 : vector<8x128xf32>
    %103 = arith.mulf %90, %102 : vector<8x128xf32>
    %104 = arith.addf %99, %103 : vector<8x128xf32>
    %105 = math.tanh %104 : vector<8x128xf32>
    %cst_24 = arith.constant 1.000000e+00 : f32
    %106 = vector.broadcast %cst_24 : f32 to vector<8x128xf32>
    %107 = arith.subf %106, %98 : vector<8x128xf32>
    %108 = arith.mulf %107, %105 : vector<8x128xf32>
    %109 = arith.mulf %98, %79 : vector<8x128xf32>
    %110 = arith.addf %108, %109 : vector<8x128xf32>
    %111 = vector.extract_strided_slice %14 {offsets = [24, 0], sizes = [8, 384], strides = [1, 1]} : vector<64x384xf32> to vector<8x384xf32>
    %112 = arith.truncf %110 : vector<8x128xf32> to vector<8x128xbf16>
    %cst_25 = arith.constant dense<0.000000e+00> : vector<8x384xf32>
    %113 = tpu.matmul %112, %15, %cst_25 {dimension_numbers = #tpu.dot_dimension_numbers<[1], [0], [0], [1], [0, 0, 1, 1], [], []>} : vector<8x128xbf16>, vector<128x384xbf16>, vector<8x384xf32> -> vector<8x384xf32>
    %114 = vector.extract_strided_slice %111 {offsets = [0, 0], sizes = [8, 128], strides = [1, 1]} : vector<8x384xf32> to vector<8x128xf32>
    %115 = vector.extract_strided_slice %113 {offsets = [0, 0], sizes = [8, 128], strides = [1, 1]} : vector<8x384xf32> to vector<8x128xf32>
    %116 = arith.addf %114, %115 : vector<8x128xf32>
    %117 = arith.negf %116 : vector<8x128xf32>
    %118 = math.exp %117 : vector<8x128xf32>
    %cst_26 = arith.constant 1.000000e+00 : f32
    %119 = vector.broadcast %cst_26 : f32 to vector<8x128xf32>
    %120 = arith.addf %119, %118 : vector<8x128xf32>
    %121 = arith.divf %119, %120 : vector<8x128xf32>
    %122 = vector.extract_strided_slice %111 {offsets = [0, 128], sizes = [8, 128], strides = [1, 1]} : vector<8x384xf32> to vector<8x128xf32>
    %123 = vector.extract_strided_slice %113 {offsets = [0, 128], sizes = [8, 128], strides = [1, 1]} : vector<8x384xf32> to vector<8x128xf32>
    %124 = arith.addf %122, %123 : vector<8x128xf32>
    %125 = arith.negf %124 : vector<8x128xf32>
    %126 = math.exp %125 : vector<8x128xf32>
    %cst_27 = arith.constant 1.000000e+00 : f32
    %127 = vector.broadcast %cst_27 : f32 to vector<8x128xf32>
    %128 = arith.addf %127, %126 : vector<8x128xf32>
    %129 = arith.divf %127, %128 : vector<8x128xf32>
    %130 = vector.extract_strided_slice %111 {offsets = [0, 256], sizes = [8, 128], strides = [1, 1]} : vector<8x384xf32> to vector<8x128xf32>
    %131 = vector.extract_strided_slice %113 {offsets = [0, 256], sizes = [8, 128], strides = [1, 1]} : vector<8x384xf32> to vector<8x128xf32>
    %132 = vector.broadcast %16 : vector<1x128xf32> to vector<8x128xf32>
    %133 = arith.addf %131, %132 : vector<8x128xf32>
    %134 = arith.mulf %121, %133 : vector<8x128xf32>
    %135 = arith.addf %130, %134 : vector<8x128xf32>
    %136 = math.tanh %135 : vector<8x128xf32>
    %cst_28 = arith.constant 1.000000e+00 : f32
    %137 = vector.broadcast %cst_28 : f32 to vector<8x128xf32>
    %138 = arith.subf %137, %129 : vector<8x128xf32>
    %139 = arith.mulf %138, %136 : vector<8x128xf32>
    %140 = arith.mulf %129, %110 : vector<8x128xf32>
    %141 = arith.addf %139, %140 : vector<8x128xf32>
    %142 = vector.extract_strided_slice %14 {offsets = [32, 0], sizes = [8, 384], strides = [1, 1]} : vector<64x384xf32> to vector<8x384xf32>
    %143 = arith.truncf %141 : vector<8x128xf32> to vector<8x128xbf16>
    %cst_29 = arith.constant dense<0.000000e+00> : vector<8x384xf32>
    %144 = tpu.matmul %143, %15, %cst_29 {dimension_numbers = #tpu.dot_dimension_numbers<[1], [0], [0], [1], [0, 0, 1, 1], [], []>} : vector<8x128xbf16>, vector<128x384xbf16>, vector<8x384xf32> -> vector<8x384xf32>
    %145 = vector.extract_strided_slice %142 {offsets = [0, 0], sizes = [8, 128], strides = [1, 1]} : vector<8x384xf32> to vector<8x128xf32>
    %146 = vector.extract_strided_slice %144 {offsets = [0, 0], sizes = [8, 128], strides = [1, 1]} : vector<8x384xf32> to vector<8x128xf32>
    %147 = arith.addf %145, %146 : vector<8x128xf32>
    %148 = arith.negf %147 : vector<8x128xf32>
    %149 = math.exp %148 : vector<8x128xf32>
    %cst_30 = arith.constant 1.000000e+00 : f32
    %150 = vector.broadcast %cst_30 : f32 to vector<8x128xf32>
    %151 = arith.addf %150, %149 : vector<8x128xf32>
    %152 = arith.divf %150, %151 : vector<8x128xf32>
    %153 = vector.extract_strided_slice %142 {offsets = [0, 128], sizes = [8, 128], strides = [1, 1]} : vector<8x384xf32> to vector<8x128xf32>
    %154 = vector.extract_strided_slice %144 {offsets = [0, 128], sizes = [8, 128], strides = [1, 1]} : vector<8x384xf32> to vector<8x128xf32>
    %155 = arith.addf %153, %154 : vector<8x128xf32>
    %156 = arith.negf %155 : vector<8x128xf32>
    %157 = math.exp %156 : vector<8x128xf32>
    %cst_31 = arith.constant 1.000000e+00 : f32
    %158 = vector.broadcast %cst_31 : f32 to vector<8x128xf32>
    %159 = arith.addf %158, %157 : vector<8x128xf32>
    %160 = arith.divf %158, %159 : vector<8x128xf32>
    %161 = vector.extract_strided_slice %142 {offsets = [0, 256], sizes = [8, 128], strides = [1, 1]} : vector<8x384xf32> to vector<8x128xf32>
    %162 = vector.extract_strided_slice %144 {offsets = [0, 256], sizes = [8, 128], strides = [1, 1]} : vector<8x384xf32> to vector<8x128xf32>
    %163 = vector.broadcast %16 : vector<1x128xf32> to vector<8x128xf32>
    %164 = arith.addf %162, %163 : vector<8x128xf32>
    %165 = arith.mulf %152, %164 : vector<8x128xf32>
    %166 = arith.addf %161, %165 : vector<8x128xf32>
    %167 = math.tanh %166 : vector<8x128xf32>
    %cst_32 = arith.constant 1.000000e+00 : f32
    %168 = vector.broadcast %cst_32 : f32 to vector<8x128xf32>
    %169 = arith.subf %168, %160 : vector<8x128xf32>
    %170 = arith.mulf %169, %167 : vector<8x128xf32>
    %171 = arith.mulf %160, %141 : vector<8x128xf32>
    %172 = arith.addf %170, %171 : vector<8x128xf32>
    %173 = vector.extract_strided_slice %14 {offsets = [40, 0], sizes = [8, 384], strides = [1, 1]} : vector<64x384xf32> to vector<8x384xf32>
    %174 = arith.truncf %172 : vector<8x128xf32> to vector<8x128xbf16>
    %cst_33 = arith.constant dense<0.000000e+00> : vector<8x384xf32>
    %175 = tpu.matmul %174, %15, %cst_33 {dimension_numbers = #tpu.dot_dimension_numbers<[1], [0], [0], [1], [0, 0, 1, 1], [], []>} : vector<8x128xbf16>, vector<128x384xbf16>, vector<8x384xf32> -> vector<8x384xf32>
    %176 = vector.extract_strided_slice %173 {offsets = [0, 0], sizes = [8, 128], strides = [1, 1]} : vector<8x384xf32> to vector<8x128xf32>
    %177 = vector.extract_strided_slice %175 {offsets = [0, 0], sizes = [8, 128], strides = [1, 1]} : vector<8x384xf32> to vector<8x128xf32>
    %178 = arith.addf %176, %177 : vector<8x128xf32>
    %179 = arith.negf %178 : vector<8x128xf32>
    %180 = math.exp %179 : vector<8x128xf32>
    %cst_34 = arith.constant 1.000000e+00 : f32
    %181 = vector.broadcast %cst_34 : f32 to vector<8x128xf32>
    %182 = arith.addf %181, %180 : vector<8x128xf32>
    %183 = arith.divf %181, %182 : vector<8x128xf32>
    %184 = vector.extract_strided_slice %173 {offsets = [0, 128], sizes = [8, 128], strides = [1, 1]} : vector<8x384xf32> to vector<8x128xf32>
    %185 = vector.extract_strided_slice %175 {offsets = [0, 128], sizes = [8, 128], strides = [1, 1]} : vector<8x384xf32> to vector<8x128xf32>
    %186 = arith.addf %184, %185 : vector<8x128xf32>
    %187 = arith.negf %186 : vector<8x128xf32>
    %188 = math.exp %187 : vector<8x128xf32>
    %cst_35 = arith.constant 1.000000e+00 : f32
    %189 = vector.broadcast %cst_35 : f32 to vector<8x128xf32>
    %190 = arith.addf %189, %188 : vector<8x128xf32>
    %191 = arith.divf %189, %190 : vector<8x128xf32>
    %192 = vector.extract_strided_slice %173 {offsets = [0, 256], sizes = [8, 128], strides = [1, 1]} : vector<8x384xf32> to vector<8x128xf32>
    %193 = vector.extract_strided_slice %175 {offsets = [0, 256], sizes = [8, 128], strides = [1, 1]} : vector<8x384xf32> to vector<8x128xf32>
    %194 = vector.broadcast %16 : vector<1x128xf32> to vector<8x128xf32>
    %195 = arith.addf %193, %194 : vector<8x128xf32>
    %196 = arith.mulf %183, %195 : vector<8x128xf32>
    %197 = arith.addf %192, %196 : vector<8x128xf32>
    %198 = math.tanh %197 : vector<8x128xf32>
    %cst_36 = arith.constant 1.000000e+00 : f32
    %199 = vector.broadcast %cst_36 : f32 to vector<8x128xf32>
    %200 = arith.subf %199, %191 : vector<8x128xf32>
    %201 = arith.mulf %200, %198 : vector<8x128xf32>
    %202 = arith.mulf %191, %172 : vector<8x128xf32>
    %203 = arith.addf %201, %202 : vector<8x128xf32>
    %204 = vector.extract_strided_slice %14 {offsets = [48, 0], sizes = [8, 384], strides = [1, 1]} : vector<64x384xf32> to vector<8x384xf32>
    %205 = arith.truncf %203 : vector<8x128xf32> to vector<8x128xbf16>
    %cst_37 = arith.constant dense<0.000000e+00> : vector<8x384xf32>
    %206 = tpu.matmul %205, %15, %cst_37 {dimension_numbers = #tpu.dot_dimension_numbers<[1], [0], [0], [1], [0, 0, 1, 1], [], []>} : vector<8x128xbf16>, vector<128x384xbf16>, vector<8x384xf32> -> vector<8x384xf32>
    %207 = vector.extract_strided_slice %204 {offsets = [0, 0], sizes = [8, 128], strides = [1, 1]} : vector<8x384xf32> to vector<8x128xf32>
    %208 = vector.extract_strided_slice %206 {offsets = [0, 0], sizes = [8, 128], strides = [1, 1]} : vector<8x384xf32> to vector<8x128xf32>
    %209 = arith.addf %207, %208 : vector<8x128xf32>
    %210 = arith.negf %209 : vector<8x128xf32>
    %211 = math.exp %210 : vector<8x128xf32>
    %cst_38 = arith.constant 1.000000e+00 : f32
    %212 = vector.broadcast %cst_38 : f32 to vector<8x128xf32>
    %213 = arith.addf %212, %211 : vector<8x128xf32>
    %214 = arith.divf %212, %213 : vector<8x128xf32>
    %215 = vector.extract_strided_slice %204 {offsets = [0, 128], sizes = [8, 128], strides = [1, 1]} : vector<8x384xf32> to vector<8x128xf32>
    %216 = vector.extract_strided_slice %206 {offsets = [0, 128], sizes = [8, 128], strides = [1, 1]} : vector<8x384xf32> to vector<8x128xf32>
    %217 = arith.addf %215, %216 : vector<8x128xf32>
    %218 = arith.negf %217 : vector<8x128xf32>
    %219 = math.exp %218 : vector<8x128xf32>
    %cst_39 = arith.constant 1.000000e+00 : f32
    %220 = vector.broadcast %cst_39 : f32 to vector<8x128xf32>
    %221 = arith.addf %220, %219 : vector<8x128xf32>
    %222 = arith.divf %220, %221 : vector<8x128xf32>
    %223 = vector.extract_strided_slice %204 {offsets = [0, 256], sizes = [8, 128], strides = [1, 1]} : vector<8x384xf32> to vector<8x128xf32>
    %224 = vector.extract_strided_slice %206 {offsets = [0, 256], sizes = [8, 128], strides = [1, 1]} : vector<8x384xf32> to vector<8x128xf32>
    %225 = vector.broadcast %16 : vector<1x128xf32> to vector<8x128xf32>
    %226 = arith.addf %224, %225 : vector<8x128xf32>
    %227 = arith.mulf %214, %226 : vector<8x128xf32>
    %228 = arith.addf %223, %227 : vector<8x128xf32>
    %229 = math.tanh %228 : vector<8x128xf32>
    %cst_40 = arith.constant 1.000000e+00 : f32
    %230 = vector.broadcast %cst_40 : f32 to vector<8x128xf32>
    %231 = arith.subf %230, %222 : vector<8x128xf32>
    %232 = arith.mulf %231, %229 : vector<8x128xf32>
    %233 = arith.mulf %222, %203 : vector<8x128xf32>
    %234 = arith.addf %232, %233 : vector<8x128xf32>
    %235 = vector.extract_strided_slice %14 {offsets = [56, 0], sizes = [8, 384], strides = [1, 1]} : vector<64x384xf32> to vector<8x384xf32>
    %236 = arith.truncf %234 : vector<8x128xf32> to vector<8x128xbf16>
    %cst_41 = arith.constant dense<0.000000e+00> : vector<8x384xf32>
    %237 = tpu.matmul %236, %15, %cst_41 {dimension_numbers = #tpu.dot_dimension_numbers<[1], [0], [0], [1], [0, 0, 1, 1], [], []>} : vector<8x128xbf16>, vector<128x384xbf16>, vector<8x384xf32> -> vector<8x384xf32>
    %238 = vector.extract_strided_slice %235 {offsets = [0, 0], sizes = [8, 128], strides = [1, 1]} : vector<8x384xf32> to vector<8x128xf32>
    %239 = vector.extract_strided_slice %237 {offsets = [0, 0], sizes = [8, 128], strides = [1, 1]} : vector<8x384xf32> to vector<8x128xf32>
    %240 = arith.addf %238, %239 : vector<8x128xf32>
    %241 = arith.negf %240 : vector<8x128xf32>
    %242 = math.exp %241 : vector<8x128xf32>
    %cst_42 = arith.constant 1.000000e+00 : f32
    %243 = vector.broadcast %cst_42 : f32 to vector<8x128xf32>
    %244 = arith.addf %243, %242 : vector<8x128xf32>
    %245 = arith.divf %243, %244 : vector<8x128xf32>
    %246 = vector.extract_strided_slice %235 {offsets = [0, 128], sizes = [8, 128], strides = [1, 1]} : vector<8x384xf32> to vector<8x128xf32>
    %247 = vector.extract_strided_slice %237 {offsets = [0, 128], sizes = [8, 128], strides = [1, 1]} : vector<8x384xf32> to vector<8x128xf32>
    %248 = arith.addf %246, %247 : vector<8x128xf32>
    %249 = arith.negf %248 : vector<8x128xf32>
    %250 = math.exp %249 : vector<8x128xf32>
    %cst_43 = arith.constant 1.000000e+00 : f32
    %251 = vector.broadcast %cst_43 : f32 to vector<8x128xf32>
    %252 = arith.addf %251, %250 : vector<8x128xf32>
    %253 = arith.divf %251, %252 : vector<8x128xf32>
    %254 = vector.extract_strided_slice %235 {offsets = [0, 256], sizes = [8, 128], strides = [1, 1]} : vector<8x384xf32> to vector<8x128xf32>
    %255 = vector.extract_strided_slice %237 {offsets = [0, 256], sizes = [8, 128], strides = [1, 1]} : vector<8x384xf32> to vector<8x128xf32>
    %256 = vector.broadcast %16 : vector<1x128xf32> to vector<8x128xf32>
    %257 = arith.addf %255, %256 : vector<8x128xf32>
    %258 = arith.mulf %245, %257 : vector<8x128xf32>
    %259 = arith.addf %254, %258 : vector<8x128xf32>
    %260 = math.tanh %259 : vector<8x128xf32>
    %cst_44 = arith.constant 1.000000e+00 : f32
    %261 = vector.broadcast %cst_44 : f32 to vector<8x128xf32>
    %262 = arith.subf %261, %253 : vector<8x128xf32>
    %263 = arith.mulf %262, %260 : vector<8x128xf32>
    %264 = arith.mulf %253, %234 : vector<8x128xf32>
    %265 = arith.addf %263, %264 : vector<8x128xf32>
    %c0_45 = arith.constant 0 : index
    %c0_46 = arith.constant 0 : index
    %266 = vector.load %arg6[%c0_45, %c0_46] : memref<128x128xbf16, #tpu.memory_space<vmem>>, vector<128x128xbf16>
    %c0_47 = arith.constant 0 : index
    %c0_48 = arith.constant 0 : index
    %267 = vector.load %arg7[%c0_47, %c0_48] : memref<128x384xbf16, #tpu.memory_space<vmem>>, vector<128x384xbf16>
    %c0_49 = arith.constant 0 : index
    %c0_50 = arith.constant 0 : index
    %268 = vector.load %arg8[%c0_49, %c0_50] : memref<128x384xbf16, #tpu.memory_space<vmem>>, vector<128x384xbf16>
    %c0_51 = arith.constant 0 : index
    %c0_52 = arith.constant 0 : index
    %269 = vector.load %arg9[%c0_51, %c0_52] : memref<1x384xf32, #tpu.memory_space<vmem>>, vector<1x384xf32>
    %c0_53 = arith.constant 0 : index
    %c0_54 = arith.constant 0 : index
    %270 = vector.load %arg10[%c0_53, %c0_54] : memref<1x128xf32, #tpu.memory_space<vmem>>, vector<1x128xf32>
    %c0_55 = arith.constant 0 : index
    %c0_56 = arith.constant 0 : index
    %271 = vector.load %arg11[%c0_55, %c0_56] : memref<128x128xbf16, #tpu.memory_space<vmem>>, vector<128x128xbf16>
    %c0_57 = arith.constant 0 : index
    %c0_58 = arith.constant 0 : index
    %272 = vector.load %arg12[%c0_57, %c0_58] : memref<1x128xf32, #tpu.memory_space<vmem>>, vector<1x128xf32>
    %273 = tpu.iota {dimensions = array<i32: 1>} : vector<8x128xi32>
    %274 = vector.extract_strided_slice %266 {offsets = [0, 0], sizes = [1, 128], strides = [1, 1]} : vector<128x128xbf16> to vector<1x128xbf16>
    %275 = vector.shape_cast %274 : vector<1x128xbf16> to vector<1x128xbf16>
    %276 = vector.broadcast %275 : vector<1x128xbf16> to vector<8x128xbf16>
    %cst_59 = arith.constant dense<0.000000e+00> : vector<8x384xf32>
    %277 = tpu.matmul %276, %267, %cst_59 {dimension_numbers = #tpu.dot_dimension_numbers<[1], [0], [0], [1], [0, 0, 1, 1], [], []>} : vector<8x128xbf16>, vector<128x384xbf16>, vector<8x384xf32> -> vector<8x384xf32>
    %278 = vector.broadcast %269 : vector<1x384xf32> to vector<8x384xf32>
    %279 = arith.addf %277, %278 : vector<8x384xf32>
    %280 = arith.truncf %265 : vector<8x128xf32> to vector<8x128xbf16>
    %cst_60 = arith.constant dense<0.000000e+00> : vector<8x384xf32>
    %281 = tpu.matmul %280, %268, %cst_60 {dimension_numbers = #tpu.dot_dimension_numbers<[1], [0], [0], [1], [0, 0, 1, 1], [], []>} : vector<8x128xbf16>, vector<128x384xbf16>, vector<8x384xf32> -> vector<8x384xf32>
    %282 = vector.extract_strided_slice %279 {offsets = [0, 0], sizes = [8, 128], strides = [1, 1]} : vector<8x384xf32> to vector<8x128xf32>
    %283 = vector.extract_strided_slice %281 {offsets = [0, 0], sizes = [8, 128], strides = [1, 1]} : vector<8x384xf32> to vector<8x128xf32>
    %284 = arith.addf %282, %283 : vector<8x128xf32>
    %285 = arith.negf %284 : vector<8x128xf32>
    %286 = math.exp %285 : vector<8x128xf32>
    %cst_61 = arith.constant 1.000000e+00 : f32
    %287 = vector.broadcast %cst_61 : f32 to vector<8x128xf32>
    %288 = arith.addf %287, %286 : vector<8x128xf32>
    %289 = arith.divf %287, %288 : vector<8x128xf32>
    %290 = vector.extract_strided_slice %279 {offsets = [0, 128], sizes = [8, 128], strides = [1, 1]} : vector<8x384xf32> to vector<8x128xf32>
    %291 = vector.extract_strided_slice %281 {offsets = [0, 128], sizes = [8, 128], strides = [1, 1]} : vector<8x384xf32> to vector<8x128xf32>
    %292 = arith.addf %290, %291 : vector<8x128xf32>
    %293 = arith.negf %292 : vector<8x128xf32>
    %294 = math.exp %293 : vector<8x128xf32>
    %cst_62 = arith.constant 1.000000e+00 : f32
    %295 = vector.broadcast %cst_62 : f32 to vector<8x128xf32>
    %296 = arith.addf %295, %294 : vector<8x128xf32>
    %297 = arith.divf %295, %296 : vector<8x128xf32>
    %298 = vector.extract_strided_slice %279 {offsets = [0, 256], sizes = [8, 128], strides = [1, 1]} : vector<8x384xf32> to vector<8x128xf32>
    %299 = vector.extract_strided_slice %281 {offsets = [0, 256], sizes = [8, 128], strides = [1, 1]} : vector<8x384xf32> to vector<8x128xf32>
    %300 = vector.broadcast %270 : vector<1x128xf32> to vector<8x128xf32>
    %301 = arith.addf %299, %300 : vector<8x128xf32>
    %302 = arith.mulf %289, %301 : vector<8x128xf32>
    %303 = arith.addf %298, %302 : vector<8x128xf32>
    %304 = math.tanh %303 : vector<8x128xf32>
    %cst_63 = arith.constant 1.000000e+00 : f32
    %305 = vector.broadcast %cst_63 : f32 to vector<8x128xf32>
    %306 = arith.subf %305, %297 : vector<8x128xf32>
    %307 = arith.mulf %306, %304 : vector<8x128xf32>
    %308 = arith.mulf %297, %265 : vector<8x128xf32>
    %309 = arith.addf %307, %308 : vector<8x128xf32>
    %310 = arith.truncf %309 : vector<8x128xf32> to vector<8x128xbf16>
    %cst_64 = arith.constant dense<0.000000e+00> : vector<8x128xf32>
    %311 = tpu.matmul %310, %271, %cst_64 {dimension_numbers = #tpu.dot_dimension_numbers<[1], [0], [0], [1], [0, 0, 1, 1], [], []>} : vector<8x128xbf16>, vector<128x128xbf16>, vector<8x128xf32> -> vector<8x128xf32>
    %312 = vector.broadcast %272 : vector<1x128xf32> to vector<8x128xf32>
    %313 = arith.addf %311, %312 : vector<8x128xf32>
    %cst_65 = arith.constant dense<0xFF800000> : vector<8xf32>
    %314 = vector.multi_reduction <maximumf>, %313, %cst_65 [1] : vector<8x128xf32> to vector<8xf32>
    %315 = vector.shape_cast %314 : vector<8xf32> to vector<8x1xf32>
    %316 = vector.broadcast %315 : vector<8x1xf32> to vector<8x128xf32>
    %317 = arith.subf %313, %316 : vector<8x128xf32>
    %318 = math.exp %317 : vector<8x128xf32>
    %cst_66 = arith.constant dense<0.000000e+00> : vector<8xf32>
    %319 = vector.multi_reduction <add>, %318, %cst_66 [1] : vector<8x128xf32> to vector<8xf32>
    %320 = vector.shape_cast %319 : vector<8xf32> to vector<8x1xf32>
    %321 = math.log %320 : vector<8x1xf32>
    %322 = vector.broadcast %321 : vector<8x1xf32> to vector<8x128xf32>
    %323 = arith.subf %317, %322 : vector<8x128xf32>
    %c0_67 = arith.constant 0 : index
    %c0_68 = arith.constant 0 : index
    %c0_69 = arith.constant 0 : index
    %324 = vector.load %arg13[%c0_67, %c0_68, %c0_69] : memref<8x8x128xf32, #tpu.memory_space<vmem>>, vector<1x8x128xf32>
    %325 = vector.shape_cast %324 : vector<1x8x128xf32> to vector<8x128xf32>
    %326 = vector.shape_cast %323 : vector<8x128xf32> to vector<1x8x128xf32>
    tpu.vector_store %arg13[%c0_67, %c0_68, %c0_69], %326 {strides = array<i32>} : memref<8x8x128xf32, #tpu.memory_space<vmem>>, vector<1x8x128xf32>,
    %327 = vector.broadcast %315 : vector<8x1xf32> to vector<8x128xf32>
    %328 = arith.cmpf oge, %313, %327 : vector<8x128xf32>
    %c128_i32 = arith.constant 128 : i32
    %329 = vector.broadcast %c128_i32 : i32 to vector<8x128xi32>
    %330 = arith.select %328, %273, %329 : vector<8x128xi1>, vector<8x128xi32>
    %cst_70 = arith.constant dense<2147483647> : vector<8xi32>
    %331 = vector.multi_reduction <minsi>, %330, %cst_70 [1] : vector<8x128xi32> to vector<8xi32>
    %332 = vector.shape_cast %331 : vector<8xi32> to vector<8x1xi32>
    %333 = vector.broadcast %332 : vector<8x1xi32> to vector<8x128xi32>
    %334 = arith.cmpi eq, %273, %333 : vector<8x128xi32>
    %335 = arith.extui %334 : vector<8x128xi1> to vector<8x128xi32>
    %336 = arith.sitofp %335 : vector<8x128xi32> to vector<8x128xf32>
    %337 = arith.truncf %336 : vector<8x128xf32> to vector<8x128xbf16>
    %cst_71 = arith.constant dense<0.000000e+00> : vector<8x128xf32>
    %338 = tpu.matmul %337, %266, %cst_71 {dimension_numbers = #tpu.dot_dimension_numbers<[1], [0], [0], [1], [0, 0, 1, 1], [], []>} : vector<8x128xbf16>, vector<128x128xbf16>, vector<8x128xf32> -> vector<8x128xf32>
    %339 = arith.truncf %338 : vector<8x128xf32> to vector<8x128xbf16>
    %cst_72 = arith.constant dense<0.000000e+00> : vector<8x384xf32>
    %340 = tpu.matmul %339, %267, %cst_72 {dimension_numbers = #tpu.dot_dimension_numbers<[1], [0], [0], [1], [0, 0, 1, 1], [], []>} : vector<8x128xbf16>, vector<128x384xbf16>, vector<8x384xf32> -> vector<8x384xf32>
    %341 = vector.broadcast %269 : vector<1x384xf32> to vector<8x384xf32>
    %342 = arith.addf %340, %341 : vector<8x384xf32>
    %343 = arith.truncf %309 : vector<8x128xf32> to vector<8x128xbf16>
    %cst_73 = arith.constant dense<0.000000e+00> : vector<8x384xf32>
    %344 = tpu.matmul %343, %268, %cst_73 {dimension_numbers = #tpu.dot_dimension_numbers<[1], [0], [0], [1], [0, 0, 1, 1], [], []>} : vector<8x128xbf16>, vector<128x384xbf16>, vector<8x384xf32> -> vector<8x384xf32>
    %345 = vector.extract_strided_slice %342 {offsets = [0, 0], sizes = [8, 128], strides = [1, 1]} : vector<8x384xf32> to vector<8x128xf32>
    %346 = vector.extract_strided_slice %344 {offsets = [0, 0], sizes = [8, 128], strides = [1, 1]} : vector<8x384xf32> to vector<8x128xf32>
    %347 = arith.addf %345, %346 : vector<8x128xf32>
    %348 = arith.negf %347 : vector<8x128xf32>
    %349 = math.exp %348 : vector<8x128xf32>
    %cst_74 = arith.constant 1.000000e+00 : f32
    %350 = vector.broadcast %cst_74 : f32 to vector<8x128xf32>
    %351 = arith.addf %350, %349 : vector<8x128xf32>
    %352 = arith.divf %350, %351 : vector<8x128xf32>
    %353 = vector.extract_strided_slice %342 {offsets = [0, 128], sizes = [8, 128], strides = [1, 1]} : vector<8x384xf32> to vector<8x128xf32>
    %354 = vector.extract_strided_slice %344 {offsets = [0, 128], sizes = [8, 128], strides = [1, 1]} : vector<8x384xf32> to vector<8x128xf32>
    %355 = arith.addf %353, %354 : vector<8x128xf32>
    %356 = arith.negf %355 : vector<8x128xf32>
    %357 = math.exp %356 : vector<8x128xf32>
    %cst_75 = arith.constant 1.000000e+00 : f32
    %358 = vector.broadcast %cst_75 : f32 to vector<8x128xf32>
    %359 = arith.addf %358, %357 : vector<8x128xf32>
    %360 = arith.divf %358, %359 : vector<8x128xf32>
    %361 = vector.extract_strided_slice %342 {offsets = [0, 256], sizes = [8, 128], strides = [1, 1]} : vector<8x384xf32> to vector<8x128xf32>
    %362 = vector.extract_strided_slice %344 {offsets = [0, 256], sizes = [8, 128], strides = [1, 1]} : vector<8x384xf32> to vector<8x128xf32>
    %363 = vector.broadcast %270 : vector<1x128xf32> to vector<8x128xf32>
    %364 = arith.addf %362, %363 : vector<8x128xf32>
    %365 = arith.mulf %352, %364 : vector<8x128xf32>
    %366 = arith.addf %361, %365 : vector<8x128xf32>
    %367 = math.tanh %366 : vector<8x128xf32>
    %cst_76 = arith.constant 1.000000e+00 : f32
    %368 = vector.broadcast %cst_76 : f32 to vector<8x128xf32>
    %369 = arith.subf %368, %360 : vector<8x128xf32>
    %370 = arith.mulf %369, %367 : vector<8x128xf32>
    %371 = arith.mulf %360, %309 : vector<8x128xf32>
    %372 = arith.addf %370, %371 : vector<8x128xf32>
    %373 = arith.truncf %372 : vector<8x128xf32> to vector<8x128xbf16>
    %cst_77 = arith.constant dense<0.000000e+00> : vector<8x128xf32>
    %374 = tpu.matmul %373, %271, %cst_77 {dimension_numbers = #tpu.dot_dimension_numbers<[1], [0], [0], [1], [0, 0, 1, 1], [], []>} : vector<8x128xbf16>, vector<128x128xbf16>, vector<8x128xf32> -> vector<8x128xf32>
    %375 = vector.broadcast %272 : vector<1x128xf32> to vector<8x128xf32>
    %376 = arith.addf %374, %375 : vector<8x128xf32>
    %cst_78 = arith.constant dense<0xFF800000> : vector<8xf32>
    %377 = vector.multi_reduction <maximumf>, %376, %cst_78 [1] : vector<8x128xf32> to vector<8xf32>
    %378 = vector.shape_cast %377 : vector<8xf32> to vector<8x1xf32>
    %379 = vector.broadcast %378 : vector<8x1xf32> to vector<8x128xf32>
    %380 = arith.subf %376, %379 : vector<8x128xf32>
    %381 = math.exp %380 : vector<8x128xf32>
    %cst_79 = arith.constant dense<0.000000e+00> : vector<8xf32>
    %382 = vector.multi_reduction <add>, %381, %cst_79 [1] : vector<8x128xf32> to vector<8xf32>
    %383 = vector.shape_cast %382 : vector<8xf32> to vector<8x1xf32>
    %384 = math.log %383 : vector<8x1xf32>
    %385 = vector.broadcast %384 : vector<8x1xf32> to vector<8x128xf32>
    %386 = arith.subf %380, %385 : vector<8x128xf32>
    %c1 = arith.constant 1 : index
    %c0_80 = arith.constant 0 : index
    %c0_81 = arith.constant 0 : index
    %387 = vector.load %arg13[%c1, %c0_80, %c0_81] : memref<8x8x128xf32, #tpu.memory_space<vmem>>, vector<1x8x128xf32>
    %388 = vector.shape_cast %387 : vector<1x8x128xf32> to vector<8x128xf32>
    %389 = vector.shape_cast %386 : vector<8x128xf32> to vector<1x8x128xf32>
    tpu.vector_store %arg13[%c1, %c0_80, %c0_81], %389 {strides = array<i32>} : memref<8x8x128xf32, #tpu.memory_space<vmem>>, vector<1x8x128xf32>,
    %390 = vector.broadcast %378 : vector<8x1xf32> to vector<8x128xf32>
    %391 = arith.cmpf oge, %376, %390 : vector<8x128xf32>
    %c128_i32_82 = arith.constant 128 : i32
    %392 = vector.broadcast %c128_i32_82 : i32 to vector<8x128xi32>
    %393 = arith.select %391, %273, %392 : vector<8x128xi1>, vector<8x128xi32>
    %cst_83 = arith.constant dense<2147483647> : vector<8xi32>
    %394 = vector.multi_reduction <minsi>, %393, %cst_83 [1] : vector<8x128xi32> to vector<8xi32>
    %395 = vector.shape_cast %394 : vector<8xi32> to vector<8x1xi32>
    %396 = vector.broadcast %395 : vector<8x1xi32> to vector<8x128xi32>
    %397 = arith.cmpi eq, %273, %396 : vector<8x128xi32>
    %398 = arith.extui %397 : vector<8x128xi1> to vector<8x128xi32>
    %399 = arith.sitofp %398 : vector<8x128xi32> to vector<8x128xf32>
    %400 = arith.truncf %399 : vector<8x128xf32> to vector<8x128xbf16>
    %cst_84 = arith.constant dense<0.000000e+00> : vector<8x128xf32>
    %401 = tpu.matmul %400, %266, %cst_84 {dimension_numbers = #tpu.dot_dimension_numbers<[1], [0], [0], [1], [0, 0, 1, 1], [], []>} : vector<8x128xbf16>, vector<128x128xbf16>, vector<8x128xf32> -> vector<8x128xf32>
    %402 = arith.truncf %401 : vector<8x128xf32> to vector<8x128xbf16>
    %cst_85 = arith.constant dense<0.000000e+00> : vector<8x384xf32>
    %403 = tpu.matmul %402, %267, %cst_85 {dimension_numbers = #tpu.dot_dimension_numbers<[1], [0], [0], [1], [0, 0, 1, 1], [], []>} : vector<8x128xbf16>, vector<128x384xbf16>, vector<8x384xf32> -> vector<8x384xf32>
    %404 = vector.broadcast %269 : vector<1x384xf32> to vector<8x384xf32>
    %405 = arith.addf %403, %404 : vector<8x384xf32>
    %406 = arith.truncf %372 : vector<8x128xf32> to vector<8x128xbf16>
    %cst_86 = arith.constant dense<0.000000e+00> : vector<8x384xf32>
    %407 = tpu.matmul %406, %268, %cst_86 {dimension_numbers = #tpu.dot_dimension_numbers<[1], [0], [0], [1], [0, 0, 1, 1], [], []>} : vector<8x128xbf16>, vector<128x384xbf16>, vector<8x384xf32> -> vector<8x384xf32>
    %408 = vector.extract_strided_slice %405 {offsets = [0, 0], sizes = [8, 128], strides = [1, 1]} : vector<8x384xf32> to vector<8x128xf32>
    %409 = vector.extract_strided_slice %407 {offsets = [0, 0], sizes = [8, 128], strides = [1, 1]} : vector<8x384xf32> to vector<8x128xf32>
    %410 = arith.addf %408, %409 : vector<8x128xf32>
    %411 = arith.negf %410 : vector<8x128xf32>
    %412 = math.exp %411 : vector<8x128xf32>
    %cst_87 = arith.constant 1.000000e+00 : f32
    %413 = vector.broadcast %cst_87 : f32 to vector<8x128xf32>
    %414 = arith.addf %413, %412 : vector<8x128xf32>
    %415 = arith.divf %413, %414 : vector<8x128xf32>
    %416 = vector.extract_strided_slice %405 {offsets = [0, 128], sizes = [8, 128], strides = [1, 1]} : vector<8x384xf32> to vector<8x128xf32>
    %417 = vector.extract_strided_slice %407 {offsets = [0, 128], sizes = [8, 128], strides = [1, 1]} : vector<8x384xf32> to vector<8x128xf32>
    %418 = arith.addf %416, %417 : vector<8x128xf32>
    %419 = arith.negf %418 : vector<8x128xf32>
    %420 = math.exp %419 : vector<8x128xf32>
    %cst_88 = arith.constant 1.000000e+00 : f32
    %421 = vector.broadcast %cst_88 : f32 to vector<8x128xf32>
    %422 = arith.addf %421, %420 : vector<8x128xf32>
    %423 = arith.divf %421, %422 : vector<8x128xf32>
    %424 = vector.extract_strided_slice %405 {offsets = [0, 256], sizes = [8, 128], strides = [1, 1]} : vector<8x384xf32> to vector<8x128xf32>
    %425 = vector.extract_strided_slice %407 {offsets = [0, 256], sizes = [8, 128], strides = [1, 1]} : vector<8x384xf32> to vector<8x128xf32>
    %426 = vector.broadcast %270 : vector<1x128xf32> to vector<8x128xf32>
    %427 = arith.addf %425, %426 : vector<8x128xf32>
    %428 = arith.mulf %415, %427 : vector<8x128xf32>
    %429 = arith.addf %424, %428 : vector<8x128xf32>
    %430 = math.tanh %429 : vector<8x128xf32>
    %cst_89 = arith.constant 1.000000e+00 : f32
    %431 = vector.broadcast %cst_89 : f32 to vector<8x128xf32>
    %432 = arith.subf %431, %423 : vector<8x128xf32>
    %433 = arith.mulf %432, %430 : vector<8x128xf32>
    %434 = arith.mulf %423, %372 : vector<8x128xf32>
    %435 = arith.addf %433, %434 : vector<8x128xf32>
    %436 = arith.truncf %435 : vector<8x128xf32> to vector<8x128xbf16>
    %cst_90 = arith.constant dense<0.000000e+00> : vector<8x128xf32>
    %437 = tpu.matmul %436, %271, %cst_90 {dimension_numbers = #tpu.dot_dimension_numbers<[1], [0], [0], [1], [0, 0, 1, 1], [], []>} : vector<8x128xbf16>, vector<128x128xbf16>, vector<8x128xf32> -> vector<8x128xf32>
    %438 = vector.broadcast %272 : vector<1x128xf32> to vector<8x128xf32>
    %439 = arith.addf %437, %438 : vector<8x128xf32>
    %cst_91 = arith.constant dense<0xFF800000> : vector<8xf32>
    %440 = vector.multi_reduction <maximumf>, %439, %cst_91 [1] : vector<8x128xf32> to vector<8xf32>
    %441 = vector.shape_cast %440 : vector<8xf32> to vector<8x1xf32>
    %442 = vector.broadcast %441 : vector<8x1xf32> to vector<8x128xf32>
    %443 = arith.subf %439, %442 : vector<8x128xf32>
    %444 = math.exp %443 : vector<8x128xf32>
    %cst_92 = arith.constant dense<0.000000e+00> : vector<8xf32>
    %445 = vector.multi_reduction <add>, %444, %cst_92 [1] : vector<8x128xf32> to vector<8xf32>
    %446 = vector.shape_cast %445 : vector<8xf32> to vector<8x1xf32>
    %447 = math.log %446 : vector<8x1xf32>
    %448 = vector.broadcast %447 : vector<8x1xf32> to vector<8x128xf32>
    %449 = arith.subf %443, %448 : vector<8x128xf32>
    %c2 = arith.constant 2 : index
    %c0_93 = arith.constant 0 : index
    %c0_94 = arith.constant 0 : index
    %450 = vector.load %arg13[%c2, %c0_93, %c0_94] : memref<8x8x128xf32, #tpu.memory_space<vmem>>, vector<1x8x128xf32>
    %451 = vector.shape_cast %450 : vector<1x8x128xf32> to vector<8x128xf32>
    %452 = vector.shape_cast %449 : vector<8x128xf32> to vector<1x8x128xf32>
    tpu.vector_store %arg13[%c2, %c0_93, %c0_94], %452 {strides = array<i32>} : memref<8x8x128xf32, #tpu.memory_space<vmem>>, vector<1x8x128xf32>,
    %453 = vector.broadcast %441 : vector<8x1xf32> to vector<8x128xf32>
    %454 = arith.cmpf oge, %439, %453 : vector<8x128xf32>
    %c128_i32_95 = arith.constant 128 : i32
    %455 = vector.broadcast %c128_i32_95 : i32 to vector<8x128xi32>
    %456 = arith.select %454, %273, %455 : vector<8x128xi1>, vector<8x128xi32>
    %cst_96 = arith.constant dense<2147483647> : vector<8xi32>
    %457 = vector.multi_reduction <minsi>, %456, %cst_96 [1] : vector<8x128xi32> to vector<8xi32>
    %458 = vector.shape_cast %457 : vector<8xi32> to vector<8x1xi32>
    %459 = vector.broadcast %458 : vector<8x1xi32> to vector<8x128xi32>
    %460 = arith.cmpi eq, %273, %459 : vector<8x128xi32>
    %461 = arith.extui %460 : vector<8x128xi1> to vector<8x128xi32>
    %462 = arith.sitofp %461 : vector<8x128xi32> to vector<8x128xf32>
    %463 = arith.truncf %462 : vector<8x128xf32> to vector<8x128xbf16>
    %cst_97 = arith.constant dense<0.000000e+00> : vector<8x128xf32>
    %464 = tpu.matmul %463, %266, %cst_97 {dimension_numbers = #tpu.dot_dimension_numbers<[1], [0], [0], [1], [0, 0, 1, 1], [], []>} : vector<8x128xbf16>, vector<128x128xbf16>, vector<8x128xf32> -> vector<8x128xf32>
    %465 = arith.truncf %464 : vector<8x128xf32> to vector<8x128xbf16>
    %cst_98 = arith.constant dense<0.000000e+00> : vector<8x384xf32>
    %466 = tpu.matmul %465, %267, %cst_98 {dimension_numbers = #tpu.dot_dimension_numbers<[1], [0], [0], [1], [0, 0, 1, 1], [], []>} : vector<8x128xbf16>, vector<128x384xbf16>, vector<8x384xf32> -> vector<8x384xf32>
    %467 = vector.broadcast %269 : vector<1x384xf32> to vector<8x384xf32>
    %468 = arith.addf %466, %467 : vector<8x384xf32>
    %469 = arith.truncf %435 : vector<8x128xf32> to vector<8x128xbf16>
    %cst_99 = arith.constant dense<0.000000e+00> : vector<8x384xf32>
    %470 = tpu.matmul %469, %268, %cst_99 {dimension_numbers = #tpu.dot_dimension_numbers<[1], [0], [0], [1], [0, 0, 1, 1], [], []>} : vector<8x128xbf16>, vector<128x384xbf16>, vector<8x384xf32> -> vector<8x384xf32>
    %471 = vector.extract_strided_slice %468 {offsets = [0, 0], sizes = [8, 128], strides = [1, 1]} : vector<8x384xf32> to vector<8x128xf32>
    %472 = vector.extract_strided_slice %470 {offsets = [0, 0], sizes = [8, 128], strides = [1, 1]} : vector<8x384xf32> to vector<8x128xf32>
    %473 = arith.addf %471, %472 : vector<8x128xf32>
    %474 = arith.negf %473 : vector<8x128xf32>
    %475 = math.exp %474 : vector<8x128xf32>
    %cst_100 = arith.constant 1.000000e+00 : f32
    %476 = vector.broadcast %cst_100 : f32 to vector<8x128xf32>
    %477 = arith.addf %476, %475 : vector<8x128xf32>
    %478 = arith.divf %476, %477 : vector<8x128xf32>
    %479 = vector.extract_strided_slice %468 {offsets = [0, 128], sizes = [8, 128], strides = [1, 1]} : vector<8x384xf32> to vector<8x128xf32>
    %480 = vector.extract_strided_slice %470 {offsets = [0, 128], sizes = [8, 128], strides = [1, 1]} : vector<8x384xf32> to vector<8x128xf32>
    %481 = arith.addf %479, %480 : vector<8x128xf32>
    %482 = arith.negf %481 : vector<8x128xf32>
    %483 = math.exp %482 : vector<8x128xf32>
    %cst_101 = arith.constant 1.000000e+00 : f32
    %484 = vector.broadcast %cst_101 : f32 to vector<8x128xf32>
    %485 = arith.addf %484, %483 : vector<8x128xf32>
    %486 = arith.divf %484, %485 : vector<8x128xf32>
    %487 = vector.extract_strided_slice %468 {offsets = [0, 256], sizes = [8, 128], strides = [1, 1]} : vector<8x384xf32> to vector<8x128xf32>
    %488 = vector.extract_strided_slice %470 {offsets = [0, 256], sizes = [8, 128], strides = [1, 1]} : vector<8x384xf32> to vector<8x128xf32>
    %489 = vector.broadcast %270 : vector<1x128xf32> to vector<8x128xf32>
    %490 = arith.addf %488, %489 : vector<8x128xf32>
    %491 = arith.mulf %478, %490 : vector<8x128xf32>
    %492 = arith.addf %487, %491 : vector<8x128xf32>
    %493 = math.tanh %492 : vector<8x128xf32>
    %cst_102 = arith.constant 1.000000e+00 : f32
    %494 = vector.broadcast %cst_102 : f32 to vector<8x128xf32>
    %495 = arith.subf %494, %486 : vector<8x128xf32>
    %496 = arith.mulf %495, %493 : vector<8x128xf32>
    %497 = arith.mulf %486, %435 : vector<8x128xf32>
    %498 = arith.addf %496, %497 : vector<8x128xf32>
    %499 = arith.truncf %498 : vector<8x128xf32> to vector<8x128xbf16>
    %cst_103 = arith.constant dense<0.000000e+00> : vector<8x128xf32>
    %500 = tpu.matmul %499, %271, %cst_103 {dimension_numbers = #tpu.dot_dimension_numbers<[1], [0], [0], [1], [0, 0, 1, 1], [], []>} : vector<8x128xbf16>, vector<128x128xbf16>, vector<8x128xf32> -> vector<8x128xf32>
    %501 = vector.broadcast %272 : vector<1x128xf32> to vector<8x128xf32>
    %502 = arith.addf %500, %501 : vector<8x128xf32>
    %cst_104 = arith.constant dense<0xFF800000> : vector<8xf32>
    %503 = vector.multi_reduction <maximumf>, %502, %cst_104 [1] : vector<8x128xf32> to vector<8xf32>
    %504 = vector.shape_cast %503 : vector<8xf32> to vector<8x1xf32>
    %505 = vector.broadcast %504 : vector<8x1xf32> to vector<8x128xf32>
    %506 = arith.subf %502, %505 : vector<8x128xf32>
    %507 = math.exp %506 : vector<8x128xf32>
    %cst_105 = arith.constant dense<0.000000e+00> : vector<8xf32>
    %508 = vector.multi_reduction <add>, %507, %cst_105 [1] : vector<8x128xf32> to vector<8xf32>
    %509 = vector.shape_cast %508 : vector<8xf32> to vector<8x1xf32>
    %510 = math.log %509 : vector<8x1xf32>
    %511 = vector.broadcast %510 : vector<8x1xf32> to vector<8x128xf32>
    %512 = arith.subf %506, %511 : vector<8x128xf32>
    %c3 = arith.constant 3 : index
    %c0_106 = arith.constant 0 : index
    %c0_107 = arith.constant 0 : index
    %513 = vector.load %arg13[%c3, %c0_106, %c0_107] : memref<8x8x128xf32, #tpu.memory_space<vmem>>, vector<1x8x128xf32>
    %514 = vector.shape_cast %513 : vector<1x8x128xf32> to vector<8x128xf32>
    %515 = vector.shape_cast %512 : vector<8x128xf32> to vector<1x8x128xf32>
    tpu.vector_store %arg13[%c3, %c0_106, %c0_107], %515 {strides = array<i32>} : memref<8x8x128xf32, #tpu.memory_space<vmem>>, vector<1x8x128xf32>,
    %516 = vector.broadcast %504 : vector<8x1xf32> to vector<8x128xf32>
    %517 = arith.cmpf oge, %502, %516 : vector<8x128xf32>
    %c128_i32_108 = arith.constant 128 : i32
    %518 = vector.broadcast %c128_i32_108 : i32 to vector<8x128xi32>
    %519 = arith.select %517, %273, %518 : vector<8x128xi1>, vector<8x128xi32>
    %cst_109 = arith.constant dense<2147483647> : vector<8xi32>
    %520 = vector.multi_reduction <minsi>, %519, %cst_109 [1] : vector<8x128xi32> to vector<8xi32>
    %521 = vector.shape_cast %520 : vector<8xi32> to vector<8x1xi32>
    %522 = vector.broadcast %521 : vector<8x1xi32> to vector<8x128xi32>
    %523 = arith.cmpi eq, %273, %522 : vector<8x128xi32>
    %524 = arith.extui %523 : vector<8x128xi1> to vector<8x128xi32>
    %525 = arith.sitofp %524 : vector<8x128xi32> to vector<8x128xf32>
    %526 = arith.truncf %525 : vector<8x128xf32> to vector<8x128xbf16>
    %cst_110 = arith.constant dense<0.000000e+00> : vector<8x128xf32>
    %527 = tpu.matmul %526, %266, %cst_110 {dimension_numbers = #tpu.dot_dimension_numbers<[1], [0], [0], [1], [0, 0, 1, 1], [], []>} : vector<8x128xbf16>, vector<128x128xbf16>, vector<8x128xf32> -> vector<8x128xf32>
    %528 = arith.truncf %527 : vector<8x128xf32> to vector<8x128xbf16>
    %cst_111 = arith.constant dense<0.000000e+00> : vector<8x384xf32>
    %529 = tpu.matmul %528, %267, %cst_111 {dimension_numbers = #tpu.dot_dimension_numbers<[1], [0], [0], [1], [0, 0, 1, 1], [], []>} : vector<8x128xbf16>, vector<128x384xbf16>, vector<8x384xf32> -> vector<8x384xf32>
    %530 = vector.broadcast %269 : vector<1x384xf32> to vector<8x384xf32>
    %531 = arith.addf %529, %530 : vector<8x384xf32>
    %532 = arith.truncf %498 : vector<8x128xf32> to vector<8x128xbf16>
    %cst_112 = arith.constant dense<0.000000e+00> : vector<8x384xf32>
    %533 = tpu.matmul %532, %268, %cst_112 {dimension_numbers = #tpu.dot_dimension_numbers<[1], [0], [0], [1], [0, 0, 1, 1], [], []>} : vector<8x128xbf16>, vector<128x384xbf16>, vector<8x384xf32> -> vector<8x384xf32>
    %534 = vector.extract_strided_slice %531 {offsets = [0, 0], sizes = [8, 128], strides = [1, 1]} : vector<8x384xf32> to vector<8x128xf32>
    %535 = vector.extract_strided_slice %533 {offsets = [0, 0], sizes = [8, 128], strides = [1, 1]} : vector<8x384xf32> to vector<8x128xf32>
    %536 = arith.addf %534, %535 : vector<8x128xf32>
    %537 = arith.negf %536 : vector<8x128xf32>
    %538 = math.exp %537 : vector<8x128xf32>
    %cst_113 = arith.constant 1.000000e+00 : f32
    %539 = vector.broadcast %cst_113 : f32 to vector<8x128xf32>
    %540 = arith.addf %539, %538 : vector<8x128xf32>
    %541 = arith.divf %539, %540 : vector<8x128xf32>
    %542 = vector.extract_strided_slice %531 {offsets = [0, 128], sizes = [8, 128], strides = [1, 1]} : vector<8x384xf32> to vector<8x128xf32>
    %543 = vector.extract_strided_slice %533 {offsets = [0, 128], sizes = [8, 128], strides = [1, 1]} : vector<8x384xf32> to vector<8x128xf32>
    %544 = arith.addf %542, %543 : vector<8x128xf32>
    %545 = arith.negf %544 : vector<8x128xf32>
    %546 = math.exp %545 : vector<8x128xf32>
    %cst_114 = arith.constant 1.000000e+00 : f32
    %547 = vector.broadcast %cst_114 : f32 to vector<8x128xf32>
    %548 = arith.addf %547, %546 : vector<8x128xf32>
    %549 = arith.divf %547, %548 : vector<8x128xf32>
    %550 = vector.extract_strided_slice %531 {offsets = [0, 256], sizes = [8, 128], strides = [1, 1]} : vector<8x384xf32> to vector<8x128xf32>
    %551 = vector.extract_strided_slice %533 {offsets = [0, 256], sizes = [8, 128], strides = [1, 1]} : vector<8x384xf32> to vector<8x128xf32>
    %552 = vector.broadcast %270 : vector<1x128xf32> to vector<8x128xf32>
    %553 = arith.addf %551, %552 : vector<8x128xf32>
    %554 = arith.mulf %541, %553 : vector<8x128xf32>
    %555 = arith.addf %550, %554 : vector<8x128xf32>
    %556 = math.tanh %555 : vector<8x128xf32>
    %cst_115 = arith.constant 1.000000e+00 : f32
    %557 = vector.broadcast %cst_115 : f32 to vector<8x128xf32>
    %558 = arith.subf %557, %549 : vector<8x128xf32>
    %559 = arith.mulf %558, %556 : vector<8x128xf32>
    %560 = arith.mulf %549, %498 : vector<8x128xf32>
    %561 = arith.addf %559, %560 : vector<8x128xf32>
    %562 = arith.truncf %561 : vector<8x128xf32> to vector<8x128xbf16>
    %cst_116 = arith.constant dense<0.000000e+00> : vector<8x128xf32>
    %563 = tpu.matmul %562, %271, %cst_116 {dimension_numbers = #tpu.dot_dimension_numbers<[1], [0], [0], [1], [0, 0, 1, 1], [], []>} : vector<8x128xbf16>, vector<128x128xbf16>, vector<8x128xf32> -> vector<8x128xf32>
    %564 = vector.broadcast %272 : vector<1x128xf32> to vector<8x128xf32>
    %565 = arith.addf %563, %564 : vector<8x128xf32>
    %cst_117 = arith.constant dense<0xFF800000> : vector<8xf32>
    %566 = vector.multi_reduction <maximumf>, %565, %cst_117 [1] : vector<8x128xf32> to vector<8xf32>
    %567 = vector.shape_cast %566 : vector<8xf32> to vector<8x1xf32>
    %568 = vector.broadcast %567 : vector<8x1xf32> to vector<8x128xf32>
    %569 = arith.subf %565, %568 : vector<8x128xf32>
    %570 = math.exp %569 : vector<8x128xf32>
    %cst_118 = arith.constant dense<0.000000e+00> : vector<8xf32>
    %571 = vector.multi_reduction <add>, %570, %cst_118 [1] : vector<8x128xf32> to vector<8xf32>
    %572 = vector.shape_cast %571 : vector<8xf32> to vector<8x1xf32>
    %573 = math.log %572 : vector<8x1xf32>
    %574 = vector.broadcast %573 : vector<8x1xf32> to vector<8x128xf32>
    %575 = arith.subf %569, %574 : vector<8x128xf32>
    %c4 = arith.constant 4 : index
    %c0_119 = arith.constant 0 : index
    %c0_120 = arith.constant 0 : index
    %576 = vector.load %arg13[%c4, %c0_119, %c0_120] : memref<8x8x128xf32, #tpu.memory_space<vmem>>, vector<1x8x128xf32>
    %577 = vector.shape_cast %576 : vector<1x8x128xf32> to vector<8x128xf32>
    %578 = vector.shape_cast %575 : vector<8x128xf32> to vector<1x8x128xf32>
    tpu.vector_store %arg13[%c4, %c0_119, %c0_120], %578 {strides = array<i32>} : memref<8x8x128xf32, #tpu.memory_space<vmem>>, vector<1x8x128xf32>,
    %579 = vector.broadcast %567 : vector<8x1xf32> to vector<8x128xf32>
    %580 = arith.cmpf oge, %565, %579 : vector<8x128xf32>
    %c128_i32_121 = arith.constant 128 : i32
    %581 = vector.broadcast %c128_i32_121 : i32 to vector<8x128xi32>
    %582 = arith.select %580, %273, %581 : vector<8x128xi1>, vector<8x128xi32>
    %cst_122 = arith.constant dense<2147483647> : vector<8xi32>
    %583 = vector.multi_reduction <minsi>, %582, %cst_122 [1] : vector<8x128xi32> to vector<8xi32>
    %584 = vector.shape_cast %583 : vector<8xi32> to vector<8x1xi32>
    %585 = vector.broadcast %584 : vector<8x1xi32> to vector<8x128xi32>
    %586 = arith.cmpi eq, %273, %585 : vector<8x128xi32>
    %587 = arith.extui %586 : vector<8x128xi1> to vector<8x128xi32>
    %588 = arith.sitofp %587 : vector<8x128xi32> to vector<8x128xf32>
    %589 = arith.truncf %588 : vector<8x128xf32> to vector<8x128xbf16>
    %cst_123 = arith.constant dense<0.000000e+00> : vector<8x128xf32>
    %590 = tpu.matmul %589, %266, %cst_123 {dimension_numbers = #tpu.dot_dimension_numbers<[1], [0], [0], [1], [0, 0, 1, 1], [], []>} : vector<8x128xbf16>, vector<128x128xbf16>, vector<8x128xf32> -> vector<8x128xf32>
    %591 = arith.truncf %590 : vector<8x128xf32> to vector<8x128xbf16>
    %cst_124 = arith.constant dense<0.000000e+00> : vector<8x384xf32>
    %592 = tpu.matmul %591, %267, %cst_124 {dimension_numbers = #tpu.dot_dimension_numbers<[1], [0], [0], [1], [0, 0, 1, 1], [], []>} : vector<8x128xbf16>, vector<128x384xbf16>, vector<8x384xf32> -> vector<8x384xf32>
    %593 = vector.broadcast %269 : vector<1x384xf32> to vector<8x384xf32>
    %594 = arith.addf %592, %593 : vector<8x384xf32>
    %595 = arith.truncf %561 : vector<8x128xf32> to vector<8x128xbf16>
    %cst_125 = arith.constant dense<0.000000e+00> : vector<8x384xf32>
    %596 = tpu.matmul %595, %268, %cst_125 {dimension_numbers = #tpu.dot_dimension_numbers<[1], [0], [0], [1], [0, 0, 1, 1], [], []>} : vector<8x128xbf16>, vector<128x384xbf16>, vector<8x384xf32> -> vector<8x384xf32>
    %597 = vector.extract_strided_slice %594 {offsets = [0, 0], sizes = [8, 128], strides = [1, 1]} : vector<8x384xf32> to vector<8x128xf32>
    %598 = vector.extract_strided_slice %596 {offsets = [0, 0], sizes = [8, 128], strides = [1, 1]} : vector<8x384xf32> to vector<8x128xf32>
    %599 = arith.addf %597, %598 : vector<8x128xf32>
    %600 = arith.negf %599 : vector<8x128xf32>
    %601 = math.exp %600 : vector<8x128xf32>
    %cst_126 = arith.constant 1.000000e+00 : f32
    %602 = vector.broadcast %cst_126 : f32 to vector<8x128xf32>
    %603 = arith.addf %602, %601 : vector<8x128xf32>
    %604 = arith.divf %602, %603 : vector<8x128xf32>
    %605 = vector.extract_strided_slice %594 {offsets = [0, 128], sizes = [8, 128], strides = [1, 1]} : vector<8x384xf32> to vector<8x128xf32>
    %606 = vector.extract_strided_slice %596 {offsets = [0, 128], sizes = [8, 128], strides = [1, 1]} : vector<8x384xf32> to vector<8x128xf32>
    %607 = arith.addf %605, %606 : vector<8x128xf32>
    %608 = arith.negf %607 : vector<8x128xf32>
    %609 = math.exp %608 : vector<8x128xf32>
    %cst_127 = arith.constant 1.000000e+00 : f32
    %610 = vector.broadcast %cst_127 : f32 to vector<8x128xf32>
    %611 = arith.addf %610, %609 : vector<8x128xf32>
    %612 = arith.divf %610, %611 : vector<8x128xf32>
    %613 = vector.extract_strided_slice %594 {offsets = [0, 256], sizes = [8, 128], strides = [1, 1]} : vector<8x384xf32> to vector<8x128xf32>
    %614 = vector.extract_strided_slice %596 {offsets = [0, 256], sizes = [8, 128], strides = [1, 1]} : vector<8x384xf32> to vector<8x128xf32>
    %615 = vector.broadcast %270 : vector<1x128xf32> to vector<8x128xf32>
    %616 = arith.addf %614, %615 : vector<8x128xf32>
    %617 = arith.mulf %604, %616 : vector<8x128xf32>
    %618 = arith.addf %613, %617 : vector<8x128xf32>
    %619 = math.tanh %618 : vector<8x128xf32>
    %cst_128 = arith.constant 1.000000e+00 : f32
    %620 = vector.broadcast %cst_128 : f32 to vector<8x128xf32>
    %621 = arith.subf %620, %612 : vector<8x128xf32>
    %622 = arith.mulf %621, %619 : vector<8x128xf32>
    %623 = arith.mulf %612, %561 : vector<8x128xf32>
    %624 = arith.addf %622, %623 : vector<8x128xf32>
    %625 = arith.truncf %624 : vector<8x128xf32> to vector<8x128xbf16>
    %cst_129 = arith.constant dense<0.000000e+00> : vector<8x128xf32>
    %626 = tpu.matmul %625, %271, %cst_129 {dimension_numbers = #tpu.dot_dimension_numbers<[1], [0], [0], [1], [0, 0, 1, 1], [], []>} : vector<8x128xbf16>, vector<128x128xbf16>, vector<8x128xf32> -> vector<8x128xf32>
    %627 = vector.broadcast %272 : vector<1x128xf32> to vector<8x128xf32>
    %628 = arith.addf %626, %627 : vector<8x128xf32>
    %cst_130 = arith.constant dense<0xFF800000> : vector<8xf32>
    %629 = vector.multi_reduction <maximumf>, %628, %cst_130 [1] : vector<8x128xf32> to vector<8xf32>
    %630 = vector.shape_cast %629 : vector<8xf32> to vector<8x1xf32>
    %631 = vector.broadcast %630 : vector<8x1xf32> to vector<8x128xf32>
    %632 = arith.subf %628, %631 : vector<8x128xf32>
    %633 = math.exp %632 : vector<8x128xf32>
    %cst_131 = arith.constant dense<0.000000e+00> : vector<8xf32>
    %634 = vector.multi_reduction <add>, %633, %cst_131 [1] : vector<8x128xf32> to vector<8xf32>
    %635 = vector.shape_cast %634 : vector<8xf32> to vector<8x1xf32>
    %636 = math.log %635 : vector<8x1xf32>
    %637 = vector.broadcast %636 : vector<8x1xf32> to vector<8x128xf32>
    %638 = arith.subf %632, %637 : vector<8x128xf32>
    %c5 = arith.constant 5 : index
    %c0_132 = arith.constant 0 : index
    %c0_133 = arith.constant 0 : index
    %639 = vector.load %arg13[%c5, %c0_132, %c0_133] : memref<8x8x128xf32, #tpu.memory_space<vmem>>, vector<1x8x128xf32>
    %640 = vector.shape_cast %639 : vector<1x8x128xf32> to vector<8x128xf32>
    %641 = vector.shape_cast %638 : vector<8x128xf32> to vector<1x8x128xf32>
    tpu.vector_store %arg13[%c5, %c0_132, %c0_133], %641 {strides = array<i32>} : memref<8x8x128xf32, #tpu.memory_space<vmem>>, vector<1x8x128xf32>,
    %642 = vector.broadcast %630 : vector<8x1xf32> to vector<8x128xf32>
    %643 = arith.cmpf oge, %628, %642 : vector<8x128xf32>
    %c128_i32_134 = arith.constant 128 : i32
    %644 = vector.broadcast %c128_i32_134 : i32 to vector<8x128xi32>
    %645 = arith.select %643, %273, %644 : vector<8x128xi1>, vector<8x128xi32>
    %cst_135 = arith.constant dense<2147483647> : vector<8xi32>
    %646 = vector.multi_reduction <minsi>, %645, %cst_135 [1] : vector<8x128xi32> to vector<8xi32>
    %647 = vector.shape_cast %646 : vector<8xi32> to vector<8x1xi32>
    %648 = vector.broadcast %647 : vector<8x1xi32> to vector<8x128xi32>
    %649 = arith.cmpi eq, %273, %648 : vector<8x128xi32>
    %650 = arith.extui %649 : vector<8x128xi1> to vector<8x128xi32>
    %651 = arith.sitofp %650 : vector<8x128xi32> to vector<8x128xf32>
    %652 = arith.truncf %651 : vector<8x128xf32> to vector<8x128xbf16>
    %cst_136 = arith.constant dense<0.000000e+00> : vector<8x128xf32>
    %653 = tpu.matmul %652, %266, %cst_136 {dimension_numbers = #tpu.dot_dimension_numbers<[1], [0], [0], [1], [0, 0, 1, 1], [], []>} : vector<8x128xbf16>, vector<128x128xbf16>, vector<8x128xf32> -> vector<8x128xf32>
    %654 = arith.truncf %653 : vector<8x128xf32> to vector<8x128xbf16>
    %cst_137 = arith.constant dense<0.000000e+00> : vector<8x384xf32>
    %655 = tpu.matmul %654, %267, %cst_137 {dimension_numbers = #tpu.dot_dimension_numbers<[1], [0], [0], [1], [0, 0, 1, 1], [], []>} : vector<8x128xbf16>, vector<128x384xbf16>, vector<8x384xf32> -> vector<8x384xf32>
    %656 = vector.broadcast %269 : vector<1x384xf32> to vector<8x384xf32>
    %657 = arith.addf %655, %656 : vector<8x384xf32>
    %658 = arith.truncf %624 : vector<8x128xf32> to vector<8x128xbf16>
    %cst_138 = arith.constant dense<0.000000e+00> : vector<8x384xf32>
    %659 = tpu.matmul %658, %268, %cst_138 {dimension_numbers = #tpu.dot_dimension_numbers<[1], [0], [0], [1], [0, 0, 1, 1], [], []>} : vector<8x128xbf16>, vector<128x384xbf16>, vector<8x384xf32> -> vector<8x384xf32>
    %660 = vector.extract_strided_slice %657 {offsets = [0, 0], sizes = [8, 128], strides = [1, 1]} : vector<8x384xf32> to vector<8x128xf32>
    %661 = vector.extract_strided_slice %659 {offsets = [0, 0], sizes = [8, 128], strides = [1, 1]} : vector<8x384xf32> to vector<8x128xf32>
    %662 = arith.addf %660, %661 : vector<8x128xf32>
    %663 = arith.negf %662 : vector<8x128xf32>
    %664 = math.exp %663 : vector<8x128xf32>
    %cst_139 = arith.constant 1.000000e+00 : f32
    %665 = vector.broadcast %cst_139 : f32 to vector<8x128xf32>
    %666 = arith.addf %665, %664 : vector<8x128xf32>
    %667 = arith.divf %665, %666 : vector<8x128xf32>
    %668 = vector.extract_strided_slice %657 {offsets = [0, 128], sizes = [8, 128], strides = [1, 1]} : vector<8x384xf32> to vector<8x128xf32>
    %669 = vector.extract_strided_slice %659 {offsets = [0, 128], sizes = [8, 128], strides = [1, 1]} : vector<8x384xf32> to vector<8x128xf32>
    %670 = arith.addf %668, %669 : vector<8x128xf32>
    %671 = arith.negf %670 : vector<8x128xf32>
    %672 = math.exp %671 : vector<8x128xf32>
    %cst_140 = arith.constant 1.000000e+00 : f32
    %673 = vector.broadcast %cst_140 : f32 to vector<8x128xf32>
    %674 = arith.addf %673, %672 : vector<8x128xf32>
    %675 = arith.divf %673, %674 : vector<8x128xf32>
    %676 = vector.extract_strided_slice %657 {offsets = [0, 256], sizes = [8, 128], strides = [1, 1]} : vector<8x384xf32> to vector<8x128xf32>
    %677 = vector.extract_strided_slice %659 {offsets = [0, 256], sizes = [8, 128], strides = [1, 1]} : vector<8x384xf32> to vector<8x128xf32>
    %678 = vector.broadcast %270 : vector<1x128xf32> to vector<8x128xf32>
    %679 = arith.addf %677, %678 : vector<8x128xf32>
    %680 = arith.mulf %667, %679 : vector<8x128xf32>
    %681 = arith.addf %676, %680 : vector<8x128xf32>
    %682 = math.tanh %681 : vector<8x128xf32>
    %cst_141 = arith.constant 1.000000e+00 : f32
    %683 = vector.broadcast %cst_141 : f32 to vector<8x128xf32>
    %684 = arith.subf %683, %675 : vector<8x128xf32>
    %685 = arith.mulf %684, %682 : vector<8x128xf32>
    %686 = arith.mulf %675, %624 : vector<8x128xf32>
    %687 = arith.addf %685, %686 : vector<8x128xf32>
    %688 = arith.truncf %687 : vector<8x128xf32> to vector<8x128xbf16>
    %cst_142 = arith.constant dense<0.000000e+00> : vector<8x128xf32>
    %689 = tpu.matmul %688, %271, %cst_142 {dimension_numbers = #tpu.dot_dimension_numbers<[1], [0], [0], [1], [0, 0, 1, 1], [], []>} : vector<8x128xbf16>, vector<128x128xbf16>, vector<8x128xf32> -> vector<8x128xf32>
    %690 = vector.broadcast %272 : vector<1x128xf32> to vector<8x128xf32>
    %691 = arith.addf %689, %690 : vector<8x128xf32>
    %cst_143 = arith.constant dense<0xFF800000> : vector<8xf32>
    %692 = vector.multi_reduction <maximumf>, %691, %cst_143 [1] : vector<8x128xf32> to vector<8xf32>
    %693 = vector.shape_cast %692 : vector<8xf32> to vector<8x1xf32>
    %694 = vector.broadcast %693 : vector<8x1xf32> to vector<8x128xf32>
    %695 = arith.subf %691, %694 : vector<8x128xf32>
    %696 = math.exp %695 : vector<8x128xf32>
    %cst_144 = arith.constant dense<0.000000e+00> : vector<8xf32>
    %697 = vector.multi_reduction <add>, %696, %cst_144 [1] : vector<8x128xf32> to vector<8xf32>
    %698 = vector.shape_cast %697 : vector<8xf32> to vector<8x1xf32>
    %699 = math.log %698 : vector<8x1xf32>
    %700 = vector.broadcast %699 : vector<8x1xf32> to vector<8x128xf32>
    %701 = arith.subf %695, %700 : vector<8x128xf32>
    %c6 = arith.constant 6 : index
    %c0_145 = arith.constant 0 : index
    %c0_146 = arith.constant 0 : index
    %702 = vector.load %arg13[%c6, %c0_145, %c0_146] : memref<8x8x128xf32, #tpu.memory_space<vmem>>, vector<1x8x128xf32>
    %703 = vector.shape_cast %702 : vector<1x8x128xf32> to vector<8x128xf32>
    %704 = vector.shape_cast %701 : vector<8x128xf32> to vector<1x8x128xf32>
    tpu.vector_store %arg13[%c6, %c0_145, %c0_146], %704 {strides = array<i32>} : memref<8x8x128xf32, #tpu.memory_space<vmem>>, vector<1x8x128xf32>,
    %705 = vector.broadcast %693 : vector<8x1xf32> to vector<8x128xf32>
    %706 = arith.cmpf oge, %691, %705 : vector<8x128xf32>
    %c128_i32_147 = arith.constant 128 : i32
    %707 = vector.broadcast %c128_i32_147 : i32 to vector<8x128xi32>
    %708 = arith.select %706, %273, %707 : vector<8x128xi1>, vector<8x128xi32>
    %cst_148 = arith.constant dense<2147483647> : vector<8xi32>
    %709 = vector.multi_reduction <minsi>, %708, %cst_148 [1] : vector<8x128xi32> to vector<8xi32>
    %710 = vector.shape_cast %709 : vector<8xi32> to vector<8x1xi32>
    %711 = vector.broadcast %710 : vector<8x1xi32> to vector<8x128xi32>
    %712 = arith.cmpi eq, %273, %711 : vector<8x128xi32>
    %713 = arith.extui %712 : vector<8x128xi1> to vector<8x128xi32>
    %714 = arith.sitofp %713 : vector<8x128xi32> to vector<8x128xf32>
    %715 = arith.truncf %714 : vector<8x128xf32> to vector<8x128xbf16>
    %cst_149 = arith.constant dense<0.000000e+00> : vector<8x128xf32>
    %716 = tpu.matmul %715, %266, %cst_149 {dimension_numbers = #tpu.dot_dimension_numbers<[1], [0], [0], [1], [0, 0, 1, 1], [], []>} : vector<8x128xbf16>, vector<128x128xbf16>, vector<8x128xf32> -> vector<8x128xf32>
    %717 = arith.truncf %716 : vector<8x128xf32> to vector<8x128xbf16>
    %cst_150 = arith.constant dense<0.000000e+00> : vector<8x384xf32>
    %718 = tpu.matmul %717, %267, %cst_150 {dimension_numbers = #tpu.dot_dimension_numbers<[1], [0], [0], [1], [0, 0, 1, 1], [], []>} : vector<8x128xbf16>, vector<128x384xbf16>, vector<8x384xf32> -> vector<8x384xf32>
    %719 = vector.broadcast %269 : vector<1x384xf32> to vector<8x384xf32>
    %720 = arith.addf %718, %719 : vector<8x384xf32>
    %721 = arith.truncf %687 : vector<8x128xf32> to vector<8x128xbf16>
    %cst_151 = arith.constant dense<0.000000e+00> : vector<8x384xf32>
    %722 = tpu.matmul %721, %268, %cst_151 {dimension_numbers = #tpu.dot_dimension_numbers<[1], [0], [0], [1], [0, 0, 1, 1], [], []>} : vector<8x128xbf16>, vector<128x384xbf16>, vector<8x384xf32> -> vector<8x384xf32>
    %723 = vector.extract_strided_slice %720 {offsets = [0, 0], sizes = [8, 128], strides = [1, 1]} : vector<8x384xf32> to vector<8x128xf32>
    %724 = vector.extract_strided_slice %722 {offsets = [0, 0], sizes = [8, 128], strides = [1, 1]} : vector<8x384xf32> to vector<8x128xf32>
    %725 = arith.addf %723, %724 : vector<8x128xf32>
    %726 = arith.negf %725 : vector<8x128xf32>
    %727 = math.exp %726 : vector<8x128xf32>
    %cst_152 = arith.constant 1.000000e+00 : f32
    %728 = vector.broadcast %cst_152 : f32 to vector<8x128xf32>
    %729 = arith.addf %728, %727 : vector<8x128xf32>
    %730 = arith.divf %728, %729 : vector<8x128xf32>
    %731 = vector.extract_strided_slice %720 {offsets = [0, 128], sizes = [8, 128], strides = [1, 1]} : vector<8x384xf32> to vector<8x128xf32>
    %732 = vector.extract_strided_slice %722 {offsets = [0, 128], sizes = [8, 128], strides = [1, 1]} : vector<8x384xf32> to vector<8x128xf32>
    %733 = arith.addf %731, %732 : vector<8x128xf32>
    %734 = arith.negf %733 : vector<8x128xf32>
    %735 = math.exp %734 : vector<8x128xf32>
    %cst_153 = arith.constant 1.000000e+00 : f32
    %736 = vector.broadcast %cst_153 : f32 to vector<8x128xf32>
    %737 = arith.addf %736, %735 : vector<8x128xf32>
    %738 = arith.divf %736, %737 : vector<8x128xf32>
    %739 = vector.extract_strided_slice %720 {offsets = [0, 256], sizes = [8, 128], strides = [1, 1]} : vector<8x384xf32> to vector<8x128xf32>
    %740 = vector.extract_strided_slice %722 {offsets = [0, 256], sizes = [8, 128], strides = [1, 1]} : vector<8x384xf32> to vector<8x128xf32>
    %741 = vector.broadcast %270 : vector<1x128xf32> to vector<8x128xf32>
    %742 = arith.addf %740, %741 : vector<8x128xf32>
    %743 = arith.mulf %730, %742 : vector<8x128xf32>
    %744 = arith.addf %739, %743 : vector<8x128xf32>
    %745 = math.tanh %744 : vector<8x128xf32>
    %cst_154 = arith.constant 1.000000e+00 : f32
    %746 = vector.broadcast %cst_154 : f32 to vector<8x128xf32>
    %747 = arith.subf %746, %738 : vector<8x128xf32>
    %748 = arith.mulf %747, %745 : vector<8x128xf32>
    %749 = arith.mulf %738, %687 : vector<8x128xf32>
    %750 = arith.addf %748, %749 : vector<8x128xf32>
    %751 = arith.truncf %750 : vector<8x128xf32> to vector<8x128xbf16>
    %cst_155 = arith.constant dense<0.000000e+00> : vector<8x128xf32>
    %752 = tpu.matmul %751, %271, %cst_155 {dimension_numbers = #tpu.dot_dimension_numbers<[1], [0], [0], [1], [0, 0, 1, 1], [], []>} : vector<8x128xbf16>, vector<128x128xbf16>, vector<8x128xf32> -> vector<8x128xf32>
    %753 = vector.broadcast %272 : vector<1x128xf32> to vector<8x128xf32>
    %754 = arith.addf %752, %753 : vector<8x128xf32>
    %cst_156 = arith.constant dense<0xFF800000> : vector<8xf32>
    %755 = vector.multi_reduction <maximumf>, %754, %cst_156 [1] : vector<8x128xf32> to vector<8xf32>
    %756 = vector.shape_cast %755 : vector<8xf32> to vector<8x1xf32>
    %757 = vector.broadcast %756 : vector<8x1xf32> to vector<8x128xf32>
    %758 = arith.subf %754, %757 : vector<8x128xf32>
    %759 = math.exp %758 : vector<8x128xf32>
    %cst_157 = arith.constant dense<0.000000e+00> : vector<8xf32>
    %760 = vector.multi_reduction <add>, %759, %cst_157 [1] : vector<8x128xf32> to vector<8xf32>
    %761 = vector.shape_cast %760 : vector<8xf32> to vector<8x1xf32>
    %762 = math.log %761 : vector<8x1xf32>
    %763 = vector.broadcast %762 : vector<8x1xf32> to vector<8x128xf32>
    %764 = arith.subf %758, %763 : vector<8x128xf32>
    %c7 = arith.constant 7 : index
    %c0_158 = arith.constant 0 : index
    %c0_159 = arith.constant 0 : index
    %765 = vector.load %arg13[%c7, %c0_158, %c0_159] : memref<8x8x128xf32, #tpu.memory_space<vmem>>, vector<1x8x128xf32>
    %766 = vector.shape_cast %765 : vector<1x8x128xf32> to vector<8x128xf32>
    %767 = vector.shape_cast %764 : vector<8x128xf32> to vector<1x8x128xf32>
    tpu.vector_store %arg13[%c7, %c0_158, %c0_159], %767 {strides = array<i32>} : memref<8x8x128xf32, #tpu.memory_space<vmem>>, vector<1x8x128xf32>,
    %c0_160 = arith.constant 0 : index
    %c0_161 = arith.constant 0 : index
    %768 = vector.load %arg14[%c0_160, %c0_161] : memref<8x128xf32, #tpu.memory_space<vmem>>, vector<8x128xf32>
    tpu.vector_store %arg14[%c0_160, %c0_161], %750 {strides = array<i32>} : memref<8x128xf32, #tpu.memory_space<vmem>>, vector<8x128xf32>,
    return
  }
}

</mosaic_0001>

<llo_original>
// kernel: model_forward.1
$region0: #{model_forward.1}
  #allocation0 [shape = 'u32[]', space=smem, size = 0x4, offset = 0x4, fixed_abs, tag = 'smem constant byte address 0x4 - core index']
  #allocation1 [shape = 'u32[144,128]{1,0:T(1,128)}', space=vmem, size = 0x12000, scoped, tag = 'internal scratch']
  %s0 = inlined_call_operand.vmem [shape: s32[64,1], index: 0, kind: input, shape index: {}]
  %s1 = inlined_call_operand.vmem [shape: bf16[128,128], index: 1, kind: input, shape index: {}]
  %s2 = inlined_call_operand.hbm [shape: bf16[128,384], index: 2, kind: input, shape index: {}]
  %s3 = inlined_call_operand.hbm [shape: bf16[128,384], index: 3, kind: input, shape index: {}]
  %s4 = inlined_call_operand.vmem [shape: f32[1,384], index: 4, kind: input, shape index: {}]
  %s5 = inlined_call_operand.vmem [shape: f32[1,128], index: 5, kind: input, shape index: {}]
  %s6 = inlined_call_operand.hbm [shape: bf16[128,128], index: 6, kind: input, shape index: {}]
  %s7 = inlined_call_operand.hbm [shape: bf16[128,384], index: 7, kind: input, shape index: {}]
  %s8 = inlined_call_operand.hbm [shape: bf16[128,384], index: 8, kind: input, shape index: {}]
  %s9 = inlined_call_operand.hbm [shape: f32[1,384], index: 9, kind: input, shape index: {}]
  %s10 = inlined_call_operand.hbm [shape: f32[1,128], index: 10, kind: input, shape index: {}]
  %s11 = inlined_call_operand.vmem [shape: bf16[128,128], index: 11, kind: input, shape index: {}]
  %s12 = inlined_call_operand.hbm [shape: f32[1,128], index: 12, kind: input, shape index: {}]
  %s13 = inlined_call_operand.vmem [shape: f32[8,8,128], index: 13, kind: output, shape index: {0}]
  %s14 = inlined_call_operand.vmem [shape: f32[8,128], index: 14, kind: output, shape index: {1}]
  %15 = xla_tuple %s13, %s14
  %s16 = sld [smem:[#allocation0]]
  $region102: #{model_forward.1} parent=0
    _
  %s18 = ssub.s32 1, %s16
  %s19 = scalar_select 0, %s18, %s16
  $region1: #{model_forward.1} parent=0
    #allocation2 [shape = 'u8[98304]{0}', space=vmem, size = 0x18000, scoped, tag = 'input window, operand 2, single buffered']
    #allocation3 [shape = 's32[1]{0}', space=sflag, size = 0x4, scoped, tag = 'scoped memory for model_forward.1']
    #allocation4 [shape = 'u8[98304]{0}', space=vmem, size = 0x18000, scoped, tag = 'input window, operand 3, single buffered']
    #allocation5 [shape = 's32[1]{0}', space=sflag, size = 0x4, scoped, tag = 'scoped memory for model_forward.1']
    #allocation6 [shape = 'u8[32768]{0}', space=vmem, size = 0x8000, scoped, tag = 'input window, operand 6, single buffered']
    #allocation7 [shape = 'u8[98304]{0}', space=vmem, size = 0x18000, scoped, tag = 'input window, operand 7, single buffered']
    #allocation8 [shape = 's32[1]{0}', space=sflag, size = 0x4, scoped, tag = 'scoped memory for model_forward.1']
    #allocation9 [shape = 'u8[98304]{0}', space=vmem, size = 0x18000, scoped, tag = 'input window, operand 8, single buffered']
    #allocation10 [shape = 'u8[1536]{0}', space=vmem, size = 0x800, scoped, tag = 'input window, operand 9, single buffered']
    #allocation11 [shape = 's32[1]{0}', space=sflag, size = 0x4, scoped, tag = 'scoped memory for model_forward.1']
    #allocation12 [shape = 'u8[512]{0}', space=vmem, size = 0x400, scoped, tag = 'input window, operand 10, single buffered']
    #allocation13 [shape = 'u8[512]{0}', space=vmem, size = 0x400, scoped, tag = 'input window, operand 12, single buffered']
    #allocation14 [shape = 's32[1]{0}', space=sflag, size = 0x4, scoped, tag = 'scoped memory for model_forward.1']
    %20 = vsyncpa [#allocation3], 0
    %21 = vsyncpa [#allocation5], 0
    %22 = vsyncpa [#allocation8], 0
    %23 = vsyncpa [#allocation11], 0
    %24 = vsyncpa [#allocation14], 0
    // Predicated region
    $region2: #{model_forward.1} parent=1 // pred_check
      _
    $region3: #{model_forward.1} parent=1 // pred_check_branch
      %26 = sbr.rel (0) target = $region5
    $region4: #{model_forward.1} parent=1 // pred_region
      _
    $region5: #{model_forward.1} parent=1 // pred_fallthru
      _
    // Predicated region
    $region6: #{model_forward.1} parent=1 // pred_check
      _
    $region7: #{model_forward.1} parent=1 // pred_check_branch
      %28 = sbr.rel (0) target = $region9
    $region8: #{model_forward.1} parent=1 // pred_region
      _
    $region9: #{model_forward.1} parent=1 // pred_fallthru
      _
    // Predicated region
    $region10: #{model_forward.1} parent=1 // pred_check
      _
    $region11: #{model_forward.1} parent=1 // pred_check_branch
      %30 = sbr.rel (0) target = $region13
    $region12: #{model_forward.1} parent=1 // pred_region
      %s32 = ssub.s32 3072, 3072
      %33 = vsyncadd [#allocation3], %s32
      %s34 = sshll.u32 [#allocation2], 4
      %s35 = int_to_ptr.vmem [resolvable:$true] %s34
      %40 = dma.hbm_to_vmem [thread:$0]  %s2, 3072, %s35, [#allocation3], 192, 192, 12
    $region13: #{model_forward.1} parent=1 // pred_fallthru
      _
    // Predicated region
    $region14: #{model_forward.1} parent=1 // pred_check
      _
    $region15: #{model_forward.1} parent=1 // pred_check_branch
      %42 = sbr.rel (0) target = $region17
    $region16: #{model_forward.1} parent=1 // pred_region
      %s44 = ssub.s32 3072, 3072
      %45 = vsyncadd [#allocation5], %s44
      %s46 = sshll.u32 [#allocation4], 4
      %s47 = int_to_ptr.vmem [resolvable:$true] %s46
      %52 = dma.hbm_to_vmem [thread:$0]  %s3, 3072, %s47, [#allocation5], 192, 192, 12
    $region17: #{model_forward.1} parent=1 // pred_fallthru
      _
    // Predicated region
    $region18: #{model_forward.1} parent=1 // pred_check
      _
    $region19: #{model_forward.1} parent=1 // pred_check_branch
      %54 = sbr.rel (0) target = $region21
    $region20: #{model_forward.1} parent=1 // pred_region
      _
    $region21: #{model_forward.1} parent=1 // pred_fallthru
      _
    // Predicated region
    $region22: #{model_forward.1} parent=1 // pred_check
      _
    $region23: #{model_forward.1} parent=1 // pred_check_branch
      %56 = sbr.rel (0) target = $region25
    $region24: #{model_forward.1} parent=1 // pred_region
      _
    $region25: #{model_forward.1} parent=1 // pred_fallthru
      _
    // Predicated region
    $region26: #{model_forward.1} parent=1 // pred_check
      _
    $region27: #{model_forward.1} parent=1 // pred_check_branch
      %58 = sbr.rel (0) target = $region29
    $region28: #{model_forward.1} parent=1 // pred_region
      %s60 = ssub.s32 1024, 1024
      %61 = vsyncadd [#allocation5], %s60
      %s62 = sshll.u32 [#allocation6], 4
      %s63 = int_to_ptr.vmem [resolvable:$true] %s62
      %68 = dma.hbm_to_vmem [thread:$0]  %s6, 1024, %s63, [#allocation5], 64, 64, 4
    $region29: #{model_forward.1} parent=1 // pred_fallthru
      _
    // Predicated region
    $region30: #{model_forward.1} parent=1 // pred_check
      _
    $region31: #{model_forward.1} parent=1 // pred_check_branch
      %70 = sbr.rel (0) target = $region33
    $region32: #{model_forward.1} parent=1 // pred_region
      %s72 = ssub.s32 3072, 3072
      %73 = vsyncadd [#allocation8], %s72
      %s74 = sshll.u32 [#allocation7], 4
      %s75 = int_to_ptr.vmem [resolvable:$true] %s74
      %80 = dma.hbm_to_vmem [thread:$0]  %s7, 3072, %s75, [#allocation8], 192, 192, 12
    $region33: #{model_forward.1} parent=1 // pred_fallthru
      _
    // Predicated region
    $region34: #{model_forward.1} parent=1 // pred_check
      _
    $region35: #{model_forward.1} parent=1 // pred_check_branch
      %82 = sbr.rel (0) target = $region37
    $region36: #{model_forward.1} parent=1 // pred_region
      %s84 = ssub.s32 3072, 3072
      %85 = vsyncadd [#allocation8], %s84
      %s86 = sshll.u32 [#allocation9], 4
      %s87 = int_to_ptr.vmem [resolvable:$true] %s86
      %92 = dma.hbm_to_vmem [thread:$0]  %s8, 3072, %s87, [#allocation8], 192, 192, 12
    $region37: #{model_forward.1} parent=1 // pred_fallthru
      _
    // Predicated region
    $region38: #{model_forward.1} parent=1 // pred_check
      _
    $region39: #{model_forward.1} parent=1 // pred_check_branch
      %94 = sbr.rel (0) target = $region41
    $region40: #{model_forward.1} parent=1 // pred_region
      %s96 = ssub.s32 48, 48
      %97 = vsyncadd [#allocation11], %s96
      %s99 = sshll.u32 [#allocation10], 4
      %s100 = int_to_ptr.vmem [resolvable:$true] %s99
      %102 = dma.hbm_to_vmem [thread:$0]  %s9, 48, %s100, [#allocation11]
    $region41: #{model_forward.1} parent=1 // pred_fallthru
      _
    // Predicated region
    $region42: #{model_forward.1} parent=1 // pred_check
      _
    $region43: #{model_forward.1} parent=1 // pred_check_branch
      %104 = sbr.rel (0) target = $region45
    $region44: #{model_forward.1} parent=1 // pred_region
      %s106 = ssub.s32 16, 16
      %107 = vsyncadd [#allocation11], %s106
      %s109 = sshll.u32 [#allocation12], 4
      %s110 = int_to_ptr.vmem [resolvable:$true] %s109
      %112 = dma.hbm_to_vmem [thread:$0]  %s10, 16, %s110, [#allocation11]
    $region45: #{model_forward.1} parent=1 // pred_fallthru
      _
    // Predicated region
    $region46: #{model_forward.1} parent=1 // pred_check
      _
    $region47: #{model_forward.1} parent=1 // pred_check_branch
      %114 = sbr.rel (0) target = $region49
    $region48: #{model_forward.1} parent=1 // pred_region
      _
    $region49: #{model_forward.1} parent=1 // pred_fallthru
      _
    // Predicated region
    $region50: #{model_forward.1} parent=1 // pred_check
      _
    $region51: #{model_forward.1} parent=1 // pred_check_branch
      %116 = sbr.rel (0) target = $region53
    $region52: #{model_forward.1} parent=1 // pred_region
      %s118 = ssub.s32 16, 16
      %119 = vsyncadd [#allocation14], %s118
      %s121 = sshll.u32 [#allocation13], 4
      %s122 = int_to_ptr.vmem [resolvable:$true] %s121
      %124 = dma.hbm_to_vmem [thread:$0]  %s12, 16, %s122, [#allocation14]
    $region53: #{model_forward.1} parent=1 // pred_fallthru
      _
    // Predicated region
    $region54: #{model_forward.1} parent=1 // pred_check
      _
    $region55: #{model_forward.1} parent=1 // pred_check_branch
      %126 = sbr.rel (0) target = $region57
    $region56: #{model_forward.1} parent=1 // pred_region
      %127 = dma.done [#allocation3], 3072
    $region57: #{model_forward.1} parent=1 // pred_fallthru
      _
    // Predicated region
    $region58: #{model_forward.1} parent=1 // pred_check
      _
    $region59: #{model_forward.1} parent=1 // pred_check_branch
      %129 = sbr.rel (0) target = $region61
    $region60: #{model_forward.1} parent=1 // pred_region
      %130 = dma.done [#allocation5], 3072
    $region61: #{model_forward.1} parent=1 // pred_fallthru
      _
    // Predicated region
    $region62: #{model_forward.1} parent=1 // pred_check
      _
    $region63: #{model_forward.1} parent=1 // pred_check_branch
      %132 = sbr.rel (0) target = $region65
    $region64: #{model_forward.1} parent=1 // pred_region
      %133 = dma.done [#allocation5], 1024
    $region65: #{model_forward.1} parent=1 // pred_fallthru
      _
    // Predicated region
    $region66: #{model_forward.1} parent=1 // pred_check
      _
    $region67: #{model_forward.1} parent=1 // pred_check_branch
      %135 = sbr.rel (0) target = $region69
    $region68: #{model_forward.1} parent=1 // pred_region
      %136 = dma.done [#allocation8], 3072
    $region69: #{model_forward.1} parent=1 // pred_fallthru
      _
    // Predicated region
    $region70: #{model_forward.1} parent=1 // pred_check
      _
    $region71: #{model_forward.1} parent=1 // pred_check_branch
      %138 = sbr.rel (0) target = $region73
    $region72: #{model_forward.1} parent=1 // pred_region
      %139 = dma.done [#allocation8], 3072
    $region73: #{model_forward.1} parent=1 // pred_fallthru
      _
    // Predicated region
    $region74: #{model_forward.1} parent=1 // pred_check
      _
    $region75: #{model_forward.1} parent=1 // pred_check_branch
      %141 = sbr.rel (0) target = $region77
    $region76: #{model_forward.1} parent=1 // pred_region
      %142 = dma.done [#allocation11], 48
    $region77: #{model_forward.1} parent=1 // pred_fallthru
      _
    // Predicated region
    $region78: #{model_forward.1} parent=1 // pred_check
      _
    $region79: #{model_forward.1} parent=1 // pred_check_branch
      %144 = sbr.rel (0) target = $region81
    $region80: #{model_forward.1} parent=1 // pred_region
      %145 = dma.done [#allocation11], 16
    $region81: #{model_forward.1} parent=1 // pred_fallthru
      _
    // Predicated region
    $region82: #{model_forward.1} parent=1 // pred_check
      _
    $region83: #{model_forward.1} parent=1 // pred_check_branch
      %147 = sbr.rel (0) target = $region85
    $region84: #{model_forward.1} parent=1 // pred_region
      %148 = dma.done [#allocation14], 16
    $region85: #{model_forward.1} parent=1 // pred_fallthru
      _
    %v150 = vlaneseq
    %v151 = vand.u32 %v150, 127
    %v152 = vld [vmem:[%s0] sm:$0xff]
    %v153 = vld [vmem:[%s0 + $0x8] sm:$0xff]
    %v154 = vld [vmem:[%s0 + $0x10] sm:$0xff]
    %v155 = vld [vmem:[%s0 + $0x18] sm:$0xff]
    %v156 = vld [vmem:[%s0 + $0x20] sm:$0xff]
    %v157 = vld [vmem:[%s0 + $0x28] sm:$0xff]
    %v158 = vld [vmem:[%s0 + $0x30] sm:$0xff]
    %v159 = vld [vmem:[%s0 + $0x38] sm:$0xff]
    %160 = vset.pattern.permute.xlu0 0
    %161 = vperm.xlu0 %160, %v152
    %v162 = vpop.permute.xlu0 %161
    %163 = vset.pattern.permute.xlu0 0
    %164 = vperm.xlu0 %163, %v153
    %v165 = vpop.permute.xlu0 %164
    %166 = vset.pattern.permute.xlu0 0
    %167 = vperm.xlu0 %166, %v154
    %v168 = vpop.permute.xlu0 %167
    %169 = vset.pattern.permute.xlu0 0
    %170 = vperm.xlu0 %169, %v155
    %v171 = vpop.permute.xlu0 %170
    %172 = vset.pattern.permute.xlu0 0
    %173 = vperm.xlu0 %172, %v156
    %v174 = vpop.permute.xlu0 %173
    %175 = vset.pattern.permute.xlu0 0
    %176 = vperm.xlu0 %175, %v157
    %v177 = vpop.permute.xlu0 %176
    %178 = vset.pattern.permute.xlu0 0
    %179 = vperm.xlu0 %178, %v158
    %v180 = vpop.permute.xlu0 %179
    %181 = vset.pattern.permute.xlu0 0
    %182 = vperm.xlu0 %181, %v159
    %v183 = vpop.permute.xlu0 %182
    %vm184 = vcmp.eq.s32.totalorder %v151, %v162
    %vm185 = vcmp.eq.s32.totalorder %v151, %v165
    %vm186 = vcmp.eq.s32.totalorder %v151, %v168
    %vm187 = vcmp.eq.s32.totalorder %v151, %v171
    %vm188 = vcmp.eq.s32.totalorder %v151, %v174
    %vm189 = vcmp.eq.s32.totalorder %v151, %v177
    %vm190 = vcmp.eq.s32.totalorder %v151, %v180
    %vm191 = vcmp.eq.s32.totalorder %v151, %v183
    %v192 = vsel %vm184, 1, 0
    %v193 = vsel %vm185, 1, 0
    %v194 = vsel %vm186, 1, 0
    %v195 = vsel %vm187, 1, 0
    %v196 = vsel %vm188, 1, 0
    %v197 = vsel %vm189, 1, 0
    %v198 = vsel %vm190, 1, 0
    %v199 = vsel %vm191, 1, 0
    %v200 = vcvt.s32.f32 %v192
    %v201 = vcvt.s32.f32 %v193
    %v202 = vcvt.s32.f32 %v194
    %v203 = vcvt.s32.f32 %v195
    %v204 = vcvt.s32.f32 %v196
    %v205 = vcvt.s32.f32 %v197
    %v206 = vcvt.s32.f32 %v198
    %v207 = vcvt.s32.f32 %v199
    %v208 = vpack.c.bf16 %v201, %v200
    %v209 = vpack.c.bf16 %v203, %v202
    %v210 = vpack.c.bf16 %v205, %v204
    %v211 = vpack.c.bf16 %v207, %v206
    %v212 = vld [vmem:[%s1] sm:$0xf]
    %v213 = vld [vmem:[%s1 + $0x4] sm:$0xf]
    %v214 = vld [vmem:[%s1 + $0x8] sm:$0xf]
    %v215 = vld [vmem:[%s1 + $0xc] sm:$0xf]
    %v216 = vld [vmem:[%s1 + $0x10] sm:$0xf]
    %v217 = vld [vmem:[%s1 + $0x14] sm:$0xf]
    %v218 = vld [vmem:[%s1 + $0x18] sm:$0xf]
    %v219 = vld [vmem:[%s1 + $0x1c] sm:$0xf]
    %v220 = vld [vmem:[%s1 + $0x20] sm:$0xf]
    %v221 = vld [vmem:[%s1 + $0x24] sm:$0xf]
    %v222 = vld [vmem:[%s1 + $0x28] sm:$0xf]
    %v223 = vld [vmem:[%s1 + $0x2c] sm:$0xf]
    %v224 = vld [vmem:[%s1 + $0x30] sm:$0xf]
    %v225 = vld [vmem:[%s1 + $0x34] sm:$0xf]
    %v226 = vld [vmem:[%s1 + $0x38] sm:$0xf]
    %v227 = vld [vmem:[%s1 + $0x3c] sm:$0xf]
    %v244 = vunpack.c.l.b16 %v212
    %v245 = vunpack.c.l.b16 %v213
    %v246 = vunpack.c.l.b16 %v214
    %v247 = vunpack.c.l.b16 %v215
    %v248 = vunpack.c.l.b16 %v216
    %v249 = vunpack.c.l.b16 %v217
    %v250 = vunpack.c.l.b16 %v218
    %v251 = vunpack.c.l.b16 %v219
    %v252 = vunpack.c.l.b16 %v220
    %v253 = vunpack.c.l.b16 %v221
    %v254 = vunpack.c.l.b16 %v222
    %v255 = vunpack.c.l.b16 %v223
    %v256 = vunpack.c.l.b16 %v224
    %v257 = vunpack.c.l.b16 %v225
    %v258 = vunpack.c.l.b16 %v226
    %v259 = vunpack.c.l.b16 %v227
    %v260 = vpack.c.b16 %v245, %v244
    %v261 = vpack.c.b16 %v247, %v246
    %v262 = vpack.c.b16 %v249, %v248
    %v263 = vpack.c.b16 %v251, %v250
    %v264 = vpack.c.b16 %v253, %v252
    %v265 = vpack.c.b16 %v255, %v254
    %v266 = vpack.c.b16 %v257, %v256
    %v267 = vpack.c.b16 %v259, %v258
    %276 = vmatprep.subr.bf16.mxu0 0
    %277 = vmatpush1.bf16.msra.mxu0 %v260
    %278 = vmatprep.subr.bf16.mxu0 0
    %279 = vmatpush1.bf16.msra.mxu0 %v261
    %280 = vmatprep.subr.bf16.mxu0 0
    %281 = vmatpush1.bf16.msra.mxu0 %v262
    %282 = vmatprep.subr.bf16.mxu0 0
    %283 = vmatpush1.bf16.msra.mxu0 %v263
    %284 = vmatprep.subr.bf16.mxu0 0
    %285 = vmatpush1.bf16.msra.mxu0 %v264
    %286 = vmatprep.subr.bf16.mxu0 0
    %287 = vmatpush1.bf16.msra.mxu0 %v265
    %288 = vmatprep.subr.bf16.mxu0 0
    %289 = vmatpush1.bf16.msra.mxu0 %v266
    %290 = vmatprep.subr.bf16.mxu0 0
    %291 = vmatpush1.bf16.msra.mxu0 %v267
    %292 = vmatprep.subr.bf16.mxu0 0
    %293 = vmatpush1.bf16.msra.mxu0 0
    %294 = vmatprep.subr.bf16.mxu0 0
    %295 = vmatpush1.bf16.msra.mxu0 0
    %296 = vmatprep.subr.bf16.mxu0 0
    %297 = vmatpush1.bf16.msra.mxu0 0
    %298 = vmatprep.subr.bf16.mxu0 0
    %299 = vmatpush1.bf16.msra.mxu0 0
    %300 = vmatprep.subr.bf16.mxu0 0
    %301 = vmatpush1.bf16.msra.mxu0 0
    %302 = vmatprep.subr.bf16.mxu0 0
    %303 = vmatpush1.bf16.msra.mxu0 0
    %304 = vmatprep.subr.bf16.mxu0 0
    %305 = vmatpush1.bf16.msra.mxu0 0
    %306 = vmatprep.subr.bf16.mxu0 0
    %307 = vmatpush1.bf16.msra.mxu0 0
    %308 = vmatprep.mubr.bf16.mxu0 0
    %309 = vmatmul.mubr.bf16.gmra.mrb[0].mxu0 %v208
    %v310 = vpop.f32.mrb[0].mxu0
    %v311 = vadd.f32 0.0, %v310
    %v312 = vpop.f32.mrb[0].mxu0
    %v313 = vpop.f32.mrb[0].mxu0
    %v314 = vadd.f32 0.0, %v313
    %v315 = vpop.f32.mrb[0].mxu0
    %316 = vmatprep.mubr.bf16.mxu0 0
    %317 = vmatmul.mubr.bf16.gmra.mrb[0].mxu0 %v209
    %v318 = vpop.f32.mrb[0].mxu0
    %v319 = vadd.f32 0.0, %v318
    %v320 = vpop.f32.mrb[0].mxu0
    %v321 = vpop.f32.mrb[0].mxu0
    %v322 = vadd.f32 0.0, %v321
    %v323 = vpop.f32.mrb[0].mxu0
    %324 = vmatprep.mubr.bf16.mxu0 0
    %325 = vmatmul.mubr.bf16.gmra.mrb[0].mxu0 %v210
    %v326 = vpop.f32.mrb[0].mxu0
    %v327 = vadd.f32 0.0, %v326
    %v328 = vpop.f32.mrb[0].mxu0
    %v329 = vpop.f32.mrb[0].mxu0
    %v330 = vadd.f32 0.0, %v329
    %v331 = vpop.f32.mrb[0].mxu0
    %332 = vmatprep.mubr.bf16.mxu0 0
    %333 = vmatmul.mubr.bf16.gmra.mrb[0].mxu0 %v211
    %v334 = vpop.f32.mrb[0].mxu0
    %v335 = vadd.f32 0.0, %v334
    %v336 = vpop.f32.mrb[0].mxu0
    %v337 = vpop.f32.mrb[0].mxu0
    %v338 = vadd.f32 0.0, %v337
    %v339 = vpop.f32.mrb[0].mxu0
    %340 = vdwg.mxu0
    %v341 = vpack.c.bf16 %v314, %v311
    %v342 = vpack.c.bf16 %v322, %v319
    %v343 = vpack.c.bf16 %v330, %v327
    %v344 = vpack.c.bf16 %v338, %v335
    %v345 = vld [vmem:[#allocation2] sm:$0xff]
    %v346 = vld [vmem:[#allocation2 + $0x8] sm:$0xf]
    %v347 = vld [vmem:[#allocation2 + $0xc] sm:$0xff]
    %v348 = vld [vmem:[#allocation2 + $0x14] sm:$0xf]
    %v349 = vld [vmem:[#allocation2 + $0x18] sm:$0xff]
    %v350 = vld [vmem:[#allocation2 + $0x20] sm:$0xf]
    %v351 = vld [vmem:[#allocation2 + $0x24] sm:$0xff]
    %v352 = vld [vmem:[#allocation2 + $0x2c] sm:$0xf]
    %v353 = vld [vmem:[#allocation2 + $0x30] sm:$0xff]
    %v354 = vld [vmem:[#allocation2 + $0x38] sm:$0xf]
    %v355 = vld [vmem:[#allocation2 + $0x3c] sm:$0xff]
    %v356 = vld [vmem:[#allocation2 + $0x44] sm:$0xf]
    %v357 = vld [vmem:[#allocation2 + $0x48] sm:$0xff]
    %v358 = vld [vmem:[#allocation2 + $0x50] sm:$0xf]
    %v359 = vld [vmem:[#allocation2 + $0x54] sm:$0xff]
    %v360 = vld [vmem:[#allocation2 + $0x5c] sm:$0xf]
    %v361 = vld [vmem:[#allocation2 + $0x60] sm:$0xff]
    %v362 = vld [vmem:[#allocation2 + $0x68] sm:$0xf]
    %v363 = vld [vmem:[#allocation2 + $0x6c] sm:$0xff]
    %v364 = vld [vmem:[#allocation2 + $0x74] sm:$0xf]
    %v365 = vld [vmem:[#allocation2 + $0x78] sm:$0xff]
    %v366 = vld [vmem:[#allocation2 + $0x80] sm:$0xf]
    %v367 = vld [vmem:[#allocation2 + $0x84] sm:$0xff]
    %v368 = vld [vmem:[#allocation2 + $0x8c] sm:$0xf]
    %v369 = vld [vmem:[#allocation2 + $0x90] sm:$0xff]
    %v370 = vld [vmem:[#allocation2 + $0x98] sm:$0xf]
    %v371 = vld [vmem:[#allocation2 + $0x9c] sm:$0xff]
    %v372 = vld [vmem:[#allocation2 + $0xa4] sm:$0xf]
    %v373 = vld [vmem:[#allocation2 + $0xa8] sm:$0xff]
    %v374 = vld [vmem:[#allocation2 + $0xb0] sm:$0xf]
    %v375 = vld [vmem:[#allocation2 + $0xb4] sm:$0xff]
    %v376 = vld [vmem:[#allocation2 + $0xbc] sm:$0xf]
    %v377 = vld [vmem:[%s4] sm:$0x7]
    %v379 = vlaneseq
    %v380 = vshrl.u32 %v379, 7
    %v381 = vsub.s32 0, %v380
    %v382 = vrot.slane %v377, %v381
    %v383 = vlaneseq
    %v384 = vshrl.u32 %v383, 7
    %v385 = vsub.s32 1, %v384
    %v386 = vrot.slane %v377, %v385
    %v387 = vlaneseq
    %v388 = vshrl.u32 %v387, 7
    %v389 = vsub.s32 2, %v388
    %v390 = vrot.slane %v377, %v389
    %v426 = vunpack.c.l.b16 %v345
    %v427 = vunpack.c.h.b16 %v345
    %v428 = vunpack.c.l.b16 %v346
    %v429 = vunpack.c.l.b16 %v347
    %v430 = vunpack.c.h.b16 %v347
    %v431 = vunpack.c.l.b16 %v348
    %v432 = vunpack.c.l.b16 %v349
    %v433 = vunpack.c.h.b16 %v349
    %v434 = vunpack.c.l.b16 %v350
    %v435 = vunpack.c.l.b16 %v351
    %v436 = vunpack.c.h.b16 %v351
    %v437 = vunpack.c.l.b16 %v352
    %v438 = vunpack.c.l.b16 %v353
    %v439 = vunpack.c.h.b16 %v353
    %v440 = vunpack.c.l.b16 %v354
    %v441 = vunpack.c.l.b16 %v355
    %v442 = vunpack.c.h.b16 %v355
    %v443 = vunpack.c.l.b16 %v356
    %v444 = vunpack.c.l.b16 %v357
    %v445 = vunpack.c.h.b16 %v357
    %v446 = vunpack.c.l.b16 %v358
    %v447 = vunpack.c.l.b16 %v359
    %v448 = vunpack.c.h.b16 %v359
    %v449 = vunpack.c.l.b16 %v360
    %v450 = vunpack.c.l.b16 %v361
    %v451 = vunpack.c.h.b16 %v361
    %v452 = vunpack.c.l.b16 %v362
    %v453 = vunpack.c.l.b16 %v363
    %v454 = vunpack.c.h.b16 %v363
    %v455 = vunpack.c.l.b16 %v364
    %v456 = vunpack.c.l.b16 %v365
    %v457 = vunpack.c.h.b16 %v365
    %v458 = vunpack.c.l.b16 %v366
    %v459 = vunpack.c.l.b16 %v367
    %v460 = vunpack.c.h.b16 %v367
    %v461 = vunpack.c.l.b16 %v368
    %v462 = vunpack.c.l.b16 %v369
    %v463 = vunpack.c.h.b16 %v369
    %v464 = vunpack.c.l.b16 %v370
    %v465 = vunpack.c.l.b16 %v371
    %v466 = vunpack.c.h.b16 %v371
    %v467 = vunpack.c.l.b16 %v372
    %v468 = vunpack.c.l.b16 %v373
    %v469 = vunpack.c.h.b16 %v373
    %v470 = vunpack.c.l.b16 %v374
    %v471 = vunpack.c.l.b16 %v375
    %v472 = vunpack.c.h.b16 %v375
    %v473 = vunpack.c.l.b16 %v376
    %v474 = vpack.c.b16 %v429, %v426
    %v475 = vpack.c.b16 %v430, %v427
    %v476 = vpack.c.b16 %v431, %v428
    %v477 = vpack.c.b16 %v435, %v432
    %v478 = vpack.c.b16 %v436, %v433
    %v479 = vpack.c.b16 %v437, %v434
    %v480 = vpack.c.b16 %v441, %v438
    %v481 = vpack.c.b16 %v442, %v439
    %v482 = vpack.c.b16 %v443, %v440
    %v483 = vpack.c.b16 %v447, %v444
    %v484 = vpack.c.b16 %v448, %v445
    %v485 = vpack.c.b16 %v449, %v446
    %v486 = vpack.c.b16 %v453, %v450
    %v487 = vpack.c.b16 %v454, %v451
    %v488 = vpack.c.b16 %v455, %v452
    %v489 = vpack.c.b16 %v459, %v456
    %v490 = vpack.c.b16 %v460, %v457
    %v491 = vpack.c.b16 %v461, %v458
    %v492 = vpack.c.b16 %v465, %v462
    %v493 = vpack.c.b16 %v466, %v463
    %v494 = vpack.c.b16 %v467, %v464
    %v495 = vpack.c.b16 %v471, %v468
    %v496 = vpack.c.b16 %v472, %v469
    %v497 = vpack.c.b16 %v473, %v470
    %522 = vmatprep.subr.bf16.mxu0 %v475
    %523 = vmatpush1.bf16.msra.mxu0 %v474
    %524 = vmatprep.subr.bf16.mxu0 %v478
    %525 = vmatpush1.bf16.msra.mxu0 %v477
    %526 = vmatprep.subr.bf16.mxu0 %v481
    %527 = vmatpush1.bf16.msra.mxu0 %v480
    %528 = vmatprep.subr.bf16.mxu0 %v484
    %529 = vmatpush1.bf16.msra.mxu0 %v483
    %530 = vmatprep.subr.bf16.mxu0 %v487
    %531 = vmatpush1.bf16.msra.mxu0 %v486
    %532 = vmatprep.subr.bf16.mxu0 %v490
    %533 = vmatpush1.bf16.msra.mxu0 %v489
    %534 = vmatprep.subr.bf16.mxu0 %v493
    %535 = vmatpush1.bf16.msra.mxu0 %v492
    %536 = vmatprep.subr.bf16.mxu0 %v496
    %537 = vmatpush1.bf16.msra.mxu0 %v495
    %538 = vmatprep.subr.bf16.mxu0 0
    %539 = vmatpush1.bf16.msra.mxu0 0
    %540 = vmatprep.subr.bf16.mxu0 0
    %541 = vmatpush1.bf16.msra.mxu0 0
    %542 = vmatprep.subr.bf16.mxu0 0
    %543 = vmatpush1.bf16.msra.mxu0 0
    %544 = vmatprep.subr.bf16.mxu0 0
    %545 = vmatpush1.bf16.msra.mxu0 0
    %546 = vmatprep.subr.bf16.mxu0 0
    %547 = vmatpush1.bf16.msra.mxu0 0
    %548 = vmatprep.subr.bf16.mxu0 0
    %549 = vmatpush1.bf16.msra.mxu0 0
    %550 = vmatprep.subr.bf16.mxu0 0
    %551 = vmatpush1.bf16.msra.mxu0 0
    %552 = vmatprep.subr.bf16.mxu0 0
    %553 = vmatpush1.bf16.msra.mxu0 0
    %554 = vmatprep.mubr.bf16.mxu0 0
    %555 = vmatmul.mubr.bf16.gmra.mrb[0].mxu0 %v341
    %v556 = vpop.f32.mrb[0].mxu0
    %v557 = vadd.f32 %v382, %v556
    %v558 = vpop.f32.mrb[0].mxu0
    %v559 = vadd.f32 %v386, %v558
    %v560 = vpop.f32.mrb[0].mxu0
    %v561 = vadd.f32 %v382, %v560
    %v562 = vpop.f32.mrb[0].mxu0
    %v563 = vadd.f32 %v386, %v562
    %564 = vmatprep.mubr.bf16.mxu0 0
    %565 = vmatmul.mubr.bf16.gmra.mrb[0].mxu0 %v342
    %v566 = vpop.f32.mrb[0].mxu0
    %v567 = vadd.f32 %v382, %v566
    %v568 = vpop.f32.mrb[0].mxu0
    %v569 = vadd.f32 %v386, %v568
    %v570 = vpop.f32.mrb[0].mxu0
    %v571 = vadd.f32 %v382, %v570
    %v572 = vpop.f32.mrb[0].mxu0
    %v573 = vadd.f32 %v386, %v572
    %574 = vmatprep.mubr.bf16.mxu0 0
    %575 = vmatmul.mubr.bf16.gmra.mrb[0].mxu0 %v343
    %v576 = vpop.f32.mrb[0].mxu0
    %v577 = vadd.f32 %v382, %v576
    %v578 = vpop.f32.mrb[0].mxu0
    %v579 = vadd.f32 %v386, %v578
    %v580 = vpop.f32.mrb[0].mxu0
    %v581 = vadd.f32 %v382, %v580
    %v582 = vpop.f32.mrb[0].mxu0
    %v583 = vadd.f32 %v386, %v582
    %584 = vmatprep.mubr.bf16.mxu0 0
    %585 = vmatmul.mubr.bf16.gmra.mrb[0].mxu0 %v344
    %v586 = vpop.f32.mrb[0].mxu0
    %v587 = vadd.f32 %v382, %v586
    %v588 = vpop.f32.mrb[0].mxu0
    %v589 = vadd.f32 %v386, %v588
    %v590 = vpop.f32.mrb[0].mxu0
    %v591 = vadd.f32 %v382, %v590
    %v592 = vpop.f32.mrb[0].mxu0
    %v593 = vadd.f32 %v386, %v592
    %594 = vdwg.mxu0
    %595 = vmatprep.subr.bf16.mxu0 0
    %596 = vmatpush1.bf16.msra.mxu0 %v476
    %597 = vmatprep.subr.bf16.mxu0 0
    %598 = vmatpush1.bf16.msra.mxu0 %v479
    %599 = vmatprep.subr.bf16.mxu0 0
    %600 = vmatpush1.bf16.msra.mxu0 %v482
    %601 = vmatprep.subr.bf16.mxu0 0
    %602 = vmatpush1.bf16.msra.mxu0 %v485
    %603 = vmatprep.subr.bf16.mxu0 0
    %604 = vmatpush1.bf16.msra.mxu0 %v488
    %605 = vmatprep.subr.bf16.mxu0 0
    %606 = vmatpush1.bf16.msra.mxu0 %v491
    %607 = vmatprep.subr.bf16.mxu0 0
    %608 = vmatpush1.bf16.msra.mxu0 %v494
    %609 = vmatprep.subr.bf16.mxu0 0
    %610 = vmatpush1.bf16.msra.mxu0 %v497
    %611 = vmatprep.subr.bf16.mxu0 0
    %612 = vmatpush1.bf16.msra.mxu0 0
    %613 = vmatprep.subr.bf16.mxu0 0
    %614 = vmatpush1.bf16.msra.mxu0 0
    %615 = vmatprep.subr.bf16.mxu0 0
    %616 = vmatpush1.bf16.msra.mxu0 0
    %617 = vmatprep.subr.bf16.mxu0 0
    %618 = vmatpush1.bf16.msra.mxu0 0
    %619 = vmatprep.subr.bf16.mxu0 0
    %620 = vmatpush1.bf16.msra.mxu0 0
    %621 = vmatprep.subr.bf16.mxu0 0
    %622 = vmatpush1.bf16.msra.mxu0 0
    %623 = vmatprep.subr.bf16.mxu0 0
    %624 = vmatpush1.bf16.msra.mxu0 0
    %625 = vmatprep.subr.bf16.mxu0 0
    %626 = vmatpush1.bf16.msra.mxu0 0
    %627 = vmatprep.mubr.bf16.mxu0 0
    %628 = vmatmul.mubr.bf16.gmra.mrb[0].mxu0 %v341
    %v629 = vpop.f32.mrb[0].mxu0
    %v630 = vadd.f32 %v390, %v629
    %v631 = vpop.f32.mrb[0].mxu0
    %v632 = vpop.f32.mrb[0].mxu0
    %v633 = vadd.f32 %v390, %v632
    %v634 = vpop.f32.mrb[0].mxu0
    %635 = vmatprep.mubr.bf16.mxu0 0
    %636 = vmatmul.mubr.bf16.gmra.mrb[0].mxu0 %v342
    %v637 = vpop.f32.mrb[0].mxu0
    %v638 = vadd.f32 %v390, %v637
    %v639 = vpop.f32.mrb[0].mxu0
    %v640 = vpop.f32.mrb[0].mxu0
    %v641 = vadd.f32 %v390, %v640
    %v642 = vpop.f32.mrb[0].mxu0
    %643 = vmatprep.mubr.bf16.mxu0 0
    %644 = vmatmul.mubr.bf16.gmra.mrb[0].mxu0 %v343
    %v645 = vpop.f32.mrb[0].mxu0
    %v646 = vadd.f32 %v390, %v645
    %v647 = vpop.f32.mrb[0].mxu0
    %v648 = vpop.f32.mrb[0].mxu0
    %v649 = vadd.f32 %v390, %v648
    %v650 = vpop.f32.mrb[0].mxu0
    %651 = vmatprep.mubr.bf16.mxu0 0
    %652 = vmatmul.mubr.bf16.gmra.mrb[0].mxu0 %v344
    %v653 = vpop.f32.mrb[0].mxu0
    %v654 = vadd.f32 %v390, %v653
    %v655 = vpop.f32.mrb[0].mxu0
    %v656 = vpop.f32.mrb[0].mxu0
    %v657 = vadd.f32 %v390, %v656
    %v658 = vpop.f32.mrb[0].mxu0
    %659 = vdwg.mxu0
    %v660 = vld [vmem:[#allocation4] sm:$0xff]
    %v661 = vld [vmem:[#allocation4 + $0x8] sm:$0xf]
    %v662 = vld [vmem:[#allocation4 + $0xc] sm:$0xff]
    %v663 = vld [vmem:[#allocation4 + $0x14] sm:$0xf]
    %v664 = vld [vmem:[#allocation4 + $0x18] sm:$0xff]
    %v665 = vld [vmem:[#allocation4 + $0x20] sm:$0xf]
    %v666 = vld [vmem:[#allocation4 + $0x24] sm:$0xff]
    %v667 = vld [vmem:[#allocation4 + $0x2c] sm:$0xf]
    %v668 = vld [vmem:[#allocation4 + $0x30] sm:$0xff]
    %v669 = vld [vmem:[#allocation4 + $0x38] sm:$0xf]
    %v670 = vld [vmem:[#allocation4 + $0x3c] sm:$0xff]
    %v671 = vld [vmem:[#allocation4 + $0x44] sm:$0xf]
    %v672 = vld [vmem:[#allocation4 + $0x48] sm:$0xff]
    %v673 = vld [vmem:[#allocation4 + $0x50] sm:$0xf]
    %v674 = vld [vmem:[#allocation4 + $0x54] sm:$0xff]
    %v675 = vld [vmem:[#allocation4 + $0x5c] sm:$0xf]
    %v676 = vld [vmem:[#allocation4 + $0x60] sm:$0xff]
    %v677 = vld [vmem:[#allocation4 + $0x68] sm:$0xf]
    %v678 = vld [vmem:[#allocation4 + $0x6c] sm:$0xff]
    %v679 = vld [vmem:[#allocation4 + $0x74] sm:$0xf]
    %v680 = vld [vmem:[#allocation4 + $0x78] sm:$0xff]
    %v681 = vld [vmem:[#allocation4 + $0x80] sm:$0xf]
    %v682 = vld [vmem:[#allocation4 + $0x84] sm:$0xff]
    %v683 = vld [vmem:[#allocation4 + $0x8c] sm:$0xf]
    %v684 = vld [vmem:[#allocation4 + $0x90] sm:$0xff]
    %v685 = vld [vmem:[#allocation4 + $0x98] sm:$0xf]
    %v686 = vld [vmem:[#allocation4 + $0x9c] sm:$0xff]
    %v687 = vld [vmem:[#allocation4 + $0xa4] sm:$0xf]
    %v688 = vld [vmem:[#allocation4 + $0xa8] sm:$0xff]
    %v689 = vld [vmem:[#allocation4 + $0xb0] sm:$0xf]
    %v690 = vld [vmem:[#allocation4 + $0xb4] sm:$0xff]
    %v691 = vld [vmem:[#allocation4 + $0xbc] sm:$0xf]
    %v692 = vld [vmem:[%s5] sm:$0x1]
    %v725 = vunpack.c.l.b16 %v660
    %v726 = vunpack.c.h.b16 %v660
    %v727 = vunpack.c.l.b16 %v661
    %v728 = vunpack.c.l.b16 %v662
    %v729 = vunpack.c.h.b16 %v662
    %v730 = vunpack.c.l.b16 %v663
    %v731 = vunpack.c.l.b16 %v664
    %v732 = vunpack.c.h.b16 %v664
    %v733 = vunpack.c.l.b16 %v665
    %v734 = vunpack.c.l.b16 %v666
    %v735 = vunpack.c.h.b16 %v666
    %v736 = vunpack.c.l.b16 %v667
    %v737 = vunpack.c.l.b16 %v668
    %v738 = vunpack.c.h.b16 %v668
    %v739 = vunpack.c.l.b16 %v669
    %v740 = vunpack.c.l.b16 %v670
    %v741 = vunpack.c.h.b16 %v670
    %v742 = vunpack.c.l.b16 %v671
    %v743 = vunpack.c.l.b16 %v672
    %v744 = vunpack.c.h.b16 %v672
    %v745 = vunpack.c.l.b16 %v673
    %v746 = vunpack.c.l.b16 %v674
    %v747 = vunpack.c.h.b16 %v674
    %v748 = vunpack.c.l.b16 %v675
    %v749 = vunpack.c.l.b16 %v676
    %v750 = vunpack.c.h.b16 %v676
    %v751 = vunpack.c.l.b16 %v677
    %v752 = vunpack.c.l.b16 %v678
    %v753 = vunpack.c.h.b16 %v678
    %v754 = vunpack.c.l.b16 %v679
    %v755 = vunpack.c.l.b16 %v680
    %v756 = vunpack.c.h.b16 %v680
    %v757 = vunpack.c.l.b16 %v681
    %v758 = vunpack.c.l.b16 %v682
    %v759 = vunpack.c.h.b16 %v682
    %v760 = vunpack.c.l.b16 %v683
    %v761 = vunpack.c.l.b16 %v684
    %v762 = vunpack.c.h.b16 %v684
    %v763 = vunpack.c.l.b16 %v685
    %v764 = vunpack.c.l.b16 %v686
    %v765 = vunpack.c.h.b16 %v686
    %v766 = vunpack.c.l.b16 %v687
    %v767 = vunpack.c.l.b16 %v688
    %v768 = vunpack.c.h.b16 %v688
    %v769 = vunpack.c.l.b16 %v689
    %v770 = vunpack.c.l.b16 %v690
    %v771 = vunpack.c.h.b16 %v690
    %v772 = vunpack.c.l.b16 %v691
    %v773 = vpack.c.b16 %v728, %v725
    %v774 = vpack.c.b16 %v729, %v726
    %v775 = vpack.c.b16 %v730, %v727
    %v776 = vpack.c.b16 %v734, %v731
    %v777 = vpack.c.b16 %v735, %v732
    %v778 = vpack.c.b16 %v736, %v733
    %v779 = vpack.c.b16 %v740, %v737
    %v780 = vpack.c.b16 %v741, %v738
    %v781 = vpack.c.b16 %v742, %v739
    %v782 = vpack.c.b16 %v746, %v743
    %v783 = vpack.c.b16 %v747, %v744
    %v784 = vpack.c.b16 %v748, %v745
    %v785 = vpack.c.b16 %v752, %v749
    %v786 = vpack.c.b16 %v753, %v750
    %v787 = vpack.c.b16 %v754, %v751
    %v788 = vpack.c.b16 %v758, %v755
    %v789 = vpack.c.b16 %v759, %v756
    %v790 = vpack.c.b16 %v760, %v757
    %v791 = vpack.c.b16 %v764, %v761
    %v792 = vpack.c.b16 %v765, %v762
    %v793 = vpack.c.b16 %v766, %v763
    %v794 = vpack.c.b16 %v770, %v767
    %v795 = vpack.c.b16 %v771, %v768
    %v796 = vpack.c.b16 %v772, %v769
    %821 = vmatprep.subr.bf16.mxu0 %v774
    %822 = vmatpush1.bf16.msra.mxu0 %v773
    %823 = vmatprep.subr.bf16.mxu0 %v777
    %824 = vmatpush1.bf16.msra.mxu0 %v776
    %825 = vmatprep.subr.bf16.mxu0 %v780
    %826 = vmatpush1.bf16.msra.mxu0 %v779
    %827 = vmatprep.subr.bf16.mxu0 %v783
    %828 = vmatpush1.bf16.msra.mxu0 %v782
    %829 = vmatprep.subr.bf16.mxu0 %v786
    %830 = vmatpush1.bf16.msra.mxu0 %v785
    %831 = vmatprep.subr.bf16.mxu0 %v789
    %832 = vmatpush1.bf16.msra.mxu0 %v788
    %833 = vmatprep.subr.bf16.mxu0 %v792
    %834 = vmatpush1.bf16.msra.mxu0 %v791
    %835 = vmatprep.subr.bf16.mxu0 %v795
    %836 = vmatpush1.bf16.msra.mxu0 %v794
    %837 = vmatprep.subr.bf16.mxu0 0
    %838 = vmatpush1.bf16.msra.mxu0 0
    %839 = vmatprep.subr.bf16.mxu0 0
    %840 = vmatpush1.bf16.msra.mxu0 0
    %841 = vmatprep.subr.bf16.mxu0 0
    %842 = vmatpush1.bf16.msra.mxu0 0
    %843 = vmatprep.subr.bf16.mxu0 0
    %844 = vmatpush1.bf16.msra.mxu0 0
    %845 = vmatprep.subr.bf16.mxu0 0
    %846 = vmatpush1.bf16.msra.mxu0 0
    %847 = vmatprep.subr.bf16.mxu0 0
    %848 = vmatpush1.bf16.msra.mxu0 0
    %849 = vmatprep.subr.bf16.mxu0 0
    %850 = vmatpush1.bf16.msra.mxu0 0
    %851 = vmatprep.subr.bf16.mxu0 0
    %852 = vmatpush1.bf16.msra.mxu0 0
    %853 = vmatprep.mubr.bf16.mxu0 0
    %854 = vmatmul.mubr.bf16.gmra.mrb[0].mxu0 0
    %v855 = vpop.f32.mrb[0].mxu0
    %v856 = vadd.f32 0.0, %v855
    %v857 = vpop.f32.mrb[0].mxu0
    %v858 = vadd.f32 0.0, %v857
    %v859 = vpop.f32.mrb[0].mxu0
    %v860 = vpop.f32.mrb[0].mxu0
    %861 = vdwg.mxu0
    %862 = vmatprep.subr.bf16.mxu0 0
    %863 = vmatpush1.bf16.msra.mxu0 %v775
    %864 = vmatprep.subr.bf16.mxu0 0
    %865 = vmatpush1.bf16.msra.mxu0 %v778
    %866 = vmatprep.subr.bf16.mxu0 0
    %867 = vmatpush1.bf16.msra.mxu0 %v781
    %868 = vmatprep.subr.bf16.mxu0 0
    %869 = vmatpush1.bf16.msra.mxu0 %v784
    %870 = vmatprep.subr.bf16.mxu0 0
    %871 = vmatpush1.bf16.msra.mxu0 %v787
    %872 = vmatprep.subr.bf16.mxu0 0
    %873 = vmatpush1.bf16.msra.mxu0 %v790
    %874 = vmatprep.subr.bf16.mxu0 0
    %875 = vmatpush1.bf16.msra.mxu0 %v793
    %876 = vmatprep.subr.bf16.mxu0 0
    %877 = vmatpush1.bf16.msra.mxu0 %v796
    %878 = vmatprep.subr.bf16.mxu0 0
    %879 = vmatpush1.bf16.msra.mxu0 0
    %880 = vmatprep.subr.bf16.mxu0 0
    %881 = vmatpush1.bf16.msra.mxu0 0
    %882 = vmatprep.subr.bf16.mxu0 0
    %883 = vmatpush1.bf16.msra.mxu0 0
    %884 = vmatprep.subr.bf16.mxu0 0
    %885 = vmatpush1.bf16.msra.mxu0 0
    %886 = vmatprep.subr.bf16.mxu0 0
    %887 = vmatpush1.bf16.msra.mxu0 0
    %888 = vmatprep.subr.bf16.mxu0 0
    %889 = vmatpush1.bf16.msra.mxu0 0
    %890 = vmatprep.subr.bf16.mxu0 0
    %891 = vmatpush1.bf16.msra.mxu0 0
    %892 = vmatprep.subr.bf16.mxu0 0
    %893 = vmatpush1.bf16.msra.mxu0 0
    %894 = vmatprep.mubr.bf16.mxu0 0
    %895 = vmatmul.mubr.bf16.gmra.mrb[0].mxu0 0
    %v896 = vpop.f32.mrb[0].mxu0
    %v897 = vadd.f32 0.0, %v896
    %v898 = vpop.f32.mrb[0].mxu0
    %v899 = vpop.f32.mrb[0].mxu0
    %v900 = vpop.f32.mrb[0].mxu0
    %901 = vdwg.mxu0
    %v902 = vadd.f32 %v557, %v856
    %v903 = vxor.u32 %v902, 2147483648
    %v904 = vmul.f32 %v903, 1.442695
    %v905 = vpow.pop %v904
    %v906 = vadd.f32 %v905, 1.0
    %v907 = vrcp.pop %v906
    %v908 = vmul.f32 1.0, %v907
    %v909 = vadd.f32 %v559, %v858
    %v910 = vxor.u32 %v909, 2147483648
    %v911 = vmul.f32 %v910, 1.442695
    %v912 = vpow.pop %v911
    %v913 = vadd.f32 %v912, 1.0
    %v914 = vrcp.pop %v913
    %v915 = vmul.f32 1.0, %v914
    %v917 = vlaneseq
    %v918 = vshrl.u32 %v917, 7
    %v919 = vsub.s32 0, %v918
    %v920 = vrot.slane %v692, %v919
    %v922 = vadd.f32 %v897, %v920
    %v923 = vmul.f32 %v908, %v922
    %v924 = vadd.f32 %v630, %v923
    %v925 = vtanh.pop %v924
    %v926 = vsub.f32 1.0, %v915
    %v927 = vmul.f32 %v926, %v925
    %v928 = vmul.f32 %v915, 0.0
    %v929 = vadd.f32 %v927, %v928
    %v930 = vpack.c.bf16 %v929, %v929
    %931 = vmatprep.subr.bf16.mxu0 %v774
    %932 = vmatpush1.bf16.msra.mxu0 %v773
    %933 = vmatprep.subr.bf16.mxu0 %v777
    %934 = vmatpush1.bf16.msra.mxu0 %v776
    %935 = vmatprep.subr.bf16.mxu0 %v780
    %936 = vmatpush1.bf16.msra.mxu0 %v779
    %937 = vmatprep.subr.bf16.mxu0 %v783
    %938 = vmatpush1.bf16.msra.mxu0 %v782
    %939 = vmatprep.subr.bf16.mxu0 %v786
    %940 = vmatpush1.bf16.msra.mxu0 %v785
    %941 = vmatprep.subr.bf16.mxu0 %v789
    %942 = vmatpush1.bf16.msra.mxu0 %v788
    %943 = vmatprep.subr.bf16.mxu0 %v792
    %944 = vmatpush1.bf16.msra.mxu0 %v791
    %945 = vmatprep.subr.bf16.mxu0 %v795
    %946 = vmatpush1.bf16.msra.mxu0 %v794
    %947 = vmatprep.subr.bf16.mxu0 0
    %948 = vmatpush1.bf16.msra.mxu0 0
    %949 = vmatprep.subr.bf16.mxu0 0
    %950 = vmatpush1.bf16.msra.mxu0 0
    %951 = vmatprep.subr.bf16.mxu0 0
    %952 = vmatpush1.bf16.msra.mxu0 0
    %953 = vmatprep.subr.bf16.mxu0 0
    %954 = vmatpush1.bf16.msra.mxu0 0
    %955 = vmatprep.subr.bf16.mxu0 0
    %956 = vmatpush1.bf16.msra.mxu0 0
    %957 = vmatprep.subr.bf16.mxu0 0
    %958 = vmatpush1.bf16.msra.mxu0 0
    %959 = vmatprep.subr.bf16.mxu0 0
    %960 = vmatpush1.bf16.msra.mxu0 0
    %961 = vmatprep.subr.bf16.mxu0 0
    %962 = vmatpush1.bf16.msra.mxu0 0
    %963 = vmatprep.mubr.bf16.mxu0 0
    %964 = vmatmul.mubr.bf16.gmra.mrb[0].mxu0 %v930
    %v965 = vpop.f32.mrb[0].mxu0
    %v966 = vadd.f32 0.0, %v965
    %v967 = vpop.f32.mrb[0].mxu0
    %v968 = vadd.f32 0.0, %v967
    %v969 = vpop.f32.mrb[0].mxu0
    %v970 = vpop.f32.mrb[0].mxu0
    %971 = vdwg.mxu0
    %972 = vmatprep.subr.bf16.mxu0 0
    %973 = vmatpush1.bf16.msra.mxu0 %v775
    %974 = vmatprep.subr.bf16.mxu0 0
    %975 = vmatpush1.bf16.msra.mxu0 %v778
    %976 = vmatprep.subr.bf16.mxu0 0
    %977 = vmatpush1.bf16.msra.mxu0 %v781
    %978 = vmatprep.subr.bf16.mxu0 0
    %979 = vmatpush1.bf16.msra.mxu0 %v784
    %980 = vmatprep.subr.bf16.mxu0 0
    %981 = vmatpush1.bf16.msra.mxu0 %v787
    %982 = vmatprep.subr.bf16.mxu0 0
    %983 = vmatpush1.bf16.msra.mxu0 %v790
    %984 = vmatprep.subr.bf16.mxu0 0
    %985 = vmatpush1.bf16.msra.mxu0 %v793
    %986 = vmatprep.subr.bf16.mxu0 0
    %987 = vmatpush1.bf16.msra.mxu0 %v796
    %988 = vmatprep.subr.bf16.mxu0 0
    %989 = vmatpush1.bf16.msra.mxu0 0
    %990 = vmatprep.subr.bf16.mxu0 0
    %991 = vmatpush1.bf16.msra.mxu0 0
    %992 = vmatprep.subr.bf16.mxu0 0
    %993 = vmatpush1.bf16.msra.mxu0 0
    %994 = vmatprep.subr.bf16.mxu0 0
    %995 = vmatpush1.bf16.msra.mxu0 0
    %996 = vmatprep.subr.bf16.mxu0 0
    %997 = vmatpush1.bf16.msra.mxu0 0
    %998 = vmatprep.subr.bf16.mxu0 0
    %999 = vmatpush1.bf16.msra.mxu0 0
    %1000 = vmatprep.subr.bf16.mxu0 0
    %1001 = vmatpush1.bf16.msra.mxu0 0
    %1002 = vmatprep.subr.bf16.mxu0 0
    %1003 = vmatpush1.bf16.msra.mxu0 0
    %1004 = vmatprep.mubr.bf16.mxu0 0
    %1005 = vmatmul.mubr.bf16.gmra.mrb[0].mxu0 %v930
    %v1006 = vpop.f32.mrb[0].mxu0
    %v1007 = vadd.f32 0.0, %v1006
    %v1008 = vpop.f32.mrb[0].mxu0
    %v1009 = vpop.f32.mrb[0].mxu0
    %v1010 = vpop.f32.mrb[0].mxu0
    %1011 = vdwg.mxu0
    %v1012 = vadd.f32 %v561, %v966
    %v1013 = vxor.u32 %v1012, 2147483648
    %v1014 = vmul.f32 %v1013, 1.442695
    %v1015 = vpow.pop %v1014
    %v1016 = vadd.f32 %v1015, 1.0
    %v1017 = vrcp.pop %v1016
    %v1018 = vmul.f32 1.0, %v1017
    %v1019 = vadd.f32 %v563, %v968
    %v1020 = vxor.u32 %v1019, 2147483648
    %v1021 = vmul.f32 %v1020, 1.442695
    %v1022 = vpow.pop %v1021
    %v1023 = vadd.f32 %v1022, 1.0
    %v1024 = vrcp.pop %v1023
    %v1025 = vmul.f32 1.0, %v1024
    %v1026 = vadd.f32 %v1007, %v920
    %v1027 = vmul.f32 %v1018, %v1026
    %v1028 = vadd.f32 %v633, %v1027
    %v1029 = vtanh.pop %v1028
    %v1030 = vsub.f32 1.0, %v1025
    %v1031 = vmul.f32 %v1030, %v1029
    %v1032 = vmul.f32 %v1025, %v929
    %v1033 = vadd.f32 %v1031, %v1032
    %v1034 = vpack.c.bf16 %v1033, %v1033
    %1035 = vmatprep.subr.bf16.mxu0 %v774
    %1036 = vmatpush1.bf16.msra.mxu0 %v773
    %1037 = vmatprep.subr.bf16.mxu0 %v777
    %1038 = vmatpush1.bf16.msra.mxu0 %v776
    %1039 = vmatprep.subr.bf16.mxu0 %v780
    %1040 = vmatpush1.bf16.msra.mxu0 %v779
    %1041 = vmatprep.subr.bf16.mxu0 %v783
    %1042 = vmatpush1.bf16.msra.mxu0 %v782
    %1043 = vmatprep.subr.bf16.mxu0 %v786
    %1044 = vmatpush1.bf16.msra.mxu0 %v785
    %1045 = vmatprep.subr.bf16.mxu0 %v789
    %1046 = vmatpush1.bf16.msra.mxu0 %v788
    %1047 = vmatprep.subr.bf16.mxu0 %v792
    %1048 = vmatpush1.bf16.msra.mxu0 %v791
    %1049 = vmatprep.subr.bf16.mxu0 %v795
    %1050 = vmatpush1.bf16.msra.mxu0 %v794
    %1051 = vmatprep.subr.bf16.mxu0 0
    %1052 = vmatpush1.bf16.msra.mxu0 0
    %1053 = vmatprep.subr.bf16.mxu0 0
    %1054 = vmatpush1.bf16.msra.mxu0 0
    %1055 = vmatprep.subr.bf16.mxu0 0
    %1056 = vmatpush1.bf16.msra.mxu0 0
    %1057 = vmatprep.subr.bf16.mxu0 0
    %1058 = vmatpush1.bf16.msra.mxu0 0
    %1059 = vmatprep.subr.bf16.mxu0 0
    %1060 = vmatpush1.bf16.msra.mxu0 0
    %1061 = vmatprep.subr.bf16.mxu0 0
    %1062 = vmatpush1.bf16.msra.mxu0 0
    %1063 = vmatprep.subr.bf16.mxu0 0
    %1064 = vmatpush1.bf16.msra.mxu0 0
    %1065 = vmatprep.subr.bf16.mxu0 0
    %1066 = vmatpush1.bf16.msra.mxu0 0
    %1067 = vmatprep.mubr.bf16.mxu0 0
    %1068 = vmatmul.mubr.bf16.gmra.mrb[0].mxu0 %v1034
    %v1069 = vpop.f32.mrb[0].mxu0
    %v1070 = vadd.f32 0.0, %v1069
    %v1071 = vpop.f32.mrb[0].mxu0
    %v1072 = vadd.f32 0.0, %v1071
    %v1073 = vpop.f32.mrb[0].mxu0
    %v1074 = vpop.f32.mrb[0].mxu0
    %1075 = vdwg.mxu0
    %1076 = vmatprep.subr.bf16.mxu0 0
    %1077 = vmatpush1.bf16.msra.mxu0 %v775
    %1078 = vmatprep.subr.bf16.mxu0 0
    %1079 = vmatpush1.bf16.msra.mxu0 %v778
    %1080 = vmatprep.subr.bf16.mxu0 0
    %1081 = vmatpush1.bf16.msra.mxu0 %v781
    %1082 = vmatprep.subr.bf16.mxu0 0
    %1083 = vmatpush1.bf16.msra.mxu0 %v784
    %1084 = vmatprep.subr.bf16.mxu0 0
    %1085 = vmatpush1.bf16.msra.mxu0 %v787
    %1086 = vmatprep.subr.bf16.mxu0 0
    %1087 = vmatpush1.bf16.msra.mxu0 %v790
    %1088 = vmatprep.subr.bf16.mxu0 0
    %1089 = vmatpush1.bf16.msra.mxu0 %v793
    %1090 = vmatprep.subr.bf16.mxu0 0
    %1091 = vmatpush1.bf16.msra.mxu0 %v796
    %1092 = vmatprep.subr.bf16.mxu0 0
    %1093 = vmatpush1.bf16.msra.mxu0 0
    %1094 = vmatprep.subr.bf16.mxu0 0
    %1095 = vmatpush1.bf16.msra.mxu0 0
    %1096 = vmatprep.subr.bf16.mxu0 0
    %1097 = vmatpush1.bf16.msra.mxu0 0
    %1098 = vmatprep.subr.bf16.mxu0 0
    %1099 = vmatpush1.bf16.msra.mxu0 0
    %1100 = vmatprep.subr.bf16.mxu0 0
    %1101 = vmatpush1.bf16.msra.mxu0 0
    %1102 = vmatprep.subr.bf16.mxu0 0
    %1103 = vmatpush1.bf16.msra.mxu0 0
    %1104 = vmatprep.subr.bf16.mxu0 0
    %1105 = vmatpush1.bf16.msra.mxu0 0
    %1106 = vmatprep.subr.bf16.mxu0 0
    %1107 = vmatpush1.bf16.msra.mxu0 0
    %1108 = vmatprep.mubr.bf16.mxu0 0
    %1109 = vmatmul.mubr.bf16.gmra.mrb[0].mxu0 %v1034
    %v1110 = vpop.f32.mrb[0].mxu0
    %v1111 = vadd.f32 0.0, %v1110
    %v1112 = vpop.f32.mrb[0].mxu0
    %v1113 = vpop.f32.mrb[0].mxu0
    %v1114 = vpop.f32.mrb[0].mxu0
    %1115 = vdwg.mxu0
    %v1116 = vadd.f32 %v567, %v1070
    %v1117 = vxor.u32 %v1116, 2147483648
    %v1118 = vmul.f32 %v1117, 1.442695
    %v1119 = vpow.pop %v1118
    %v1120 = vadd.f32 %v1119, 1.0
    %v1121 = vrcp.pop %v1120
    %v1122 = vmul.f32 1.0, %v1121
    %v1123 = vadd.f32 %v569, %v1072
    %v1124 = vxor.u32 %v1123, 2147483648
    %v1125 = vmul.f32 %v1124, 1.442695
    %v1126 = vpow.pop %v1125
    %v1127 = vadd.f32 %v1126, 1.0
    %v1128 = vrcp.pop %v1127
    %v1129 = vmul.f32 1.0, %v1128
    %v1130 = vadd.f32 %v1111, %v920
    %v1131 = vmul.f32 %v1122, %v1130
    %v1132 = vadd.f32 %v638, %v1131
    %v1133 = vtanh.pop %v1132
    %v1134 = vsub.f32 1.0, %v1129
    %v1135 = vmul.f32 %v1134, %v1133
    %v1136 = vmul.f32 %v1129, %v1033
    %v1137 = vadd.f32 %v1135, %v1136
    %v1138 = vpack.c.bf16 %v1137, %v1137
    %1139 = vmatprep.subr.bf16.mxu0 %v774
    %1140 = vmatpush1.bf16.msra.mxu0 %v773
    %1141 = vmatprep.subr.bf16.mxu0 %v777
    %1142 = vmatpush1.bf16.msra.mxu0 %v776
    %1143 = vmatprep.subr.bf16.mxu0 %v780
    %1144 = vmatpush1.bf16.msra.mxu0 %v779
    %1145 = vmatprep.subr.bf16.mxu0 %v783
    %1146 = vmatpush1.bf16.msra.mxu0 %v782
    %1147 = vmatprep.subr.bf16.mxu0 %v786
    %1148 = vmatpush1.bf16.msra.mxu0 %v785
    %1149 = vmatprep.subr.bf16.mxu0 %v789
    %1150 = vmatpush1.bf16.msra.mxu0 %v788
    %1151 = vmatprep.subr.bf16.mxu0 %v792
    %1152 = vmatpush1.bf16.msra.mxu0 %v791
    %1153 = vmatprep.subr.bf16.mxu0 %v795
    %1154 = vmatpush1.bf16.msra.mxu0 %v794
    %1155 = vmatprep.subr.bf16.mxu0 0
    %1156 = vmatpush1.bf16.msra.mxu0 0
    %1157 = vmatprep.subr.bf16.mxu0 0
    %1158 = vmatpush1.bf16.msra.mxu0 0
    %1159 = vmatprep.subr.bf16.mxu0 0
    %1160 = vmatpush1.bf16.msra.mxu0 0
    %1161 = vmatprep.subr.bf16.mxu0 0
    %1162 = vmatpush1.bf16.msra.mxu0 0
    %1163 = vmatprep.subr.bf16.mxu0 0
    %1164 = vmatpush1.bf16.msra.mxu0 0
    %1165 = vmatprep.subr.bf16.mxu0 0
    %1166 = vmatpush1.bf16.msra.mxu0 0
    %1167 = vmatprep.subr.bf16.mxu0 0
    %1168 = vmatpush1.bf16.msra.mxu0 0
    %1169 = vmatprep.subr.bf16.mxu0 0
    %1170 = vmatpush1.bf16.msra.mxu0 0
    %1171 = vmatprep.mubr.bf16.mxu0 0
    %1172 = vmatmul.mubr.bf16.gmra.mrb[0].mxu0 %v1138
    %v1173 = vpop.f32.mrb[0].mxu0
    %v1174 = vadd.f32 0.0, %v1173
    %v1175 = vpop.f32.mrb[0].mxu0
    %v1176 = vadd.f32 0.0, %v1175
    %v1177 = vpop.f32.mrb[0].mxu0
    %v1178 = vpop.f32.mrb[0].mxu0
    %1179 = vdwg.mxu0
    %1180 = vmatprep.subr.bf16.mxu0 0
    %1181 = vmatpush1.bf16.msra.mxu0 %v775
    %1182 = vmatprep.subr.bf16.mxu0 0
    %1183 = vmatpush1.bf16.msra.mxu0 %v778
    %1184 = vmatprep.subr.bf16.mxu0 0
    %1185 = vmatpush1.bf16.msra.mxu0 %v781
    %1186 = vmatprep.subr.bf16.mxu0 0
    %1187 = vmatpush1.bf16.msra.mxu0 %v784
    %1188 = vmatprep.subr.bf16.mxu0 0
    %1189 = vmatpush1.bf16.msra.mxu0 %v787
    %1190 = vmatprep.subr.bf16.mxu0 0
    %1191 = vmatpush1.bf16.msra.mxu0 %v790
    %1192 = vmatprep.subr.bf16.mxu0 0
    %1193 = vmatpush1.bf16.msra.mxu0 %v793
    %1194 = vmatprep.subr.bf16.mxu0 0
    %1195 = vmatpush1.bf16.msra.mxu0 %v796
    %1196 = vmatprep.subr.bf16.mxu0 0
    %1197 = vmatpush1.bf16.msra.mxu0 0
    %1198 = vmatprep.subr.bf16.mxu0 0
    %1199 = vmatpush1.bf16.msra.mxu0 0
    %1200 = vmatprep.subr.bf16.mxu0 0
    %1201 = vmatpush1.bf16.msra.mxu0 0
    %1202 = vmatprep.subr.bf16.mxu0 0
    %1203 = vmatpush1.bf16.msra.mxu0 0
    %1204 = vmatprep.subr.bf16.mxu0 0
    %1205 = vmatpush1.bf16.msra.mxu0 0
    %1206 = vmatprep.subr.bf16.mxu0 0
    %1207 = vmatpush1.bf16.msra.mxu0 0
    %1208 = vmatprep.subr.bf16.mxu0 0
    %1209 = vmatpush1.bf16.msra.mxu0 0
    %1210 = vmatprep.subr.bf16.mxu0 0
    %1211 = vmatpush1.bf16.msra.mxu0 0
    %1212 = vmatprep.mubr.bf16.mxu0 0
    %1213 = vmatmul.mubr.bf16.gmra.mrb[0].mxu0 %v1138
    %v1214 = vpop.f32.mrb[0].mxu0
    %v1215 = vadd.f32 0.0, %v1214
    %v1216 = vpop.f32.mrb[0].mxu0
    %v1217 = vpop.f32.mrb[0].mxu0
    %v1218 = vpop.f32.mrb[0].mxu0
    %1219 = vdwg.mxu0
    %v1220 = vadd.f32 %v571, %v1174
    %v1221 = vxor.u32 %v1220, 2147483648
    %v1222 = vmul.f32 %v1221, 1.442695
    %v1223 = vpow.pop %v1222
    %v1224 = vadd.f32 %v1223, 1.0
    %v1225 = vrcp.pop %v1224
    %v1226 = vmul.f32 1.0, %v1225
    %v1227 = vadd.f32 %v573, %v1176
    %v1228 = vxor.u32 %v1227, 2147483648
    %v1229 = vmul.f32 %v1228, 1.442695
    %v1230 = vpow.pop %v1229
    %v1231 = vadd.f32 %v1230, 1.0
    %v1232 = vrcp.pop %v1231
    %v1233 = vmul.f32 1.0, %v1232
    %v1234 = vadd.f32 %v1215, %v920
    %v1235 = vmul.f32 %v1226, %v1234
    %v1236 = vadd.f32 %v641, %v1235
    %v1237 = vtanh.pop %v1236
    %v1238 = vsub.f32 1.0, %v1233
    %v1239 = vmul.f32 %v1238, %v1237
    %v1240 = vmul.f32 %v1233, %v1137
    %v1241 = vadd.f32 %v1239, %v1240
    %v1242 = vpack.c.bf16 %v1241, %v1241
    %1243 = vmatprep.subr.bf16.mxu0 %v774
    %1244 = vmatpush1.bf16.msra.mxu0 %v773
    %1245 = vmatprep.subr.bf16.mxu0 %v777
    %1246 = vmatpush1.bf16.msra.mxu0 %v776
    %1247 = vmatprep.subr.bf16.mxu0 %v780
    %1248 = vmatpush1.bf16.msra.mxu0 %v779
    %1249 = vmatprep.subr.bf16.mxu0 %v783
    %1250 = vmatpush1.bf16.msra.mxu0 %v782
    %1251 = vmatprep.subr.bf16.mxu0 %v786
    %1252 = vmatpush1.bf16.msra.mxu0 %v785
    %1253 = vmatprep.subr.bf16.mxu0 %v789
    %1254 = vmatpush1.bf16.msra.mxu0 %v788
    %1255 = vmatprep.subr.bf16.mxu0 %v792
    %1256 = vmatpush1.bf16.msra.mxu0 %v791
    %1257 = vmatprep.subr.bf16.mxu0 %v795
    %1258 = vmatpush1.bf16.msra.mxu0 %v794
    %1259 = vmatprep.subr.bf16.mxu0 0
    %1260 = vmatpush1.bf16.msra.mxu0 0
    %1261 = vmatprep.subr.bf16.mxu0 0
    %1262 = vmatpush1.bf16.msra.mxu0 0
    %1263 = vmatprep.subr.bf16.mxu0 0
    %1264 = vmatpush1.bf16.msra.mxu0 0
    %1265 = vmatprep.subr.bf16.mxu0 0
    %1266 = vmatpush1.bf16.msra.mxu0 0
    %1267 = vmatprep.subr.bf16.mxu0 0
    %1268 = vmatpush1.bf16.msra.mxu0 0
    %1269 = vmatprep.subr.bf16.mxu0 0
    %1270 = vmatpush1.bf16.msra.mxu0 0
    %1271 = vmatprep.subr.bf16.mxu0 0
    %1272 = vmatpush1.bf16.msra.mxu0 0
    %1273 = vmatprep.subr.bf16.mxu0 0
    %1274 = vmatpush1.bf16.msra.mxu0 0
    %1275 = vmatprep.mubr.bf16.mxu0 0
    %1276 = vmatmul.mubr.bf16.gmra.mrb[0].mxu0 %v1242
    %v1277 = vpop.f32.mrb[0].mxu0
    %v1278 = vadd.f32 0.0, %v1277
    %v1279 = vpop.f32.mrb[0].mxu0
    %v1280 = vadd.f32 0.0, %v1279
    %v1281 = vpop.f32.mrb[0].mxu0
    %v1282 = vpop.f32.mrb[0].mxu0
    %1283 = vdwg.mxu0
    %1284 = vmatprep.subr.bf16.mxu0 0
    %1285 = vmatpush1.bf16.msra.mxu0 %v775
    %1286 = vmatprep.subr.bf16.mxu0 0
    %1287 = vmatpush1.bf16.msra.mxu0 %v778
    %1288 = vmatprep.subr.bf16.mxu0 0
    %1289 = vmatpush1.bf16.msra.mxu0 %v781
    %1290 = vmatprep.subr.bf16.mxu0 0
    %1291 = vmatpush1.bf16.msra.mxu0 %v784
    %1292 = vmatprep.subr.bf16.mxu0 0
    %1293 = vmatpush1.bf16.msra.mxu0 %v787
    %1294 = vmatprep.subr.bf16.mxu0 0
    %1295 = vmatpush1.bf16.msra.mxu0 %v790
    %1296 = vmatprep.subr.bf16.mxu0 0
    %1297 = vmatpush1.bf16.msra.mxu0 %v793
    %1298 = vmatprep.subr.bf16.mxu0 0
    %1299 = vmatpush1.bf16.msra.mxu0 %v796
    %1300 = vmatprep.subr.bf16.mxu0 0
    %1301 = vmatpush1.bf16.msra.mxu0 0
    %1302 = vmatprep.subr.bf16.mxu0 0
    %1303 = vmatpush1.bf16.msra.mxu0 0
    %1304 = vmatprep.subr.bf16.mxu0 0
    %1305 = vmatpush1.bf16.msra.mxu0 0
    %1306 = vmatprep.subr.bf16.mxu0 0
    %1307 = vmatpush1.bf16.msra.mxu0 0
    %1308 = vmatprep.subr.bf16.mxu0 0
    %1309 = vmatpush1.bf16.msra.mxu0 0
    %1310 = vmatprep.subr.bf16.mxu0 0
    %1311 = vmatpush1.bf16.msra.mxu0 0
    %1312 = vmatprep.subr.bf16.mxu0 0
    %1313 = vmatpush1.bf16.msra.mxu0 0
    %1314 = vmatprep.subr.bf16.mxu0 0
    %1315 = vmatpush1.bf16.msra.mxu0 0
    %1316 = vmatprep.mubr.bf16.mxu0 0
    %1317 = vmatmul.mubr.bf16.gmra.mrb[0].mxu0 %v1242
    %v1318 = vpop.f32.mrb[0].mxu0
    %v1319 = vadd.f32 0.0, %v1318
    %v1320 = vpop.f32.mrb[0].mxu0
    %v1321 = vpop.f32.mrb[0].mxu0
    %v1322 = vpop.f32.mrb[0].mxu0
    %1323 = vdwg.mxu0
    %v1324 = vadd.f32 %v577, %v1278
    %v1325 = vxor.u32 %v1324, 2147483648
    %v1326 = vmul.f32 %v1325, 1.442695
    %v1327 = vpow.pop %v1326
    %v1328 = vadd.f32 %v1327, 1.0
    %v1329 = vrcp.pop %v1328
    %v1330 = vmul.f32 1.0, %v1329
    %v1331 = vadd.f32 %v579, %v1280
    %v1332 = vxor.u32 %v1331, 2147483648
    %v1333 = vmul.f32 %v1332, 1.442695
    %v1334 = vpow.pop %v1333
    %v1335 = vadd.f32 %v1334, 1.0
    %v1336 = vrcp.pop %v1335
    %v1337 = vmul.f32 1.0, %v1336
    %v1338 = vadd.f32 %v1319, %v920
    %v1339 = vmul.f32 %v1330, %v1338
    %v1340 = vadd.f32 %v646, %v1339
    %v1341 = vtanh.pop %v1340
    %v1342 = vsub.f32 1.0, %v1337
    %v1343 = vmul.f32 %v1342, %v1341
    %v1344 = vmul.f32 %v1337, %v1241
    %v1345 = vadd.f32 %v1343, %v1344
    %v1346 = vpack.c.bf16 %v1345, %v1345
    %1347 = vmatprep.subr.bf16.mxu0 %v774
    %1348 = vmatpush1.bf16.msra.mxu0 %v773
    %1349 = vmatprep.subr.bf16.mxu0 %v777
    %1350 = vmatpush1.bf16.msra.mxu0 %v776
    %1351 = vmatprep.subr.bf16.mxu0 %v780
    %1352 = vmatpush1.bf16.msra.mxu0 %v779
    %1353 = vmatprep.subr.bf16.mxu0 %v783
    %1354 = vmatpush1.bf16.msra.mxu0 %v782
    %1355 = vmatprep.subr.bf16.mxu0 %v786
    %1356 = vmatpush1.bf16.msra.mxu0 %v785
    %1357 = vmatprep.subr.bf16.mxu0 %v789
    %1358 = vmatpush1.bf16.msra.mxu0 %v788
    %1359 = vmatprep.subr.bf16.mxu0 %v792
    %1360 = vmatpush1.bf16.msra.mxu0 %v791
    %1361 = vmatprep.subr.bf16.mxu0 %v795
    %1362 = vmatpush1.bf16.msra.mxu0 %v794
    %1363 = vmatprep.subr.bf16.mxu0 0
    %1364 = vmatpush1.bf16.msra.mxu0 0
    %1365 = vmatprep.subr.bf16.mxu0 0
    %1366 = vmatpush1.bf16.msra.mxu0 0
    %1367 = vmatprep.subr.bf16.mxu0 0
    %1368 = vmatpush1.bf16.msra.mxu0 0
    %1369 = vmatprep.subr.bf16.mxu0 0
    %1370 = vmatpush1.bf16.msra.mxu0 0
    %1371 = vmatprep.subr.bf16.mxu0 0
    %1372 = vmatpush1.bf16.msra.mxu0 0
    %1373 = vmatprep.subr.bf16.mxu0 0
    %1374 = vmatpush1.bf16.msra.mxu0 0
    %1375 = vmatprep.subr.bf16.mxu0 0
    %1376 = vmatpush1.bf16.msra.mxu0 0
    %1377 = vmatprep.subr.bf16.mxu0 0
    %1378 = vmatpush1.bf16.msra.mxu0 0
    %1379 = vmatprep.mubr.bf16.mxu0 0
    %1380 = vmatmul.mubr.bf16.gmra.mrb[0].mxu0 %v1346
    %v1381 = vpop.f32.mrb[0].mxu0
    %v1382 = vadd.f32 0.0, %v1381
    %v1383 = vpop.f32.mrb[0].mxu0
    %v1384 = vadd.f32 0.0, %v1383
    %v1385 = vpop.f32.mrb[0].mxu0
    %v1386 = vpop.f32.mrb[0].mxu0
    %1387 = vdwg.mxu0
    %1388 = vmatprep.subr.bf16.mxu0 0
    %1389 = vmatpush1.bf16.msra.mxu0 %v775
    %1390 = vmatprep.subr.bf16.mxu0 0
    %1391 = vmatpush1.bf16.msra.mxu0 %v778
    %1392 = vmatprep.subr.bf16.mxu0 0
    %1393 = vmatpush1.bf16.msra.mxu0 %v781
    %1394 = vmatprep.subr.bf16.mxu0 0
    %1395 = vmatpush1.bf16.msra.mxu0 %v784
    %1396 = vmatprep.subr.bf16.mxu0 0
    %1397 = vmatpush1.bf16.msra.mxu0 %v787
    %1398 = vmatprep.subr.bf16.mxu0 0
    %1399 = vmatpush1.bf16.msra.mxu0 %v790
    %1400 = vmatprep.subr.bf16.mxu0 0
    %1401 = vmatpush1.bf16.msra.mxu0 %v793
    %1402 = vmatprep.subr.bf16.mxu0 0
    %1403 = vmatpush1.bf16.msra.mxu0 %v796
    %1404 = vmatprep.subr.bf16.mxu0 0
    %1405 = vmatpush1.bf16.msra.mxu0 0
    %1406 = vmatprep.subr.bf16.mxu0 0
    %1407 = vmatpush1.bf16.msra.mxu0 0
    %1408 = vmatprep.subr.bf16.mxu0 0
    %1409 = vmatpush1.bf16.msra.mxu0 0
    %1410 = vmatprep.subr.bf16.mxu0 0
    %1411 = vmatpush1.bf16.msra.mxu0 0
    %1412 = vmatprep.subr.bf16.mxu0 0
    %1413 = vmatpush1.bf16.msra.mxu0 0
    %1414 = vmatprep.subr.bf16.mxu0 0
    %1415 = vmatpush1.bf16.msra.mxu0 0
    %1416 = vmatprep.subr.bf16.mxu0 0
    %1417 = vmatpush1.bf16.msra.mxu0 0
    %1418 = vmatprep.subr.bf16.mxu0 0
    %1419 = vmatpush1.bf16.msra.mxu0 0
    %1420 = vmatprep.mubr.bf16.mxu0 0
    %1421 = vmatmul.mubr.bf16.gmra.mrb[0].mxu0 %v1346
    %v1422 = vpop.f32.mrb[0].mxu0
    %v1423 = vadd.f32 0.0, %v1422
    %v1424 = vpop.f32.mrb[0].mxu0
    %v1425 = vpop.f32.mrb[0].mxu0
    %v1426 = vpop.f32.mrb[0].mxu0
    %1427 = vdwg.mxu0
    %v1428 = vadd.f32 %v581, %v1382
    %v1429 = vxor.u32 %v1428, 2147483648
    %v1430 = vmul.f32 %v1429, 1.442695
    %v1431 = vpow.pop %v1430
    %v1432 = vadd.f32 %v1431, 1.0
    %v1433 = vrcp.pop %v1432
    %v1434 = vmul.f32 1.0, %v1433
    %v1435 = vadd.f32 %v583, %v1384
    %v1436 = vxor.u32 %v1435, 2147483648
    %v1437 = vmul.f32 %v1436, 1.442695
    %v1438 = vpow.pop %v1437
    %v1439 = vadd.f32 %v1438, 1.0
    %v1440 = vrcp.pop %v1439
    %v1441 = vmul.f32 1.0, %v1440
    %v1442 = vadd.f32 %v1423, %v920
    %v1443 = vmul.f32 %v1434, %v1442
    %v1444 = vadd.f32 %v649, %v1443
    %v1445 = vtanh.pop %v1444
    %v1446 = vsub.f32 1.0, %v1441
    %v1447 = vmul.f32 %v1446, %v1445
    %v1448 = vmul.f32 %v1441, %v1345
    %v1449 = vadd.f32 %v1447, %v1448
    %v1450 = vpack.c.bf16 %v1449, %v1449
    %1451 = vmatprep.subr.bf16.mxu0 %v774
    %1452 = vmatpush1.bf16.msra.mxu0 %v773
    %1453 = vmatprep.subr.bf16.mxu0 %v777
    %1454 = vmatpush1.bf16.msra.mxu0 %v776
    %1455 = vmatprep.subr.bf16.mxu0 %v780
    %1456 = vmatpush1.bf16.msra.mxu0 %v779
    %1457 = vmatprep.subr.bf16.mxu0 %v783
    %1458 = vmatpush1.bf16.msra.mxu0 %v782
    %1459 = vmatprep.subr.bf16.mxu0 %v786
    %1460 = vmatpush1.bf16.msra.mxu0 %v785
    %1461 = vmatprep.subr.bf16.mxu0 %v789
    %1462 = vmatpush1.bf16.msra.mxu0 %v788
    %1463 = vmatprep.subr.bf16.mxu0 %v792
    %1464 = vmatpush1.bf16.msra.mxu0 %v791
    %1465 = vmatprep.subr.bf16.mxu0 %v795
    %1466 = vmatpush1.bf16.msra.mxu0 %v794
    %1467 = vmatprep.subr.bf16.mxu0 0
    %1468 = vmatpush1.bf16.msra.mxu0 0
    %1469 = vmatprep.subr.bf16.mxu0 0
    %1470 = vmatpush1.bf16.msra.mxu0 0
    %1471 = vmatprep.subr.bf16.mxu0 0
    %1472 = vmatpush1.bf16.msra.mxu0 0
    %1473 = vmatprep.subr.bf16.mxu0 0
    %1474 = vmatpush1.bf16.msra.mxu0 0
    %1475 = vmatprep.subr.bf16.mxu0 0
    %1476 = vmatpush1.bf16.msra.mxu0 0
    %1477 = vmatprep.subr.bf16.mxu0 0
    %1478 = vmatpush1.bf16.msra.mxu0 0
    %1479 = vmatprep.subr.bf16.mxu0 0
    %1480 = vmatpush1.bf16.msra.mxu0 0
    %1481 = vmatprep.subr.bf16.mxu0 0
    %1482 = vmatpush1.bf16.msra.mxu0 0
    %1483 = vmatprep.mubr.bf16.mxu0 0
    %1484 = vmatmul.mubr.bf16.gmra.mrb[0].mxu0 %v1450
    %v1485 = vpop.f32.mrb[0].mxu0
    %v1486 = vadd.f32 0.0, %v1485
    %v1487 = vpop.f32.mrb[0].mxu0
    %v1488 = vadd.f32 0.0, %v1487
    %v1489 = vpop.f32.mrb[0].mxu0
    %v1490 = vpop.f32.mrb[0].mxu0
    %1491 = vdwg.mxu0
    %1492 = vmatprep.subr.bf16.mxu0 0
    %1493 = vmatpush1.bf16.msra.mxu0 %v775
    %1494 = vmatprep.subr.bf16.mxu0 0
    %1495 = vmatpush1.bf16.msra.mxu0 %v778
    %1496 = vmatprep.subr.bf16.mxu0 0
    %1497 = vmatpush1.bf16.msra.mxu0 %v781
    %1498 = vmatprep.subr.bf16.mxu0 0
    %1499 = vmatpush1.bf16.msra.mxu0 %v784
    %1500 = vmatprep.subr.bf16.mxu0 0
    %1501 = vmatpush1.bf16.msra.mxu0 %v787
    %1502 = vmatprep.subr.bf16.mxu0 0
    %1503 = vmatpush1.bf16.msra.mxu0 %v790
    %1504 = vmatprep.subr.bf16.mxu0 0
    %1505 = vmatpush1.bf16.msra.mxu0 %v793
    %1506 = vmatprep.subr.bf16.mxu0 0
    %1507 = vmatpush1.bf16.msra.mxu0 %v796
    %1508 = vmatprep.subr.bf16.mxu0 0
    %1509 = vmatpush1.bf16.msra.mxu0 0
    %1510 = vmatprep.subr.bf16.mxu0 0
    %1511 = vmatpush1.bf16.msra.mxu0 0
    %1512 = vmatprep.subr.bf16.mxu0 0
    %1513 = vmatpush1.bf16.msra.mxu0 0
    %1514 = vmatprep.subr.bf16.mxu0 0
    %1515 = vmatpush1.bf16.msra.mxu0 0
    %1516 = vmatprep.subr.bf16.mxu0 0
    %1517 = vmatpush1.bf16.msra.mxu0 0
    %1518 = vmatprep.subr.bf16.mxu0 0
    %1519 = vmatpush1.bf16.msra.mxu0 0
    %1520 = vmatprep.subr.bf16.mxu0 0
    %1521 = vmatpush1.bf16.msra.mxu0 0
    %1522 = vmatprep.subr.bf16.mxu0 0
    %1523 = vmatpush1.bf16.msra.mxu0 0
    %1524 = vmatprep.mubr.bf16.mxu0 0
    %1525 = vmatmul.mubr.bf16.gmra.mrb[0].mxu0 %v1450
    %v1526 = vpop.f32.mrb[0].mxu0
    %v1527 = vadd.f32 0.0, %v1526
    %v1528 = vpop.f32.mrb[0].mxu0
    %v1529 = vpop.f32.mrb[0].mxu0
    %v1530 = vpop.f32.mrb[0].mxu0
    %1531 = vdwg.mxu0
    %v1532 = vadd.f32 %v587, %v1486
    %v1533 = vxor.u32 %v1532, 2147483648
    %v1534 = vmul.f32 %v1533, 1.442695
    %v1535 = vpow.pop %v1534
    %v1536 = vadd.f32 %v1535, 1.0
    %v1537 = vrcp.pop %v1536
    %v1538 = vmul.f32 1.0, %v1537
    %v1539 = vadd.f32 %v589, %v1488
    %v1540 = vxor.u32 %v1539, 2147483648
    %v1541 = vmul.f32 %v1540, 1.442695
    %v1542 = vpow.pop %v1541
    %v1543 = vadd.f32 %v1542, 1.0
    %v1544 = vrcp.pop %v1543
    %v1545 = vmul.f32 1.0, %v1544
    %v1546 = vadd.f32 %v1527, %v920
    %v1547 = vmul.f32 %v1538, %v1546
    %v1548 = vadd.f32 %v654, %v1547
    %v1549 = vtanh.pop %v1548
    %v1550 = vsub.f32 1.0, %v1545
    %v1551 = vmul.f32 %v1550, %v1549
    %v1552 = vmul.f32 %v1545, %v1449
    %v1553 = vadd.f32 %v1551, %v1552
    %v1554 = vpack.c.bf16 %v1553, %v1553
    %1555 = vmatprep.subr.bf16.mxu0 %v774
    %1556 = vmatpush1.bf16.msra.mxu0 %v773
    %1557 = vmatprep.subr.bf16.mxu0 %v777
    %1558 = vmatpush1.bf16.msra.mxu0 %v776
    %1559 = vmatprep.subr.bf16.mxu0 %v780
    %1560 = vmatpush1.bf16.msra.mxu0 %v779
    %1561 = vmatprep.subr.bf16.mxu0 %v783
    %1562 = vmatpush1.bf16.msra.mxu0 %v782
    %1563 = vmatprep.subr.bf16.mxu0 %v786
    %1564 = vmatpush1.bf16.msra.mxu0 %v785
    %1565 = vmatprep.subr.bf16.mxu0 %v789
    %1566 = vmatpush1.bf16.msra.mxu0 %v788
    %1567 = vmatprep.subr.bf16.mxu0 %v792
    %1568 = vmatpush1.bf16.msra.mxu0 %v791
    %1569 = vmatprep.subr.bf16.mxu0 %v795
    %1570 = vmatpush1.bf16.msra.mxu0 %v794
    %1571 = vmatprep.subr.bf16.mxu0 0
    %1572 = vmatpush1.bf16.msra.mxu0 0
    %1573 = vmatprep.subr.bf16.mxu0 0
    %1574 = vmatpush1.bf16.msra.mxu0 0
    %1575 = vmatprep.subr.bf16.mxu0 0
    %1576 = vmatpush1.bf16.msra.mxu0 0
    %1577 = vmatprep.subr.bf16.mxu0 0
    %1578 = vmatpush1.bf16.msra.mxu0 0
    %1579 = vmatprep.subr.bf16.mxu0 0
    %1580 = vmatpush1.bf16.msra.mxu0 0
    %1581 = vmatprep.subr.bf16.mxu0 0
    %1582 = vmatpush1.bf16.msra.mxu0 0
    %1583 = vmatprep.subr.bf16.mxu0 0
    %1584 = vmatpush1.bf16.msra.mxu0 0
    %1585 = vmatprep.subr.bf16.mxu0 0
    %1586 = vmatpush1.bf16.msra.mxu0 0
    %1587 = vmatprep.mubr.bf16.mxu0 0
    %1588 = vmatmul.mubr.bf16.gmra.mrb[0].mxu0 %v1554
    %v1589 = vpop.f32.mrb[0].mxu0
    %v1590 = vadd.f32 0.0, %v1589
    %v1591 = vpop.f32.mrb[0].mxu0
    %v1592 = vadd.f32 0.0, %v1591
    %v1593 = vpop.f32.mrb[0].mxu0
    %v1594 = vpop.f32.mrb[0].mxu0
    %1595 = vdwg.mxu0
    %1596 = vmatprep.subr.bf16.mxu0 0
    %1597 = vmatpush1.bf16.msra.mxu0 %v775
    %1598 = vmatprep.subr.bf16.mxu0 0
    %1599 = vmatpush1.bf16.msra.mxu0 %v778
    %1600 = vmatprep.subr.bf16.mxu0 0
    %1601 = vmatpush1.bf16.msra.mxu0 %v781
    %1602 = vmatprep.subr.bf16.mxu0 0
    %1603 = vmatpush1.bf16.msra.mxu0 %v784
    %1604 = vmatprep.subr.bf16.mxu0 0
    %1605 = vmatpush1.bf16.msra.mxu0 %v787
    %1606 = vmatprep.subr.bf16.mxu0 0
    %1607 = vmatpush1.bf16.msra.mxu0 %v790
    %1608 = vmatprep.subr.bf16.mxu0 0
    %1609 = vmatpush1.bf16.msra.mxu0 %v793
    %1610 = vmatprep.subr.bf16.mxu0 0
    %1611 = vmatpush1.bf16.msra.mxu0 %v796
    %1612 = vmatprep.subr.bf16.mxu0 0
    %1613 = vmatpush1.bf16.msra.mxu0 0
    %1614 = vmatprep.subr.bf16.mxu0 0
    %1615 = vmatpush1.bf16.msra.mxu0 0
    %1616 = vmatprep.subr.bf16.mxu0 0
    %1617 = vmatpush1.bf16.msra.mxu0 0
    %1618 = vmatprep.subr.bf16.mxu0 0
    %1619 = vmatpush1.bf16.msra.mxu0 0
    %1620 = vmatprep.subr.bf16.mxu0 0
    %1621 = vmatpush1.bf16.msra.mxu0 0
    %1622 = vmatprep.subr.bf16.mxu0 0
    %1623 = vmatpush1.bf16.msra.mxu0 0
    %1624 = vmatprep.subr.bf16.mxu0 0
    %1625 = vmatpush1.bf16.msra.mxu0 0
    %1626 = vmatprep.subr.bf16.mxu0 0
    %1627 = vmatpush1.bf16.msra.mxu0 0
    %1628 = vmatprep.mubr.bf16.mxu0 0
    %1629 = vmatmul.mubr.bf16.gmra.mrb[0].mxu0 %v1554
    %v1630 = vpop.f32.mrb[0].mxu0
    %v1631 = vadd.f32 0.0, %v1630
    %v1632 = vpop.f32.mrb[0].mxu0
    %v1633 = vpop.f32.mrb[0].mxu0
    %v1634 = vpop.f32.mrb[0].mxu0
    %1635 = vdwg.mxu0
    %v1636 = vadd.f32 %v591, %v1590
    %v1637 = vxor.u32 %v1636, 2147483648
    %v1638 = vmul.f32 %v1637, 1.442695
    %v1639 = vpow.pop %v1638
    %v1640 = vadd.f32 %v1639, 1.0
    %v1641 = vrcp.pop %v1640
    %v1642 = vmul.f32 1.0, %v1641
    %v1643 = vadd.f32 %v593, %v1592
    %v1644 = vxor.u32 %v1643, 2147483648
    %v1645 = vmul.f32 %v1644, 1.442695
    %v1646 = vpow.pop %v1645
    %v1647 = vadd.f32 %v1646, 1.0
    %v1648 = vrcp.pop %v1647
    %v1649 = vmul.f32 1.0, %v1648
    %v1650 = vadd.f32 %v1631, %v920
    %v1651 = vmul.f32 %v1642, %v1650
    %v1652 = vadd.f32 %v657, %v1651
    %v1653 = vtanh.pop %v1652
    %v1654 = vsub.f32 1.0, %v1649
    %v1655 = vmul.f32 %v1654, %v1653
    %v1656 = vmul.f32 %v1649, %v1553
    %v1657 = vadd.f32 %v1655, %v1656
    %v1658 = vld [vmem:[#allocation6] sm:$0xf]
    %v1659 = vld [vmem:[#allocation6 + $0x4] sm:$0xf]
    %v1660 = vld [vmem:[#allocation6 + $0x8] sm:$0xf]
    %v1661 = vld [vmem:[#allocation6 + $0xc] sm:$0xf]
    %v1662 = vld [vmem:[#allocation6 + $0x10] sm:$0xf]
    %v1663 = vld [vmem:[#allocation6 + $0x14] sm:$0xf]
    %v1664 = vld [vmem:[#allocation6 + $0x18] sm:$0xf]
    %v1665 = vld [vmem:[#allocation6 + $0x1c] sm:$0xf]
    %v1666 = vld [vmem:[#allocation6 + $0x20] sm:$0xf]
    %v1667 = vld [vmem:[#allocation6 + $0x24] sm:$0xf]
    %v1668 = vld [vmem:[#allocation6 + $0x28] sm:$0xf]
    %v1669 = vld [vmem:[#allocation6 + $0x2c] sm:$0xf]
    %v1670 = vld [vmem:[#allocation6 + $0x30] sm:$0xf]
    %v1671 = vld [vmem:[#allocation6 + $0x34] sm:$0xf]
    %v1672 = vld [vmem:[#allocation6 + $0x38] sm:$0xf]
    %v1673 = vld [vmem:[#allocation6 + $0x3c] sm:$0xf]
    %v1674 = vld [vmem:[#allocation7] sm:$0xff]
    %v1675 = vld [vmem:[#allocation7 + $0x8] sm:$0xf]
    %v1676 = vld [vmem:[#allocation7 + $0xc] sm:$0xff]
    %v1677 = vld [vmem:[#allocation7 + $0x14] sm:$0xf]
    %v1678 = vld [vmem:[#allocation7 + $0x18] sm:$0xff]
    %v1679 = vld [vmem:[#allocation7 + $0x20] sm:$0xf]
    %v1680 = vld [vmem:[#allocation7 + $0x24] sm:$0xff]
    %v1681 = vld [vmem:[#allocation7 + $0x2c] sm:$0xf]
    %v1682 = vld [vmem:[#allocation7 + $0x30] sm:$0xff]
    %v1683 = vld [vmem:[#allocation7 + $0x38] sm:$0xf]
    %v1684 = vld [vmem:[#allocation7 + $0x3c] sm:$0xff]
    %v1685 = vld [vmem:[#allocation7 + $0x44] sm:$0xf]
    %v1686 = vld [vmem:[#allocation7 + $0x48] sm:$0xff]
    %v1687 = vld [vmem:[#allocation7 + $0x50] sm:$0xf]
    %v1688 = vld [vmem:[#allocation7 + $0x54] sm:$0xff]
    %v1689 = vld [vmem:[#allocation7 + $0x5c] sm:$0xf]
    %v1690 = vld [vmem:[#allocation7 + $0x60] sm:$0xff]
    %v1691 = vld [vmem:[#allocation7 + $0x68] sm:$0xf]
    %v1692 = vld [vmem:[#allocation7 + $0x6c] sm:$0xff]
    %v1693 = vld [vmem:[#allocation7 + $0x74] sm:$0xf]
    %v1694 = vld [vmem:[#allocation7 + $0x78] sm:$0xff]
    %v1695 = vld [vmem:[#allocation7 + $0x80] sm:$0xf]
    %v1696 = vld [vmem:[#allocation7 + $0x84] sm:$0xff]
    %v1697 = vld [vmem:[#allocation7 + $0x8c] sm:$0xf]
    %v1698 = vld [vmem:[#allocation7 + $0x90] sm:$0xff]
    %v1699 = vld [vmem:[#allocation7 + $0x98] sm:$0xf]
    %v1700 = vld [vmem:[#allocation7 + $0x9c] sm:$0xff]
    %v1701 = vld [vmem:[#allocation7 + $0xa4] sm:$0xf]
    %v1702 = vld [vmem:[#allocation7 + $0xa8] sm:$0xff]
    %v1703 = vld [vmem:[#allocation7 + $0xb0] sm:$0xf]
    %v1704 = vld [vmem:[#allocation7 + $0xb4] sm:$0xff]
    %v1705 = vld [vmem:[#allocation7 + $0xbc] sm:$0xf]
    %v1706 = vld [vmem:[#allocation9] sm:$0xff]
    %v1707 = vld [vmem:[#allocation9 + $0x8] sm:$0xf]
    %v1708 = vld [vmem:[#allocation9 + $0xc] sm:$0xff]
    %v1709 = vld [vmem:[#allocation9 + $0x14] sm:$0xf]
    %v1710 = vld [vmem:[#allocation9 + $0x18] sm:$0xff]
    %v1711 = vld [vmem:[#allocation9 + $0x20] sm:$0xf]
    %v1712 = vld [vmem:[#allocation9 + $0x24] sm:$0xff]
    %v1713 = vld [vmem:[#allocation9 + $0x2c] sm:$0xf]
    %v1714 = vld [vmem:[#allocation9 + $0x30] sm:$0xff]
    %v1715 = vld [vmem:[#allocation9 + $0x38] sm:$0xf]
    %v1716 = vld [vmem:[#allocation9 + $0x3c] sm:$0xff]
    %v1717 = vld [vmem:[#allocation9 + $0x44] sm:$0xf]
    %v1718 = vld [vmem:[#allocation9 + $0x48] sm:$0xff]
    %v1719 = vld [vmem:[#allocation9 + $0x50] sm:$0xf]
    %v1720 = vld [vmem:[#allocation9 + $0x54] sm:$0xff]
    %v1721 = vld [vmem:[#allocation9 + $0x5c] sm:$0xf]
    %v1722 = vld [vmem:[#allocation9 + $0x60] sm:$0xff]
    %v1723 = vld [vmem:[#allocation9 + $0x68] sm:$0xf]
    %v1724 = vld [vmem:[#allocation9 + $0x6c] sm:$0xff]
    %v1725 = vld [vmem:[#allocation9 + $0x74] sm:$0xf]
    %v1726 = vld [vmem:[#allocation9 + $0x78] sm:$0xff]
    %v1727 = vld [vmem:[#allocation9 + $0x80] sm:$0xf]
    %v1728 = vld [vmem:[#allocation9 + $0x84] sm:$0xff]
    %v1729 = vld [vmem:[#allocation9 + $0x8c] sm:$0xf]
    %v1730 = vld [vmem:[#allocation9 + $0x90] sm:$0xff]
    %v1731 = vld [vmem:[#allocation9 + $0x98] sm:$0xf]
    %v1732 = vld [vmem:[#allocation9 + $0x9c] sm:$0xff]
    %v1733 = vld [vmem:[#allocation9 + $0xa4] sm:$0xf]
    %v1734 = vld [vmem:[#allocation9 + $0xa8] sm:$0xff]
    %v1735 = vld [vmem:[#allocation9 + $0xb0] sm:$0xf]
    %v1736 = vld [vmem:[#allocation9 + $0xb4] sm:$0xff]
    %v1737 = vld [vmem:[#allocation9 + $0xbc] sm:$0xf]
    %v1738 = vld [vmem:[#allocation10] sm:$0x7]
    %v1739 = vld [vmem:[#allocation12] sm:$0x1]
    %v1740 = vld [vmem:[%s11] sm:$0xf]
    %v1741 = vld [vmem:[%s11 + $0x4] sm:$0xf]
    %v1742 = vld [vmem:[%s11 + $0x8] sm:$0xf]
    %v1743 = vld [vmem:[%s11 + $0xc] sm:$0xf]
    %v1744 = vld [vmem:[%s11 + $0x10] sm:$0xf]
    %v1745 = vld [vmem:[%s11 + $0x14] sm:$0xf]
    %v1746 = vld [vmem:[%s11 + $0x18] sm:$0xf]
    %v1747 = vld [vmem:[%s11 + $0x1c] sm:$0xf]
    %v1748 = vld [vmem:[%s11 + $0x20] sm:$0xf]
    %v1749 = vld [vmem:[%s11 + $0x24] sm:$0xf]
    %v1750 = vld [vmem:[%s11 + $0x28] sm:$0xf]
    %v1751 = vld [vmem:[%s11 + $0x2c] sm:$0xf]
    %v1752 = vld [vmem:[%s11 + $0x30] sm:$0xf]
    %v1753 = vld [vmem:[%s11 + $0x34] sm:$0xf]
    %v1754 = vld [vmem:[%s11 + $0x38] sm:$0xf]
    %v1755 = vld [vmem:[%s11 + $0x3c] sm:$0xf]
    %v1756 = vld [vmem:[#allocation13] sm:$0x1]
    %v1758 = vpack.i.b16 %v1658, %v1658
    %v1760 = vlaneseq
    %v1761 = vshrl.u32 %v1760, 7
    %v1762 = vsub.s32 0, %v1761
    %v1763 = vrot.slane %v1758, %v1762
    %v1765 = vlaneseq
    %v1766 = vshrl.u32 %v1765, 7
    %v1767 = vsub.s32 0, %v1766
    %v1768 = vrot.slane %v1738, %v1767
    %v1769 = vlaneseq
    %v1770 = vshrl.u32 %v1769, 7
    %v1771 = vsub.s32 1, %v1770
    %v1772 = vrot.slane %v1738, %v1771
    %v1773 = vlaneseq
    %v1774 = vshrl.u32 %v1773, 7
    %v1775 = vsub.s32 2, %v1774
    %v1776 = vrot.slane %v1738, %v1775
    %v1812 = vunpack.c.l.b16 %v1674
    %v1813 = vunpack.c.h.b16 %v1674
    %v1814 = vunpack.c.l.b16 %v1675
    %v1815 = vunpack.c.l.b16 %v1676
    %v1816 = vunpack.c.h.b16 %v1676
    %v1817 = vunpack.c.l.b16 %v1677
    %v1818 = vunpack.c.l.b16 %v1678
    %v1819 = vunpack.c.h.b16 %v1678
    %v1820 = vunpack.c.l.b16 %v1679
    %v1821 = vunpack.c.l.b16 %v1680
    %v1822 = vunpack.c.h.b16 %v1680
    %v1823 = vunpack.c.l.b16 %v1681
    %v1824 = vunpack.c.l.b16 %v1682
    %v1825 = vunpack.c.h.b16 %v1682
    %v1826 = vunpack.c.l.b16 %v1683
    %v1827 = vunpack.c.l.b16 %v1684
    %v1828 = vunpack.c.h.b16 %v1684
    %v1829 = vunpack.c.l.b16 %v1685
    %v1830 = vunpack.c.l.b16 %v1686
    %v1831 = vunpack.c.h.b16 %v1686
    %v1832 = vunpack.c.l.b16 %v1687
    %v1833 = vunpack.c.l.b16 %v1688
    %v1834 = vunpack.c.h.b16 %v1688
    %v1835 = vunpack.c.l.b16 %v1689
    %v1836 = vunpack.c.l.b16 %v1690
    %v1837 = vunpack.c.h.b16 %v1690
    %v1838 = vunpack.c.l.b16 %v1691
    %v1839 = vunpack.c.l.b16 %v1692
    %v1840 = vunpack.c.h.b16 %v1692
    %v1841 = vunpack.c.l.b16 %v1693
    %v1842 = vunpack.c.l.b16 %v1694
    %v1843 = vunpack.c.h.b16 %v1694
    %v1844 = vunpack.c.l.b16 %v1695
    %v1845 = vunpack.c.l.b16 %v1696
    %v1846 = vunpack.c.h.b16 %v1696
    %v1847 = vunpack.c.l.b16 %v1697
    %v1848 = vunpack.c.l.b16 %v1698
    %v1849 = vunpack.c.h.b16 %v1698
    %v1850 = vunpack.c.l.b16 %v1699
    %v1851 = vunpack.c.l.b16 %v1700
    %v1852 = vunpack.c.h.b16 %v1700
    %v1853 = vunpack.c.l.b16 %v1701
    %v1854 = vunpack.c.l.b16 %v1702
    %v1855 = vunpack.c.h.b16 %v1702
    %v1856 = vunpack.c.l.b16 %v1703
    %v1857 = vunpack.c.l.b16 %v1704
    %v1858 = vunpack.c.h.b16 %v1704
    %v1859 = vunpack.c.l.b16 %v1705
    %v1860 = vpack.c.b16 %v1815, %v1812
    %v1861 = vpack.c.b16 %v1816, %v1813
    %v1862 = vpack.c.b16 %v1817, %v1814
    %v1863 = vpack.c.b16 %v1821, %v1818
    %v1864 = vpack.c.b16 %v1822, %v1819
    %v1865 = vpack.c.b16 %v1823, %v1820
    %v1866 = vpack.c.b16 %v1827, %v1824
    %v1867 = vpack.c.b16 %v1828, %v1825
    %v1868 = vpack.c.b16 %v1829, %v1826
    %v1869 = vpack.c.b16 %v1833, %v1830
    %v1870 = vpack.c.b16 %v1834, %v1831
    %v1871 = vpack.c.b16 %v1835, %v1832
    %v1872 = vpack.c.b16 %v1839, %v1836
    %v1873 = vpack.c.b16 %v1840, %v1837
    %v1874 = vpack.c.b16 %v1841, %v1838
    %v1875 = vpack.c.b16 %v1845, %v1842
    %v1876 = vpack.c.b16 %v1846, %v1843
    %v1877 = vpack.c.b16 %v1847, %v1844
    %v1878 = vpack.c.b16 %v1851, %v1848
    %v1879 = vpack.c.b16 %v1852, %v1849
    %v1880 = vpack.c.b16 %v1853, %v1850
    %v1881 = vpack.c.b16 %v1857, %v1854
    %v1882 = vpack.c.b16 %v1858, %v1855
    %v1883 = vpack.c.b16 %v1859, %v1856
    %1908 = vmatprep.subr.bf16.mxu0 %v1861
    %1909 = vmatpush1.bf16.msra.mxu0 %v1860
    %1910 = vmatprep.subr.bf16.mxu0 %v1864
    %1911 = vmatpush1.bf16.msra.mxu0 %v1863
    %1912 = vmatprep.subr.bf16.mxu0 %v1867
    %1913 = vmatpush1.bf16.msra.mxu0 %v1866
    %1914 = vmatprep.subr.bf16.mxu0 %v1870
    %1915 = vmatpush1.bf16.msra.mxu0 %v1869
    %1916 = vmatprep.subr.bf16.mxu0 %v1873
    %1917 = vmatpush1.bf16.msra.mxu0 %v1872
    %1918 = vmatprep.subr.bf16.mxu0 %v1876
    %1919 = vmatpush1.bf16.msra.mxu0 %v1875
    %1920 = vmatprep.subr.bf16.mxu0 %v1879
    %1921 = vmatpush1.bf16.msra.mxu0 %v1878
    %1922 = vmatprep.subr.bf16.mxu0 %v1882
    %1923 = vmatpush1.bf16.msra.mxu0 %v1881
    %1924 = vmatprep.subr.bf16.mxu0 0
    %1925 = vmatpush1.bf16.msra.mxu0 0
    %1926 = vmatprep.subr.bf16.mxu0 0
    %1927 = vmatpush1.bf16.msra.mxu0 0
    %1928 = vmatprep.subr.bf16.mxu0 0
    %1929 = vmatpush1.bf16.msra.mxu0 0
    %1930 = vmatprep.subr.bf16.mxu0 0
    %1931 = vmatpush1.bf16.msra.mxu0 0
    %1932 = vmatprep.subr.bf16.mxu0 0
    %1933 = vmatpush1.bf16.msra.mxu0 0
    %1934 = vmatprep.subr.bf16.mxu0 0
    %1935 = vmatpush1.bf16.msra.mxu0 0
    %1936 = vmatprep.subr.bf16.mxu0 0
    %1937 = vmatpush1.bf16.msra.mxu0 0
    %1938 = vmatprep.subr.bf16.mxu0 0
    %1939 = vmatpush1.bf16.msra.mxu0 0
    %1940 = vmatprep.mubr.bf16.mxu0 0
    %1941 = vmatmul.mubr.bf16.gmra.mrb[0].mxu0 %v1763
    %v1942 = vpop.f32.mrb[0].mxu0
    %v1943 = vadd.f32 %v1768, %v1942
    %v1944 = vpop.f32.mrb[0].mxu0
    %v1945 = vadd.f32 %v1772, %v1944
    %v1946 = vpop.f32.mrb[0].mxu0
    %v1947 = vpop.f32.mrb[0].mxu0
    %1948 = vdwg.mxu0
    %1949 = vmatprep.subr.bf16.mxu0 0
    %1950 = vmatpush1.bf16.msra.mxu0 %v1862
    %1951 = vmatprep.subr.bf16.mxu0 0
    %1952 = vmatpush1.bf16.msra.mxu0 %v1865
    %1953 = vmatprep.subr.bf16.mxu0 0
    %1954 = vmatpush1.bf16.msra.mxu0 %v1868
    %1955 = vmatprep.subr.bf16.mxu0 0
    %1956 = vmatpush1.bf16.msra.mxu0 %v1871
    %1957 = vmatprep.subr.bf16.mxu0 0
    %1958 = vmatpush1.bf16.msra.mxu0 %v1874
    %1959 = vmatprep.subr.bf16.mxu0 0
    %1960 = vmatpush1.bf16.msra.mxu0 %v1877
    %1961 = vmatprep.subr.bf16.mxu0 0
    %1962 = vmatpush1.bf16.msra.mxu0 %v1880
    %1963 = vmatprep.subr.bf16.mxu0 0
    %1964 = vmatpush1.bf16.msra.mxu0 %v1883
    %1965 = vmatprep.subr.bf16.mxu0 0
    %1966 = vmatpush1.bf16.msra.mxu0 0
    %1967 = vmatprep.subr.bf16.mxu0 0
    %1968 = vmatpush1.bf16.msra.mxu0 0
    %1969 = vmatprep.subr.bf16.mxu0 0
    %1970 = vmatpush1.bf16.msra.mxu0 0
    %1971 = vmatprep.subr.bf16.mxu0 0
    %1972 = vmatpush1.bf16.msra.mxu0 0
    %1973 = vmatprep.subr.bf16.mxu0 0
    %1974 = vmatpush1.bf16.msra.mxu0 0
    %1975 = vmatprep.subr.bf16.mxu0 0
    %1976 = vmatpush1.bf16.msra.mxu0 0
    %1977 = vmatprep.subr.bf16.mxu0 0
    %1978 = vmatpush1.bf16.msra.mxu0 0
    %1979 = vmatprep.subr.bf16.mxu0 0
    %1980 = vmatpush1.bf16.msra.mxu0 0
    %1981 = vmatprep.mubr.bf16.mxu0 0
    %1982 = vmatmul.mubr.bf16.gmra.mrb[0].mxu0 %v1763
    %v1983 = vpop.f32.mrb[0].mxu0
    %v1984 = vadd.f32 %v1776, %v1983
    %v1985 = vpop.f32.mrb[0].mxu0
    %v1986 = vpop.f32.mrb[0].mxu0
    %v1987 = vpop.f32.mrb[0].mxu0
    %1988 = vdwg.mxu0
    %v1989 = vpack.c.bf16 %v1657, %v1657
    %v2022 = vunpack.c.l.b16 %v1706
    %v2023 = vunpack.c.h.b16 %v1706
    %v2024 = vunpack.c.l.b16 %v1707
    %v2025 = vunpack.c.l.b16 %v1708
    %v2026 = vunpack.c.h.b16 %v1708
    %v2027 = vunpack.c.l.b16 %v1709
    %v2028 = vunpack.c.l.b16 %v1710
    %v2029 = vunpack.c.h.b16 %v1710
    %v2030 = vunpack.c.l.b16 %v1711
    %v2031 = vunpack.c.l.b16 %v1712
    %v2032 = vunpack.c.h.b16 %v1712
    %v2033 = vunpack.c.l.b16 %v1713
    %v2034 = vunpack.c.l.b16 %v1714
    %v2035 = vunpack.c.h.b16 %v1714
    %v2036 = vunpack.c.l.b16 %v1715
    %v2037 = vunpack.c.l.b16 %v1716
    %v2038 = vunpack.c.h.b16 %v1716
    %v2039 = vunpack.c.l.b16 %v1717
    %v2040 = vunpack.c.l.b16 %v1718
    %v2041 = vunpack.c.h.b16 %v1718
    %v2042 = vunpack.c.l.b16 %v1719
    %v2043 = vunpack.c.l.b16 %v1720
    %v2044 = vunpack.c.h.b16 %v1720
    %v2045 = vunpack.c.l.b16 %v1721
    %v2046 = vunpack.c.l.b16 %v1722
    %v2047 = vunpack.c.h.b16 %v1722
    %v2048 = vunpack.c.l.b16 %v1723
    %v2049 = vunpack.c.l.b16 %v1724
    %v2050 = vunpack.c.h.b16 %v1724
    %v2051 = vunpack.c.l.b16 %v1725
    %v2052 = vunpack.c.l.b16 %v1726
    %v2053 = vunpack.c.h.b16 %v1726
    %v2054 = vunpack.c.l.b16 %v1727
    %v2055 = vunpack.c.l.b16 %v1728
    %v2056 = vunpack.c.h.b16 %v1728
    %v2057 = vunpack.c.l.b16 %v1729
    %v2058 = vunpack.c.l.b16 %v1730
    %v2059 = vunpack.c.h.b16 %v1730
    %v2060 = vunpack.c.l.b16 %v1731
    %v2061 = vunpack.c.l.b16 %v1732
    %v2062 = vunpack.c.h.b16 %v1732
    %v2063 = vunpack.c.l.b16 %v1733
    %v2064 = vunpack.c.l.b16 %v1734
    %v2065 = vunpack.c.h.b16 %v1734
    %v2066 = vunpack.c.l.b16 %v1735
    %v2067 = vunpack.c.l.b16 %v1736
    %v2068 = vunpack.c.h.b16 %v1736
    %v2069 = vunpack.c.l.b16 %v1737
    %v2070 = vpack.c.b16 %v2025, %v2022
    %v2071 = vpack.c.b16 %v2026, %v2023
    %v2072 = vpack.c.b16 %v2027, %v2024
    %v2073 = vpack.c.b16 %v2031, %v2028
    %v2074 = vpack.c.b16 %v2032, %v2029
    %v2075 = vpack.c.b16 %v2033, %v2030
    %v2076 = vpack.c.b16 %v2037, %v2034
    %v2077 = vpack.c.b16 %v2038, %v2035
    %v2078 = vpack.c.b16 %v2039, %v2036
    %v2079 = vpack.c.b16 %v2043, %v2040
    %v2080 = vpack.c.b16 %v2044, %v2041
    %v2081 = vpack.c.b16 %v2045, %v2042
    %v2082 = vpack.c.b16 %v2049, %v2046
    %v2083 = vpack.c.b16 %v2050, %v2047
    %v2084 = vpack.c.b16 %v2051, %v2048
    %v2085 = vpack.c.b16 %v2055, %v2052
    %v2086 = vpack.c.b16 %v2056, %v2053
    %v2087 = vpack.c.b16 %v2057, %v2054
    %v2088 = vpack.c.b16 %v2061, %v2058
    %v2089 = vpack.c.b16 %v2062, %v2059
    %v2090 = vpack.c.b16 %v2063, %v2060
    %v2091 = vpack.c.b16 %v2067, %v2064
    %v2092 = vpack.c.b16 %v2068, %v2065
    %v2093 = vpack.c.b16 %v2069, %v2066
    %2118 = vmatprep.subr.bf16.mxu0 %v2071
    %2119 = vmatpush1.bf16.msra.mxu0 %v2070
    %2120 = vmatprep.subr.bf16.mxu0 %v2074
    %2121 = vmatpush1.bf16.msra.mxu0 %v2073
    %2122 = vmatprep.subr.bf16.mxu0 %v2077
    %2123 = vmatpush1.bf16.msra.mxu0 %v2076
    %2124 = vmatprep.subr.bf16.mxu0 %v2080
    %2125 = vmatpush1.bf16.msra.mxu0 %v2079
    %2126 = vmatprep.subr.bf16.mxu0 %v2083
    %2127 = vmatpush1.bf16.msra.mxu0 %v2082
    %2128 = vmatprep.subr.bf16.mxu0 %v2086
    %2129 = vmatpush1.bf16.msra.mxu0 %v2085
    %2130 = vmatprep.subr.bf16.mxu0 %v2089
    %2131 = vmatpush1.bf16.msra.mxu0 %v2088
    %2132 = vmatprep.subr.bf16.mxu0 %v2092
    %2133 = vmatpush1.bf16.msra.mxu0 %v2091
    %2134 = vmatprep.subr.bf16.mxu0 0
    %2135 = vmatpush1.bf16.msra.mxu0 0
    %2136 = vmatprep.subr.bf16.mxu0 0
    %2137 = vmatpush1.bf16.msra.mxu0 0
    %2138 = vmatprep.subr.bf16.mxu0 0
    %2139 = vmatpush1.bf16.msra.mxu0 0
    %2140 = vmatprep.subr.bf16.mxu0 0
    %2141 = vmatpush1.bf16.msra.mxu0 0
    %2142 = vmatprep.subr.bf16.mxu0 0
    %2143 = vmatpush1.bf16.msra.mxu0 0
    %2144 = vmatprep.subr.bf16.mxu0 0
    %2145 = vmatpush1.bf16.msra.mxu0 0
    %2146 = vmatprep.subr.bf16.mxu0 0
    %2147 = vmatpush1.bf16.msra.mxu0 0
    %2148 = vmatprep.subr.bf16.mxu0 0
    %2149 = vmatpush1.bf16.msra.mxu0 0
    %2150 = vmatprep.mubr.bf16.mxu0 0
    %2151 = vmatmul.mubr.bf16.gmra.mrb[0].mxu0 %v1989
    %v2152 = vpop.f32.mrb[0].mxu0
    %v2153 = vadd.f32 0.0, %v2152
    %v2154 = vpop.f32.mrb[0].mxu0
    %v2155 = vadd.f32 0.0, %v2154
    %v2156 = vpop.f32.mrb[0].mxu0
    %v2157 = vpop.f32.mrb[0].mxu0
    %2158 = vdwg.mxu0
    %2159 = vmatprep.subr.bf16.mxu0 0
    %2160 = vmatpush1.bf16.msra.mxu0 %v2072
    %2161 = vmatprep.subr.bf16.mxu0 0
    %2162 = vmatpush1.bf16.msra.mxu0 %v2075
    %2163 = vmatprep.subr.bf16.mxu0 0
    %2164 = vmatpush1.bf16.msra.mxu0 %v2078
    %2165 = vmatprep.subr.bf16.mxu0 0
    %2166 = vmatpush1.bf16.msra.mxu0 %v2081
    %2167 = vmatprep.subr.bf16.mxu0 0
    %2168 = vmatpush1.bf16.msra.mxu0 %v2084
    %2169 = vmatprep.subr.bf16.mxu0 0
    %2170 = vmatpush1.bf16.msra.mxu0 %v2087
    %2171 = vmatprep.subr.bf16.mxu0 0
    %2172 = vmatpush1.bf16.msra.mxu0 %v2090
    %2173 = vmatprep.subr.bf16.mxu0 0
    %2174 = vmatpush1.bf16.msra.mxu0 %v2093
    %2175 = vmatprep.subr.bf16.mxu0 0
    %2176 = vmatpush1.bf16.msra.mxu0 0
    %2177 = vmatprep.subr.bf16.mxu0 0
    %2178 = vmatpush1.bf16.msra.mxu0 0
    %2179 = vmatprep.subr.bf16.mxu0 0
    %2180 = vmatpush1.bf16.msra.mxu0 0
    %2181 = vmatprep.subr.bf16.mxu0 0
    %2182 = vmatpush1.bf16.msra.mxu0 0
    %2183 = vmatprep.subr.bf16.mxu0 0
    %2184 = vmatpush1.bf16.msra.mxu0 0
    %2185 = vmatprep.subr.bf16.mxu0 0
    %2186 = vmatpush1.bf16.msra.mxu0 0
    %2187 = vmatprep.subr.bf16.mxu0 0
    %2188 = vmatpush1.bf16.msra.mxu0 0
    %2189 = vmatprep.subr.bf16.mxu0 0
    %2190 = vmatpush1.bf16.msra.mxu0 0
    %2191 = vmatprep.mubr.bf16.mxu0 0
    %2192 = vmatmul.mubr.bf16.gmra.mrb[0].mxu0 %v1989
    %v2193 = vpop.f32.mrb[0].mxu0
    %v2194 = vadd.f32 0.0, %v2193
    %v2195 = vpop.f32.mrb[0].mxu0
    %v2196 = vpop.f32.mrb[0].mxu0
    %v2197 = vpop.f32.mrb[0].mxu0
    %2198 = vdwg.mxu0
    %v2199 = vadd.f32 %v1943, %v2153
    %v2200 = vxor.u32 %v2199, 2147483648
    %v2201 = vmul.f32 %v2200, 1.442695
    %v2202 = vpow.pop %v2201
    %v2203 = vadd.f32 %v2202, 1.0
    %v2204 = vrcp.pop %v2203
    %v2205 = vmul.f32 1.0, %v2204
    %v2206 = vadd.f32 %v1945, %v2155
    %v2207 = vxor.u32 %v2206, 2147483648
    %v2208 = vmul.f32 %v2207, 1.442695
    %v2209 = vpow.pop %v2208
    %v2210 = vadd.f32 %v2209, 1.0
    %v2211 = vrcp.pop %v2210
    %v2212 = vmul.f32 1.0, %v2211
    %v2214 = vlaneseq
    %v2215 = vshrl.u32 %v2214, 7
    %v2216 = vsub.s32 0, %v2215
    %v2217 = vrot.slane %v1739, %v2216
    %v2219 = vadd.f32 %v2194, %v2217
    %v2220 = vmul.f32 %v2205, %v2219
    %v2221 = vadd.f32 %v1984, %v2220
    %v2222 = vtanh.pop %v2221
    %v2223 = vsub.f32 1.0, %v2212
    %v2224 = vmul.f32 %v2223, %v2222
    %v2225 = vmul.f32 %v2212, %v1657
    %v2226 = vadd.f32 %v2224, %v2225
    %v2227 = vpack.c.bf16 %v2226, %v2226
    %v2229 = vlaneseq
    %v2230 = vshrl.u32 %v2229, 7
    %v2231 = vsub.s32 0, %v2230
    %v2232 = vrot.slane %v1756, %v2231
    %v2250 = vunpack.c.l.b16 %v1740
    %v2251 = vunpack.c.l.b16 %v1741
    %v2252 = vunpack.c.l.b16 %v1742
    %v2253 = vunpack.c.l.b16 %v1743
    %v2254 = vunpack.c.l.b16 %v1744
    %v2255 = vunpack.c.l.b16 %v1745
    %v2256 = vunpack.c.l.b16 %v1746
    %v2257 = vunpack.c.l.b16 %v1747
    %v2258 = vunpack.c.l.b16 %v1748
    %v2259 = vunpack.c.l.b16 %v1749
    %v2260 = vunpack.c.l.b16 %v1750
    %v2261 = vunpack.c.l.b16 %v1751
    %v2262 = vunpack.c.l.b16 %v1752
    %v2263 = vunpack.c.l.b16 %v1753
    %v2264 = vunpack.c.l.b16 %v1754
    %v2265 = vunpack.c.l.b16 %v1755
    %v2266 = vpack.c.b16 %v2251, %v2250
    %v2267 = vpack.c.b16 %v2253, %v2252
    %v2268 = vpack.c.b16 %v2255, %v2254
    %v2269 = vpack.c.b16 %v2257, %v2256
    %v2270 = vpack.c.b16 %v2259, %v2258
    %v2271 = vpack.c.b16 %v2261, %v2260
    %v2272 = vpack.c.b16 %v2263, %v2262
    %v2273 = vpack.c.b16 %v2265, %v2264
    %2282 = vmatprep.subr.bf16.mxu0 0
    %2283 = vmatpush1.bf16.msra.mxu0 %v2266
    %2284 = vmatprep.subr.bf16.mxu0 0
    %2285 = vmatpush1.bf16.msra.mxu0 %v2267
    %2286 = vmatprep.subr.bf16.mxu0 0
    %2287 = vmatpush1.bf16.msra.mxu0 %v2268
    %2288 = vmatprep.subr.bf16.mxu0 0
    %2289 = vmatpush1.bf16.msra.mxu0 %v2269
    %2290 = vmatprep.subr.bf16.mxu0 0
    %2291 = vmatpush1.bf16.msra.mxu0 %v2270
    %2292 = vmatprep.subr.bf16.mxu0 0
    %2293 = vmatpush1.bf16.msra.mxu0 %v2271
    %2294 = vmatprep.subr.bf16.mxu0 0
    %2295 = vmatpush1.bf16.msra.mxu0 %v2272
    %2296 = vmatprep.subr.bf16.mxu0 0
    %2297 = vmatpush1.bf16.msra.mxu0 %v2273
    %2298 = vmatprep.subr.bf16.mxu0 0
    %2299 = vmatpush1.bf16.msra.mxu0 0
    %2300 = vmatprep.subr.bf16.mxu0 0
    %2301 = vmatpush1.bf16.msra.mxu0 0
    %2302 = vmatprep.subr.bf16.mxu0 0
    %2303 = vmatpush1.bf16.msra.mxu0 0
    %2304 = vmatprep.subr.bf16.mxu0 0
    %2305 = vmatpush1.bf16.msra.mxu0 0
    %2306 = vmatprep.subr.bf16.mxu0 0
    %2307 = vmatpush1.bf16.msra.mxu0 0
    %2308 = vmatprep.subr.bf16.mxu0 0
    %2309 = vmatpush1.bf16.msra.mxu0 0
    %2310 = vmatprep.subr.bf16.mxu0 0
    %2311 = vmatpush1.bf16.msra.mxu0 0
    %2312 = vmatprep.subr.bf16.mxu0 0
    %2313 = vmatpush1.bf16.msra.mxu0 0
    %2314 = vmatprep.mubr.bf16.mxu0 0
    %2315 = vmatmul.mubr.bf16.gmra.mrb[0].mxu0 %v2227
    %v2316 = vpop.f32.mrb[0].mxu0
    %v2317 = vadd.f32 %v2232, %v2316
    %v2318 = vpop.f32.mrb[0].mxu0
    %v2319 = vpop.f32.mrb[0].mxu0
    %v2320 = vpop.f32.mrb[0].mxu0
    %2321 = vdwg.mxu0
    %2322 = vmax.xlane.f32.xlu0 %v2317
    %v2323 = vpop.xlane.xlu0 %2322
    %v2324 = vsub.f32 %v2317, %v2323
    %v2325 = vmul.f32 %v2324, 1.442695
    %v2326 = vpow.pop %v2325
    %2327 = vadd.xlane.f32.xlu0 %v2326
    %v2328 = vpop.xlane.xlu0 %2327
    %v2329 = vlog2.pop %v2328
    %v2330 = vmul.f32 %v2329, 0.6931472
    %v2331 = vsub.f32 %v2324, %v2330
    %2332 = vst [vmem:[%s13] sm:$0xff] %v2331
    %vm2333 = vcmp.ge.f32.partialorder %v2317, %v2323
    %v2334 = vsel %vm2333, %v151, 128
    %v2335 = vand.u32 %v2334, 65535
    %v2336 = vshra.s32 %v2334, 16
    %v2337 = vcvt.s32.f32 %v2335
    %v2338 = vcvt.s32.f32 %v2336
    %2339 = vmin.xlane.f32.xlu0 %v2338
    %v2340 = vpop.xlane.xlu0 %2339
    %vm2341 = vcmp.eq.f32.partialorder %v2338, %v2340
    %v2342 = vsel %vm2341, %v2337, inf
    %2343 = vmin.xlane.f32.xlu0 %v2342
    %v2344 = vpop.xlane.xlu0 %2343
    %v2345 = vcvt.f32.s32 %v2344
    %v2346 = vcvt.f32.s32 %v2340
    %v2347 = vshll.u32 %v2346, 16
    %v2348 = vadd.s32 %v2347, %v2345
    %vm2349 = vcmp.eq.s32.totalorder %v151, %v2348
    %v2350 = vsel %vm2349, 1, 0
    %v2351 = vcvt.s32.f32 %v2350
    %v2352 = vpack.c.bf16 %v2351, %v2351
    %v2369 = vunpack.c.l.b16 %v1658
    %v2370 = vunpack.c.l.b16 %v1659
    %v2371 = vunpack.c.l.b16 %v1660
    %v2372 = vunpack.c.l.b16 %v1661
    %v2373 = vunpack.c.l.b16 %v1662
    %v2374 = vunpack.c.l.b16 %v1663
    %v2375 = vunpack.c.l.b16 %v1664
    %v2376 = vunpack.c.l.b16 %v1665
    %v2377 = vunpack.c.l.b16 %v1666
    %v2378 = vunpack.c.l.b16 %v1667
    %v2379 = vunpack.c.l.b16 %v1668
    %v2380 = vunpack.c.l.b16 %v1669
    %v2381 = vunpack.c.l.b16 %v1670
    %v2382 = vunpack.c.l.b16 %v1671
    %v2383 = vunpack.c.l.b16 %v1672
    %v2384 = vunpack.c.l.b16 %v1673
    %v2385 = vpack.c.b16 %v2370, %v2369
    %v2386 = vpack.c.b16 %v2372, %v2371
    %v2387 = vpack.c.b16 %v2374, %v2373
    %v2388 = vpack.c.b16 %v2376, %v2375
    %v2389 = vpack.c.b16 %v2378, %v2377
    %v2390 = vpack.c.b16 %v2380, %v2379
    %v2391 = vpack.c.b16 %v2382, %v2381
    %v2392 = vpack.c.b16 %v2384, %v2383
    %2401 = vmatprep.subr.bf16.mxu0 0
    %2402 = vmatpush1.bf16.msra.mxu0 %v2385
    %2403 = vmatprep.subr.bf16.mxu0 0
    %2404 = vmatpush1.bf16.msra.mxu0 %v2386
    %2405 = vmatprep.subr.bf16.mxu0 0
    %2406 = vmatpush1.bf16.msra.mxu0 %v2387
    %2407 = vmatprep.subr.bf16.mxu0 0
    %2408 = vmatpush1.bf16.msra.mxu0 %v2388
    %2409 = vmatprep.subr.bf16.mxu0 0
    %2410 = vmatpush1.bf16.msra.mxu0 %v2389
    %2411 = vmatprep.subr.bf16.mxu0 0
    %2412 = vmatpush1.bf16.msra.mxu0 %v2390
    %2413 = vmatprep.subr.bf16.mxu0 0
    %2414 = vmatpush1.bf16.msra.mxu0 %v2391
    %2415 = vmatprep.subr.bf16.mxu0 0
    %2416 = vmatpush1.bf16.msra.mxu0 %v2392
    %2417 = vmatprep.subr.bf16.mxu0 0
    %2418 = vmatpush1.bf16.msra.mxu0 0
    %2419 = vmatprep.subr.bf16.mxu0 0
    %2420 = vmatpush1.bf16.msra.mxu0 0
    %2421 = vmatprep.subr.bf16.mxu0 0
    %2422 = vmatpush1.bf16.msra.mxu0 0
    %2423 = vmatprep.subr.bf16.mxu0 0
    %2424 = vmatpush1.bf16.msra.mxu0 0
    %2425 = vmatprep.subr.bf16.mxu0 0
    %2426 = vmatpush1.bf16.msra.mxu0 0
    %2427 = vmatprep.subr.bf16.mxu0 0
    %2428 = vmatpush1.bf16.msra.mxu0 0
    %2429 = vmatprep.subr.bf16.mxu0 0
    %2430 = vmatpush1.bf16.msra.mxu0 0
    %2431 = vmatprep.subr.bf16.mxu0 0
    %2432 = vmatpush1.bf16.msra.mxu0 0
    %2433 = vmatprep.mubr.bf16.mxu0 0
    %2434 = vmatmul.mubr.bf16.gmra.mrb[0].mxu0 %v2352
    %v2435 = vpop.f32.mrb[0].mxu0
    %v2436 = vadd.f32 0.0, %v2435
    %v2437 = vpop.f32.mrb[0].mxu0
    %v2438 = vpop.f32.mrb[0].mxu0
    %v2439 = vpop.f32.mrb[0].mxu0
    %2440 = vdwg.mxu0
    %v2441 = vpack.c.bf16 %v2436, %v2436
    %2442 = vmatprep.subr.bf16.mxu0 %v1861
    %2443 = vmatpush1.bf16.msra.mxu0 %v1860
    %2444 = vmatprep.subr.bf16.mxu0 %v1864
    %2445 = vmatpush1.bf16.msra.mxu0 %v1863
    %2446 = vmatprep.subr.bf16.mxu0 %v1867
    %2447 = vmatpush1.bf16.msra.mxu0 %v1866
    %2448 = vmatprep.subr.bf16.mxu0 %v1870
    %2449 = vmatpush1.bf16.msra.mxu0 %v1869
    %2450 = vmatprep.subr.bf16.mxu0 %v1873
    %2451 = vmatpush1.bf16.msra.mxu0 %v1872
    %2452 = vmatprep.subr.bf16.mxu0 %v1876
    %2453 = vmatpush1.bf16.msra.mxu0 %v1875
    %2454 = vmatprep.subr.bf16.mxu0 %v1879
    %2455 = vmatpush1.bf16.msra.mxu0 %v1878
    %2456 = vmatprep.subr.bf16.mxu0 %v1882
    %2457 = vmatpush1.bf16.msra.mxu0 %v1881
    %2458 = vmatprep.subr.bf16.mxu0 0
    %2459 = vmatpush1.bf16.msra.mxu0 0
    %2460 = vmatprep.subr.bf16.mxu0 0
    %2461 = vmatpush1.bf16.msra.mxu0 0
    %2462 = vmatprep.subr.bf16.mxu0 0
    %2463 = vmatpush1.bf16.msra.mxu0 0
    %2464 = vmatprep.subr.bf16.mxu0 0
    %2465 = vmatpush1.bf16.msra.mxu0 0
    %2466 = vmatprep.subr.bf16.mxu0 0
    %2467 = vmatpush1.bf16.msra.mxu0 0
    %2468 = vmatprep.subr.bf16.mxu0 0
    %2469 = vmatpush1.bf16.msra.mxu0 0
    %2470 = vmatprep.subr.bf16.mxu0 0
    %2471 = vmatpush1.bf16.msra.mxu0 0
    %2472 = vmatprep.subr.bf16.mxu0 0
    %2473 = vmatpush1.bf16.msra.mxu0 0
    %2474 = vmatprep.mubr.bf16.mxu0 0
    %2475 = vmatmul.mubr.bf16.gmra.mrb[0].mxu0 %v2441
    %v2476 = vpop.f32.mrb[0].mxu0
    %v2477 = vadd.f32 %v1768, %v2476
    %v2478 = vpop.f32.mrb[0].mxu0
    %v2479 = vadd.f32 %v1772, %v2478
    %v2480 = vpop.f32.mrb[0].mxu0
    %v2481 = vpop.f32.mrb[0].mxu0
    %2482 = vdwg.mxu0
    %2483 = vmatprep.subr.bf16.mxu0 0
    %2484 = vmatpush1.bf16.msra.mxu0 %v1862
    %2485 = vmatprep.subr.bf16.mxu0 0
    %2486 = vmatpush1.bf16.msra.mxu0 %v1865
    %2487 = vmatprep.subr.bf16.mxu0 0
    %2488 = vmatpush1.bf16.msra.mxu0 %v1868
    %2489 = vmatprep.subr.bf16.mxu0 0
    %2490 = vmatpush1.bf16.msra.mxu0 %v1871
    %2491 = vmatprep.subr.bf16.mxu0 0
    %2492 = vmatpush1.bf16.msra.mxu0 %v1874
    %2493 = vmatprep.subr.bf16.mxu0 0
    %2494 = vmatpush1.bf16.msra.mxu0 %v1877
    %2495 = vmatprep.subr.bf16.mxu0 0
    %2496 = vmatpush1.bf16.msra.mxu0 %v1880
    %2497 = vmatprep.subr.bf16.mxu0 0
    %2498 = vmatpush1.bf16.msra.mxu0 %v1883
    %2499 = vmatprep.subr.bf16.mxu0 0
    %2500 = vmatpush1.bf16.msra.mxu0 0
    %2501 = vmatprep.subr.bf16.mxu0 0
    %2502 = vmatpush1.bf16.msra.mxu0 0
    %2503 = vmatprep.subr.bf16.mxu0 0
    %2504 = vmatpush1.bf16.msra.mxu0 0
    %2505 = vmatprep.subr.bf16.mxu0 0
    %2506 = vmatpush1.bf16.msra.mxu0 0
    %2507 = vmatprep.subr.bf16.mxu0 0
    %2508 = vmatpush1.bf16.msra.mxu0 0
    %2509 = vmatprep.subr.bf16.mxu0 0
    %2510 = vmatpush1.bf16.msra.mxu0 0
    %2511 = vmatprep.subr.bf16.mxu0 0
    %2512 = vmatpush1.bf16.msra.mxu0 0
    %2513 = vmatprep.subr.bf16.mxu0 0
    %2514 = vmatpush1.bf16.msra.mxu0 0
    %2515 = vmatprep.mubr.bf16.mxu0 0
    %2516 = vmatmul.mubr.bf16.gmra.mrb[0].mxu0 %v2441
    %v2517 = vpop.f32.mrb[0].mxu0
    %v2518 = vadd.f32 %v1776, %v2517
    %v2519 = vpop.f32.mrb[0].mxu0
    %v2520 = vpop.f32.mrb[0].mxu0
    %v2521 = vpop.f32.mrb[0].mxu0
    %2522 = vdwg.mxu0
    %2523 = vmatprep.subr.bf16.mxu0 %v2071
    %2524 = vmatpush1.bf16.msra.mxu0 %v2070
    %2525 = vmatprep.subr.bf16.mxu0 %v2074
    %2526 = vmatpush1.bf16.msra.mxu0 %v2073
    %2527 = vmatprep.subr.bf16.mxu0 %v2077
    %2528 = vmatpush1.bf16.msra.mxu0 %v2076
    %2529 = vmatprep.subr.bf16.mxu0 %v2080
    %2530 = vmatpush1.bf16.msra.mxu0 %v2079
    %2531 = vmatprep.subr.bf16.mxu0 %v2083
    %2532 = vmatpush1.bf16.msra.mxu0 %v2082
    %2533 = vmatprep.subr.bf16.mxu0 %v2086
    %2534 = vmatpush1.bf16.msra.mxu0 %v2085
    %2535 = vmatprep.subr.bf16.mxu0 %v2089
    %2536 = vmatpush1.bf16.msra.mxu0 %v2088
    %2537 = vmatprep.subr.bf16.mxu0 %v2092
    %2538 = vmatpush1.bf16.msra.mxu0 %v2091
    %2539 = vmatprep.subr.bf16.mxu0 0
    %2540 = vmatpush1.bf16.msra.mxu0 0
    %2541 = vmatprep.subr.bf16.mxu0 0
    %2542 = vmatpush1.bf16.msra.mxu0 0
    %2543 = vmatprep.subr.bf16.mxu0 0
    %2544 = vmatpush1.bf16.msra.mxu0 0
    %2545 = vmatprep.subr.bf16.mxu0 0
    %2546 = vmatpush1.bf16.msra.mxu0 0
    %2547 = vmatprep.subr.bf16.mxu0 0
    %2548 = vmatpush1.bf16.msra.mxu0 0
    %2549 = vmatprep.subr.bf16.mxu0 0
    %2550 = vmatpush1.bf16.msra.mxu0 0
    %2551 = vmatprep.subr.bf16.mxu0 0
    %2552 = vmatpush1.bf16.msra.mxu0 0
    %2553 = vmatprep.subr.bf16.mxu0 0
    %2554 = vmatpush1.bf16.msra.mxu0 0
    %2555 = vmatprep.mubr.bf16.mxu0 0
    %2556 = vmatmul.mubr.bf16.gmra.mrb[0].mxu0 %v2227
    %v2557 = vpop.f32.mrb[0].mxu0
    %v2558 = vadd.f32 0.0, %v2557
    %v2559 = vpop.f32.mrb[0].mxu0
    %v2560 = vadd.f32 0.0, %v2559
    %v2561 = vpop.f32.mrb[0].mxu0
    %v2562 = vpop.f32.mrb[0].mxu0
    %2563 = vdwg.mxu0
    %2564 = vmatprep.subr.bf16.mxu0 0
    %2565 = vmatpush1.bf16.msra.mxu0 %v2072
    %2566 = vmatprep.subr.bf16.mxu0 0
    %2567 = vmatpush1.bf16.msra.mxu0 %v2075
    %2568 = vmatprep.subr.bf16.mxu0 0
    %2569 = vmatpush1.bf16.msra.mxu0 %v2078
    %2570 = vmatprep.subr.bf16.mxu0 0
    %2571 = vmatpush1.bf16.msra.mxu0 %v2081
    %2572 = vmatprep.subr.bf16.mxu0 0
    %2573 = vmatpush1.bf16.msra.mxu0 %v2084
    %2574 = vmatprep.subr.bf16.mxu0 0
    %2575 = vmatpush1.bf16.msra.mxu0 %v2087
    %2576 = vmatprep.subr.bf16.mxu0 0
    %2577 = vmatpush1.bf16.msra.mxu0 %v2090
    %2578 = vmatprep.subr.bf16.mxu0 0
    %2579 = vmatpush1.bf16.msra.mxu0 %v2093
    %2580 = vmatprep.subr.bf16.mxu0 0
    %2581 = vmatpush1.bf16.msra.mxu0 0
    %2582 = vmatprep.subr.bf16.mxu0 0
    %2583 = vmatpush1.bf16.msra.mxu0 0
    %2584 = vmatprep.subr.bf16.mxu0 0
    %2585 = vmatpush1.bf16.msra.mxu0 0
    %2586 = vmatprep.subr.bf16.mxu0 0
    %2587 = vmatpush1.bf16.msra.mxu0 0
    %2588 = vmatprep.subr.bf16.mxu0 0
    %2589 = vmatpush1.bf16.msra.mxu0 0
    %2590 = vmatprep.subr.bf16.mxu0 0
    %2591 = vmatpush1.bf16.msra.mxu0 0
    %2592 = vmatprep.subr.bf16.mxu0 0
    %2593 = vmatpush1.bf16.msra.mxu0 0
    %2594 = vmatprep.subr.bf16.mxu0 0
    %2595 = vmatpush1.bf16.msra.mxu0 0
    %2596 = vmatprep.mubr.bf16.mxu0 0
    %2597 = vmatmul.mubr.bf16.gmra.mrb[0].mxu0 %v2227
    %v2598 = vpop.f32.mrb[0].mxu0
    %v2599 = vadd.f32 0.0, %v2598
    %v2600 = vpop.f32.mrb[0].mxu0
    %v2601 = vpop.f32.mrb[0].mxu0
    %v2602 = vpop.f32.mrb[0].mxu0
    %2603 = vdwg.mxu0
    %v2604 = vadd.f32 %v2477, %v2558
    %v2605 = vxor.u32 %v2604, 2147483648
    %v2606 = vmul.f32 %v2605, 1.442695
    %v2607 = vpow.pop %v2606
    %v2608 = vadd.f32 %v2607, 1.0
    %v2609 = vrcp.pop %v2608
    %v2610 = vmul.f32 1.0, %v2609
    %v2611 = vadd.f32 %v2479, %v2560
    %v2612 = vxor.u32 %v2611, 2147483648
    %v2613 = vmul.f32 %v2612, 1.442695
    %v2614 = vpow.pop %v2613
    %v2615 = vadd.f32 %v2614, 1.0
    %v2616 = vrcp.pop %v2615
    %v2617 = vmul.f32 1.0, %v2616
    %v2618 = vadd.f32 %v2599, %v2217
    %v2619 = vmul.f32 %v2610, %v2618
    %v2620 = vadd.f32 %v2518, %v2619
    %v2621 = vtanh.pop %v2620
    %v2622 = vsub.f32 1.0, %v2617
    %v2623 = vmul.f32 %v2622, %v2621
    %v2624 = vmul.f32 %v2617, %v2226
    %v2625 = vadd.f32 %v2623, %v2624
    %v2626 = vpack.c.bf16 %v2625, %v2625
    %2627 = vmatprep.subr.bf16.mxu0 0
    %2628 = vmatpush1.bf16.msra.mxu0 %v2266
    %2629 = vmatprep.subr.bf16.mxu0 0
    %2630 = vmatpush1.bf16.msra.mxu0 %v2267
    %2631 = vmatprep.subr.bf16.mxu0 0
    %2632 = vmatpush1.bf16.msra.mxu0 %v2268
    %2633 = vmatprep.subr.bf16.mxu0 0
    %2634 = vmatpush1.bf16.msra.mxu0 %v2269
    %2635 = vmatprep.subr.bf16.mxu0 0
    %2636 = vmatpush1.bf16.msra.mxu0 %v2270
    %2637 = vmatprep.subr.bf16.mxu0 0
    %2638 = vmatpush1.bf16.msra.mxu0 %v2271
    %2639 = vmatprep.subr.bf16.mxu0 0
    %2640 = vmatpush1.bf16.msra.mxu0 %v2272
    %2641 = vmatprep.subr.bf16.mxu0 0
    %2642 = vmatpush1.bf16.msra.mxu0 %v2273
    %2643 = vmatprep.subr.bf16.mxu0 0
    %2644 = vmatpush1.bf16.msra.mxu0 0
    %2645 = vmatprep.subr.bf16.mxu0 0
    %2646 = vmatpush1.bf16.msra.mxu0 0
    %2647 = vmatprep.subr.bf16.mxu0 0
    %2648 = vmatpush1.bf16.msra.mxu0 0
    %2649 = vmatprep.subr.bf16.mxu0 0
    %2650 = vmatpush1.bf16.msra.mxu0 0
    %2651 = vmatprep.subr.bf16.mxu0 0
    %2652 = vmatpush1.bf16.msra.mxu0 0
    %2653 = vmatprep.subr.bf16.mxu0 0
    %2654 = vmatpush1.bf16.msra.mxu0 0
    %2655 = vmatprep.subr.bf16.mxu0 0
    %2656 = vmatpush1.bf16.msra.mxu0 0
    %2657 = vmatprep.subr.bf16.mxu0 0
    %2658 = vmatpush1.bf16.msra.mxu0 0
    %2659 = vmatprep.mubr.bf16.mxu0 0
    %2660 = vmatmul.mubr.bf16.gmra.mrb[0].mxu0 %v2626
    %v2661 = vpop.f32.mrb[0].mxu0
    %v2662 = vadd.f32 %v2232, %v2661
    %v2663 = vpop.f32.mrb[0].mxu0
    %v2664 = vpop.f32.mrb[0].mxu0
    %v2665 = vpop.f32.mrb[0].mxu0
    %2666 = vdwg.mxu0
    %2667 = vmax.xlane.f32.xlu0 %v2662
    %v2668 = vpop.xlane.xlu0 %2667
    %v2669 = vsub.f32 %v2662, %v2668
    %v2670 = vmul.f32 %v2669, 1.442695
    %v2671 = vpow.pop %v2670
    %2672 = vadd.xlane.f32.xlu0 %v2671
    %v2673 = vpop.xlane.xlu0 %2672
    %v2674 = vlog2.pop %v2673
    %v2675 = vmul.f32 %v2674, 0.6931472
    %v2676 = vsub.f32 %v2669, %v2675
    %s2677 = scalar_lea.vmem %s13, 8
    %2678 = vst [vmem:[%s2677] sm:$0xff] %v2676
    %vm2679 = vcmp.ge.f32.partialorder %v2662, %v2668
    %v2680 = vsel %vm2679, %v151, 128
    %v2681 = vand.u32 %v2680, 65535
    %v2682 = vshra.s32 %v2680, 16
    %v2683 = vcvt.s32.f32 %v2681
    %v2684 = vcvt.s32.f32 %v2682
    %2685 = vmin.xlane.f32.xlu0 %v2684
    %v2686 = vpop.xlane.xlu0 %2685
    %vm2687 = vcmp.eq.f32.partialorder %v2684, %v2686
    %v2688 = vsel %vm2687, %v2683, inf
    %2689 = vmin.xlane.f32.xlu0 %v2688
    %v2690 = vpop.xlane.xlu0 %2689
    %v2691 = vcvt.f32.s32 %v2690
    %v2692 = vcvt.f32.s32 %v2686
    %v2693 = vshll.u32 %v2692, 16
    %v2694 = vadd.s32 %v2693, %v2691
    %vm2695 = vcmp.eq.s32.totalorder %v151, %v2694
    %v2696 = vsel %vm2695, 1, 0
    %v2697 = vcvt.s32.f32 %v2696
    %v2698 = vpack.c.bf16 %v2697, %v2697
    %2699 = vmatprep.subr.bf16.mxu0 0
    %2700 = vmatpush1.bf16.msra.mxu0 %v2385
    %2701 = vmatprep.subr.bf16.mxu0 0
    %2702 = vmatpush1.bf16.msra.mxu0 %v2386
    %2703 = vmatprep.subr.bf16.mxu0 0
    %2704 = vmatpush1.bf16.msra.mxu0 %v2387
    %2705 = vmatprep.subr.bf16.mxu0 0
    %2706 = vmatpush1.bf16.msra.mxu0 %v2388
    %2707 = vmatprep.subr.bf16.mxu0 0
    %2708 = vmatpush1.bf16.msra.mxu0 %v2389
    %2709 = vmatprep.subr.bf16.mxu0 0
    %2710 = vmatpush1.bf16.msra.mxu0 %v2390
    %2711 = vmatprep.subr.bf16.mxu0 0
    %2712 = vmatpush1.bf16.msra.mxu0 %v2391
    %2713 = vmatprep.subr.bf16.mxu0 0
    %2714 = vmatpush1.bf16.msra.mxu0 %v2392
    %2715 = vmatprep.subr.bf16.mxu0 0
    %2716 = vmatpush1.bf16.msra.mxu0 0
    %2717 = vmatprep.subr.bf16.mxu0 0
    %2718 = vmatpush1.bf16.msra.mxu0 0
    %2719 = vmatprep.subr.bf16.mxu0 0
    %2720 = vmatpush1.bf16.msra.mxu0 0
    %2721 = vmatprep.subr.bf16.mxu0 0
    %2722 = vmatpush1.bf16.msra.mxu0 0
    %2723 = vmatprep.subr.bf16.mxu0 0
    %2724 = vmatpush1.bf16.msra.mxu0 0
    %2725 = vmatprep.subr.bf16.mxu0 0
    %2726 = vmatpush1.bf16.msra.mxu0 0
    %2727 = vmatprep.subr.bf16.mxu0 0
    %2728 = vmatpush1.bf16.msra.mxu0 0
    %2729 = vmatprep.subr.bf16.mxu0 0
    %2730 = vmatpush1.bf16.msra.mxu0 0
    %2731 = vmatprep.mubr.bf16.mxu0 0
    %2732 = vmatmul.mubr.bf16.gmra.mrb[0].mxu0 %v2698
    %v2733 = vpop.f32.mrb[0].mxu0
    %v2734 = vadd.f32 0.0, %v2733
    %v2735 = vpop.f32.mrb[0].mxu0
    %v2736 = vpop.f32.mrb[0].mxu0
    %v2737 = vpop.f32.mrb[0].mxu0
    %2738 = vdwg.mxu0
    %v2739 = vpack.c.bf16 %v2734, %v2734
    %2740 = vmatprep.subr.bf16.mxu0 %v1861
    %2741 = vmatpush1.bf16.msra.mxu0 %v1860
    %2742 = vmatprep.subr.bf16.mxu0 %v1864
    %2743 = vmatpush1.bf16.msra.mxu0 %v1863
    %2744 = vmatprep.subr.bf16.mxu0 %v1867
    %2745 = vmatpush1.bf16.msra.mxu0 %v1866
    %2746 = vmatprep.subr.bf16.mxu0 %v1870
    %2747 = vmatpush1.bf16.msra.mxu0 %v1869
    %2748 = vmatprep.subr.bf16.mxu0 %v1873
    %2749 = vmatpush1.bf16.msra.mxu0 %v1872
    %2750 = vmatprep.subr.bf16.mxu0 %v1876
    %2751 = vmatpush1.bf16.msra.mxu0 %v1875
    %2752 = vmatprep.subr.bf16.mxu0 %v1879
    %2753 = vmatpush1.bf16.msra.mxu0 %v1878
    %2754 = vmatprep.subr.bf16.mxu0 %v1882
    %2755 = vmatpush1.bf16.msra.mxu0 %v1881
    %2756 = vmatprep.subr.bf16.mxu0 0
    %2757 = vmatpush1.bf16.msra.mxu0 0
    %2758 = vmatprep.subr.bf16.mxu0 0
    %2759 = vmatpush1.bf16.msra.mxu0 0
    %2760 = vmatprep.subr.bf16.mxu0 0
    %2761 = vmatpush1.bf16.msra.mxu0 0
    %2762 = vmatprep.subr.bf16.mxu0 0
    %2763 = vmatpush1.bf16.msra.mxu0 0
    %2764 = vmatprep.subr.bf16.mxu0 0
    %2765 = vmatpush1.bf16.msra.mxu0 0
    %2766 = vmatprep.subr.bf16.mxu0 0
    %2767 = vmatpush1.bf16.msra.mxu0 0
    %2768 = vmatprep.subr.bf16.mxu0 0
    %2769 = vmatpush1.bf16.msra.mxu0 0
    %2770 = vmatprep.subr.bf16.mxu0 0
    %2771 = vmatpush1.bf16.msra.mxu0 0
    %2772 = vmatprep.mubr.bf16.mxu0 0
    %2773 = vmatmul.mubr.bf16.gmra.mrb[0].mxu0 %v2739
    %v2774 = vpop.f32.mrb[0].mxu0
    %v2775 = vadd.f32 %v1768, %v2774
    %v2776 = vpop.f32.mrb[0].mxu0
    %v2777 = vadd.f32 %v1772, %v2776
    %v2778 = vpop.f32.mrb[0].mxu0
    %v2779 = vpop.f32.mrb[0].mxu0
    %2780 = vdwg.mxu0
    %2781 = vmatprep.subr.bf16.mxu0 0
    %2782 = vmatpush1.bf16.msra.mxu0 %v1862
    %2783 = vmatprep.subr.bf16.mxu0 0
    %2784 = vmatpush1.bf16.msra.mxu0 %v1865
    %2785 = vmatprep.subr.bf16.mxu0 0
    %2786 = vmatpush1.bf16.msra.mxu0 %v1868
    %2787 = vmatprep.subr.bf16.mxu0 0
    %2788 = vmatpush1.bf16.msra.mxu0 %v1871
    %2789 = vmatprep.subr.bf16.mxu0 0
    %2790 = vmatpush1.bf16.msra.mxu0 %v1874
    %2791 = vmatprep.subr.bf16.mxu0 0
    %2792 = vmatpush1.bf16.msra.mxu0 %v1877
    %2793 = vmatprep.subr.bf16.mxu0 0
    %2794 = vmatpush1.bf16.msra.mxu0 %v1880
    %2795 = vmatprep.subr.bf16.mxu0 0
    %2796 = vmatpush1.bf16.msra.mxu0 %v1883
    %2797 = vmatprep.subr.bf16.mxu0 0
    %2798 = vmatpush1.bf16.msra.mxu0 0
    %2799 = vmatprep.subr.bf16.mxu0 0
    %2800 = vmatpush1.bf16.msra.mxu0 0
    %2801 = vmatprep.subr.bf16.mxu0 0
    %2802 = vmatpush1.bf16.msra.mxu0 0
    %2803 = vmatprep.subr.bf16.mxu0 0
    %2804 = vmatpush1.bf16.msra.mxu0 0
    %2805 = vmatprep.subr.bf16.mxu0 0
    %2806 = vmatpush1.bf16.msra.mxu0 0
    %2807 = vmatprep.subr.bf16.mxu0 0
    %2808 = vmatpush1.bf16.msra.mxu0 0
    %2809 = vmatprep.subr.bf16.mxu0 0
    %2810 = vmatpush1.bf16.msra.mxu0 0
    %2811 = vmatprep.subr.bf16.mxu0 0
    %2812 = vmatpush1.bf16.msra.mxu0 0
    %2813 = vmatprep.mubr.bf16.mxu0 0
    %2814 = vmatmul.mubr.bf16.gmra.mrb[0].mxu0 %v2739
    %v2815 = vpop.f32.mrb[0].mxu0
    %v2816 = vadd.f32 %v1776, %v2815
    %v2817 = vpop.f32.mrb[0].mxu0
    %v2818 = vpop.f32.mrb[0].mxu0
    %v2819 = vpop.f32.mrb[0].mxu0
    %2820 = vdwg.mxu0
    %2821 = vmatprep.subr.bf16.mxu0 %v2071
    %2822 = vmatpush1.bf16.msra.mxu0 %v2070
    %2823 = vmatprep.subr.bf16.mxu0 %v2074
    %2824 = vmatpush1.bf16.msra.mxu0 %v2073
    %2825 = vmatprep.subr.bf16.mxu0 %v2077
    %2826 = vmatpush1.bf16.msra.mxu0 %v2076
    %2827 = vmatprep.subr.bf16.mxu0 %v2080
    %2828 = vmatpush1.bf16.msra.mxu0 %v2079
    %2829 = vmatprep.subr.bf16.mxu0 %v2083
    %2830 = vmatpush1.bf16.msra.mxu0 %v2082
    %2831 = vmatprep.subr.bf16.mxu0 %v2086
    %2832 = vmatpush1.bf16.msra.mxu0 %v2085
    %2833 = vmatprep.subr.bf16.mxu0 %v2089
    %2834 = vmatpush1.bf16.msra.mxu0 %v2088
    %2835 = vmatprep.subr.bf16.mxu0 %v2092
    %2836 = vmatpush1.bf16.msra.mxu0 %v2091
    %2837 = vmatprep.subr.bf16.mxu0 0
    %2838 = vmatpush1.bf16.msra.mxu0 0
    %2839 = vmatprep.subr.bf16.mxu0 0
    %2840 = vmatpush1.bf16.msra.mxu0 0
    %2841 = vmatprep.subr.bf16.mxu0 0
    %2842 = vmatpush1.bf16.msra.mxu0 0
    %2843 = vmatprep.subr.bf16.mxu0 0
    %2844 = vmatpush1.bf16.msra.mxu0 0
    %2845 = vmatprep.subr.bf16.mxu0 0
    %2846 = vmatpush1.bf16.msra.mxu0 0
    %2847 = vmatprep.subr.bf16.mxu0 0
    %2848 = vmatpush1.bf16.msra.mxu0 0
    %2849 = vmatprep.subr.bf16.mxu0 0
    %2850 = vmatpush1.bf16.msra.mxu0 0
    %2851 = vmatprep.subr.bf16.mxu0 0
    %2852 = vmatpush1.bf16.msra.mxu0 0
    %2853 = vmatprep.mubr.bf16.mxu0 0
    %2854 = vmatmul.mubr.bf16.gmra.mrb[0].mxu0 %v2626
    %v2855 = vpop.f32.mrb[0].mxu0
    %v2856 = vadd.f32 0.0, %v2855
    %v2857 = vpop.f32.mrb[0].mxu0
    %v2858 = vadd.f32 0.0, %v2857
    %v2859 = vpop.f32.mrb[0].mxu0
    %v2860 = vpop.f32.mrb[0].mxu0
    %2861 = vdwg.mxu0
    %2862 = vmatprep.subr.bf16.mxu0 0
    %2863 = vmatpush1.bf16.msra.mxu0 %v2072
    %2864 = vmatprep.subr.bf16.mxu0 0
    %2865 = vmatpush1.bf16.msra.mxu0 %v2075
    %2866 = vmatprep.subr.bf16.mxu0 0
    %2867 = vmatpush1.bf16.msra.mxu0 %v2078
    %2868 = vmatprep.subr.bf16.mxu0 0
    %2869 = vmatpush1.bf16.msra.mxu0 %v2081
    %2870 = vmatprep.subr.bf16.mxu0 0
    %2871 = vmatpush1.bf16.msra.mxu0 %v2084
    %2872 = vmatprep.subr.bf16.mxu0 0
    %2873 = vmatpush1.bf16.msra.mxu0 %v2087
    %2874 = vmatprep.subr.bf16.mxu0 0
    %2875 = vmatpush1.bf16.msra.mxu0 %v2090
    %2876 = vmatprep.subr.bf16.mxu0 0
    %2877 = vmatpush1.bf16.msra.mxu0 %v2093
    %2878 = vmatprep.subr.bf16.mxu0 0
    %2879 = vmatpush1.bf16.msra.mxu0 0
    %2880 = vmatprep.subr.bf16.mxu0 0
    %2881 = vmatpush1.bf16.msra.mxu0 0
    %2882 = vmatprep.subr.bf16.mxu0 0
    %2883 = vmatpush1.bf16.msra.mxu0 0
    %2884 = vmatprep.subr.bf16.mxu0 0
    %2885 = vmatpush1.bf16.msra.mxu0 0
    %2886 = vmatprep.subr.bf16.mxu0 0
    %2887 = vmatpush1.bf16.msra.mxu0 0
    %2888 = vmatprep.subr.bf16.mxu0 0
    %2889 = vmatpush1.bf16.msra.mxu0 0
    %2890 = vmatprep.subr.bf16.mxu0 0
    %2891 = vmatpush1.bf16.msra.mxu0 0
    %2892 = vmatprep.subr.bf16.mxu0 0
    %2893 = vmatpush1.bf16.msra.mxu0 0
    %2894 = vmatprep.mubr.bf16.mxu0 0
    %2895 = vmatmul.mubr.bf16.gmra.mrb[0].mxu0 %v2626
    %v2896 = vpop.f32.mrb[0].mxu0
    %v2897 = vadd.f32 0.0, %v2896
    %v2898 = vpop.f32.mrb[0].mxu0
    %v2899 = vpop.f32.mrb[0].mxu0
    %v2900 = vpop.f32.mrb[0].mxu0
    %2901 = vdwg.mxu0
    %v2902 = vadd.f32 %v2775, %v2856
    %v2903 = vxor.u32 %v2902, 2147483648
    %v2904 = vmul.f32 %v2903, 1.442695
    %v2905 = vpow.pop %v2904
    %v2906 = vadd.f32 %v2905, 1.0
    %v2907 = vrcp.pop %v2906
    %v2908 = vmul.f32 1.0, %v2907
    %v2909 = vadd.f32 %v2777, %v2858
    %v2910 = vxor.u32 %v2909, 2147483648
    %v2911 = vmul.f32 %v2910, 1.442695
    %v2912 = vpow.pop %v2911
    %v2913 = vadd.f32 %v2912, 1.0
    %v2914 = vrcp.pop %v2913
    %v2915 = vmul.f32 1.0, %v2914
    %v2916 = vadd.f32 %v2897, %v2217
    %v2917 = vmul.f32 %v2908, %v2916
    %v2918 = vadd.f32 %v2816, %v2917
    %v2919 = vtanh.pop %v2918
    %v2920 = vsub.f32 1.0, %v2915
    %v2921 = vmul.f32 %v2920, %v2919
    %v2922 = vmul.f32 %v2915, %v2625
    %v2923 = vadd.f32 %v2921, %v2922
    %v2924 = vpack.c.bf16 %v2923, %v2923
    %2925 = vmatprep.subr.bf16.mxu0 0
    %2926 = vmatpush1.bf16.msra.mxu0 %v2266
    %2927 = vmatprep.subr.bf16.mxu0 0
    %2928 = vmatpush1.bf16.msra.mxu0 %v2267
    %2929 = vmatprep.subr.bf16.mxu0 0
    %2930 = vmatpush1.bf16.msra.mxu0 %v2268
    %2931 = vmatprep.subr.bf16.mxu0 0
    %2932 = vmatpush1.bf16.msra.mxu0 %v2269
    %2933 = vmatprep.subr.bf16.mxu0 0
    %2934 = vmatpush1.bf16.msra.mxu0 %v2270
    %2935 = vmatprep.subr.bf16.mxu0 0
    %2936 = vmatpush1.bf16.msra.mxu0 %v2271
    %2937 = vmatprep.subr.bf16.mxu0 0
    %2938 = vmatpush1.bf16.msra.mxu0 %v2272
    %2939 = vmatprep.subr.bf16.mxu0 0
    %2940 = vmatpush1.bf16.msra.mxu0 %v2273
    %2941 = vmatprep.subr.bf16.mxu0 0
    %2942 = vmatpush1.bf16.msra.mxu0 0
    %2943 = vmatprep.subr.bf16.mxu0 0
    %2944 = vmatpush1.bf16.msra.mxu0 0
    %2945 = vmatprep.subr.bf16.mxu0 0
    %2946 = vmatpush1.bf16.msra.mxu0 0
    %2947 = vmatprep.subr.bf16.mxu0 0
    %2948 = vmatpush1.bf16.msra.mxu0 0
    %2949 = vmatprep.subr.bf16.mxu0 0
    %2950 = vmatpush1.bf16.msra.mxu0 0
    %2951 = vmatprep.subr.bf16.mxu0 0
    %2952 = vmatpush1.bf16.msra.mxu0 0
    %2953 = vmatprep.subr.bf16.mxu0 0
    %2954 = vmatpush1.bf16.msra.mxu0 0
    %2955 = vmatprep.subr.bf16.mxu0 0
    %2956 = vmatpush1.bf16.msra.mxu0 0
    %2957 = vmatprep.mubr.bf16.mxu0 0
    %2958 = vmatmul.mubr.bf16.gmra.mrb[0].mxu0 %v2924
    %v2959 = vpop.f32.mrb[0].mxu0
    %v2960 = vadd.f32 %v2232, %v2959
    %v2961 = vpop.f32.mrb[0].mxu0
    %v2962 = vpop.f32.mrb[0].mxu0
    %v2963 = vpop.f32.mrb[0].mxu0
    %2964 = vdwg.mxu0
    %2965 = vmax.xlane.f32.xlu0 %v2960
    %v2966 = vpop.xlane.xlu0 %2965
    %v2967 = vsub.f32 %v2960, %v2966
    %v2968 = vmul.f32 %v2967, 1.442695
    %v2969 = vpow.pop %v2968
    %2970 = vadd.xlane.f32.xlu0 %v2969
    %v2971 = vpop.xlane.xlu0 %2970
    %v2972 = vlog2.pop %v2971
    %v2973 = vmul.f32 %v2972, 0.6931472
    %v2974 = vsub.f32 %v2967, %v2973
    %s2975 = scalar_lea.vmem %s13, 16
    %2976 = vst [vmem:[%s2975] sm:$0xff] %v2974
    %vm2977 = vcmp.ge.f32.partialorder %v2960, %v2966
    %v2978 = vsel %vm2977, %v151, 128
    %v2979 = vand.u32 %v2978, 65535
    %v2980 = vshra.s32 %v2978, 16
    %v2981 = vcvt.s32.f32 %v2979
    %v2982 = vcvt.s32.f32 %v2980
    %2983 = vmin.xlane.f32.xlu0 %v2982
    %v2984 = vpop.xlane.xlu0 %2983
    %vm2985 = vcmp.eq.f32.partialorder %v2982, %v2984
    %v2986 = vsel %vm2985, %v2981, inf
    %2987 = vmin.xlane.f32.xlu0 %v2986
    %v2988 = vpop.xlane.xlu0 %2987
    %v2989 = vcvt.f32.s32 %v2988
    %v2990 = vcvt.f32.s32 %v2984
    %v2991 = vshll.u32 %v2990, 16
    %v2992 = vadd.s32 %v2991, %v2989
    %vm2993 = vcmp.eq.s32.totalorder %v151, %v2992
    %v2994 = vsel %vm2993, 1, 0
    %v2995 = vcvt.s32.f32 %v2994
    %v2996 = vpack.c.bf16 %v2995, %v2995
    %2997 = vmatprep.subr.bf16.mxu0 0
    %2998 = vmatpush1.bf16.msra.mxu0 %v2385
    %2999 = vmatprep.subr.bf16.mxu0 0
    %3000 = vmatpush1.bf16.msra.mxu0 %v2386
    %3001 = vmatprep.subr.bf16.mxu0 0
    %3002 = vmatpush1.bf16.msra.mxu0 %v2387
    %3003 = vmatprep.subr.bf16.mxu0 0
    %3004 = vmatpush1.bf16.msra.mxu0 %v2388
    %3005 = vmatprep.subr.bf16.mxu0 0
    %3006 = vmatpush1.bf16.msra.mxu0 %v2389
    %3007 = vmatprep.subr.bf16.mxu0 0
    %3008 = vmatpush1.bf16.msra.mxu0 %v2390
    %3009 = vmatprep.subr.bf16.mxu0 0
    %3010 = vmatpush1.bf16.msra.mxu0 %v2391
    %3011 = vmatprep.subr.bf16.mxu0 0
    %3012 = vmatpush1.bf16.msra.mxu0 %v2392
    %3013 = vmatprep.subr.bf16.mxu0 0
    %3014 = vmatpush1.bf16.msra.mxu0 0
    %3015 = vmatprep.subr.bf16.mxu0 0
    %3016 = vmatpush1.bf16.msra.mxu0 0
    %3017 = vmatprep.subr.bf16.mxu0 0
    %3018 = vmatpush1.bf16.msra.mxu0 0
    %3019 = vmatprep.subr.bf16.mxu0 0
    %3020 = vmatpush1.bf16.msra.mxu0 0
    %3021 = vmatprep.subr.bf16.mxu0 0
    %3022 = vmatpush1.bf16.msra.mxu0 0
    %3023 = vmatprep.subr.bf16.mxu0 0
    %3024 = vmatpush1.bf16.msra.mxu0 0
    %3025 = vmatprep.subr.bf16.mxu0 0
    %3026 = vmatpush1.bf16.msra.mxu0 0
    %3027 = vmatprep.subr.bf16.mxu0 0
    %3028 = vmatpush1.bf16.msra.mxu0 0
    %3029 = vmatprep.mubr.bf16.mxu0 0
    %3030 = vmatmul.mubr.bf16.gmra.mrb[0].mxu0 %v2996
    %v3031 = vpop.f32.mrb[0].mxu0
    %v3032 = vadd.f32 0.0, %v3031
    %v3033 = vpop.f32.mrb[0].mxu0
    %v3034 = vpop.f32.mrb[0].mxu0
    %v3035 = vpop.f32.mrb[0].mxu0
    %3036 = vdwg.mxu0
    %v3037 = vpack.c.bf16 %v3032, %v3032
    %3038 = vmatprep.subr.bf16.mxu0 %v1861
    %3039 = vmatpush1.bf16.msra.mxu0 %v1860
    %3040 = vmatprep.subr.bf16.mxu0 %v1864
    %3041 = vmatpush1.bf16.msra.mxu0 %v1863
    %3042 = vmatprep.subr.bf16.mxu0 %v1867
    %3043 = vmatpush1.bf16.msra.mxu0 %v1866
    %3044 = vmatprep.subr.bf16.mxu0 %v1870
    %3045 = vmatpush1.bf16.msra.mxu0 %v1869
    %3046 = vmatprep.subr.bf16.mxu0 %v1873
    %3047 = vmatpush1.bf16.msra.mxu0 %v1872
    %3048 = vmatprep.subr.bf16.mxu0 %v1876
    %3049 = vmatpush1.bf16.msra.mxu0 %v1875
    %3050 = vmatprep.subr.bf16.mxu0 %v1879
    %3051 = vmatpush1.bf16.msra.mxu0 %v1878
    %3052 = vmatprep.subr.bf16.mxu0 %v1882
    %3053 = vmatpush1.bf16.msra.mxu0 %v1881
    %3054 = vmatprep.subr.bf16.mxu0 0
    %3055 = vmatpush1.bf16.msra.mxu0 0
    %3056 = vmatprep.subr.bf16.mxu0 0
    %3057 = vmatpush1.bf16.msra.mxu0 0
    %3058 = vmatprep.subr.bf16.mxu0 0
    %3059 = vmatpush1.bf16.msra.mxu0 0
    %3060 = vmatprep.subr.bf16.mxu0 0
    %3061 = vmatpush1.bf16.msra.mxu0 0
    %3062 = vmatprep.subr.bf16.mxu0 0
    %3063 = vmatpush1.bf16.msra.mxu0 0
    %3064 = vmatprep.subr.bf16.mxu0 0
    %3065 = vmatpush1.bf16.msra.mxu0 0
    %3066 = vmatprep.subr.bf16.mxu0 0
    %3067 = vmatpush1.bf16.msra.mxu0 0
    %3068 = vmatprep.subr.bf16.mxu0 0
    %3069 = vmatpush1.bf16.msra.mxu0 0
    %3070 = vmatprep.mubr.bf16.mxu0 0
    %3071 = vmatmul.mubr.bf16.gmra.mrb[0].mxu0 %v3037
    %v3072 = vpop.f32.mrb[0].mxu0
    %v3073 = vadd.f32 %v1768, %v3072
    %v3074 = vpop.f32.mrb[0].mxu0
    %v3075 = vadd.f32 %v1772, %v3074
    %v3076 = vpop.f32.mrb[0].mxu0
    %v3077 = vpop.f32.mrb[0].mxu0
    %3078 = vdwg.mxu0
    %3079 = vmatprep.subr.bf16.mxu0 0
    %3080 = vmatpush1.bf16.msra.mxu0 %v1862
    %3081 = vmatprep.subr.bf16.mxu0 0
    %3082 = vmatpush1.bf16.msra.mxu0 %v1865
    %3083 = vmatprep.subr.bf16.mxu0 0
    %3084 = vmatpush1.bf16.msra.mxu0 %v1868
    %3085 = vmatprep.subr.bf16.mxu0 0
    %3086 = vmatpush1.bf16.msra.mxu0 %v1871
    %3087 = vmatprep.subr.bf16.mxu0 0
    %3088 = vmatpush1.bf16.msra.mxu0 %v1874
    %3089 = vmatprep.subr.bf16.mxu0 0
    %3090 = vmatpush1.bf16.msra.mxu0 %v1877
    %3091 = vmatprep.subr.bf16.mxu0 0
    %3092 = vmatpush1.bf16.msra.mxu0 %v1880
    %3093 = vmatprep.subr.bf16.mxu0 0
    %3094 = vmatpush1.bf16.msra.mxu0 %v1883
    %3095 = vmatprep.subr.bf16.mxu0 0
    %3096 = vmatpush1.bf16.msra.mxu0 0
    %3097 = vmatprep.subr.bf16.mxu0 0
    %3098 = vmatpush1.bf16.msra.mxu0 0
    %3099 = vmatprep.subr.bf16.mxu0 0
    %3100 = vmatpush1.bf16.msra.mxu0 0
    %3101 = vmatprep.subr.bf16.mxu0 0
    %3102 = vmatpush1.bf16.msra.mxu0 0
    %3103 = vmatprep.subr.bf16.mxu0 0
    %3104 = vmatpush1.bf16.msra.mxu0 0
    %3105 = vmatprep.subr.bf16.mxu0 0
    %3106 = vmatpush1.bf16.msra.mxu0 0
    %3107 = vmatprep.subr.bf16.mxu0 0
    %3108 = vmatpush1.bf16.msra.mxu0 0
    %3109 = vmatprep.subr.bf16.mxu0 0
    %3110 = vmatpush1.bf16.msra.mxu0 0
    %3111 = vmatprep.mubr.bf16.mxu0 0
    %3112 = vmatmul.mubr.bf16.gmra.mrb[0].mxu0 %v3037
    %v3113 = vpop.f32.mrb[0].mxu0
    %v3114 = vadd.f32 %v1776, %v3113
    %v3115 = vpop.f32.mrb[0].mxu0
    %v3116 = vpop.f32.mrb[0].mxu0
    %v3117 = vpop.f32.mrb[0].mxu0
    %3118 = vdwg.mxu0
    %3119 = vmatprep.subr.bf16.mxu0 %v2071
    %3120 = vmatpush1.bf16.msra.mxu0 %v2070
    %3121 = vmatprep.subr.bf16.mxu0 %v2074
    %3122 = vmatpush1.bf16.msra.mxu0 %v2073
    %3123 = vmatprep.subr.bf16.mxu0 %v2077
    %3124 = vmatpush1.bf16.msra.mxu0 %v2076
    %3125 = vmatprep.subr.bf16.mxu0 %v2080
    %3126 = vmatpush1.bf16.msra.mxu0 %v2079
    %3127 = vmatprep.subr.bf16.mxu0 %v2083
    %3128 = vmatpush1.bf16.msra.mxu0 %v2082
    %3129 = vmatprep.subr.bf16.mxu0 %v2086
    %3130 = vmatpush1.bf16.msra.mxu0 %v2085
    %3131 = vmatprep.subr.bf16.mxu0 %v2089
    %3132 = vmatpush1.bf16.msra.mxu0 %v2088
    %3133 = vmatprep.subr.bf16.mxu0 %v2092
    %3134 = vmatpush1.bf16.msra.mxu0 %v2091
    %3135 = vmatprep.subr.bf16.mxu0 0
    %3136 = vmatpush1.bf16.msra.mxu0 0
    %3137 = vmatprep.subr.bf16.mxu0 0
    %3138 = vmatpush1.bf16.msra.mxu0 0
    %3139 = vmatprep.subr.bf16.mxu0 0
    %3140 = vmatpush1.bf16.msra.mxu0 0
    %3141 = vmatprep.subr.bf16.mxu0 0
    %3142 = vmatpush1.bf16.msra.mxu0 0
    %3143 = vmatprep.subr.bf16.mxu0 0
    %3144 = vmatpush1.bf16.msra.mxu0 0
    %3145 = vmatprep.subr.bf16.mxu0 0
    %3146 = vmatpush1.bf16.msra.mxu0 0
    %3147 = vmatprep.subr.bf16.mxu0 0
    %3148 = vmatpush1.bf16.msra.mxu0 0
    %3149 = vmatprep.subr.bf16.mxu0 0
    %3150 = vmatpush1.bf16.msra.mxu0 0
    %3151 = vmatprep.mubr.bf16.mxu0 0
    %3152 = vmatmul.mubr.bf16.gmra.mrb[0].mxu0 %v2924
    %v3153 = vpop.f32.mrb[0].mxu0
    %v3154 = vadd.f32 0.0, %v3153
    %v3155 = vpop.f32.mrb[0].mxu0
    %v3156 = vadd.f32 0.0, %v3155
    %v3157 = vpop.f32.mrb[0].mxu0
    %v3158 = vpop.f32.mrb[0].mxu0
    %3159 = vdwg.mxu0
    %3160 = vmatprep.subr.bf16.mxu0 0
    %3161 = vmatpush1.bf16.msra.mxu0 %v2072
    %3162 = vmatprep.subr.bf16.mxu0 0
    %3163 = vmatpush1.bf16.msra.mxu0 %v2075
    %3164 = vmatprep.subr.bf16.mxu0 0
    %3165 = vmatpush1.bf16.msra.mxu0 %v2078
    %3166 = vmatprep.subr.bf16.mxu0 0
    %3167 = vmatpush1.bf16.msra.mxu0 %v2081
    %3168 = vmatprep.subr.bf16.mxu0 0
    %3169 = vmatpush1.bf16.msra.mxu0 %v2084
    %3170 = vmatprep.subr.bf16.mxu0 0
    %3171 = vmatpush1.bf16.msra.mxu0 %v2087
    %3172 = vmatprep.subr.bf16.mxu0 0
    %3173 = vmatpush1.bf16.msra.mxu0 %v2090
    %3174 = vmatprep.subr.bf16.mxu0 0
    %3175 = vmatpush1.bf16.msra.mxu0 %v2093
    %3176 = vmatprep.subr.bf16.mxu0 0
    %3177 = vmatpush1.bf16.msra.mxu0 0
    %3178 = vmatprep.subr.bf16.mxu0 0
    %3179 = vmatpush1.bf16.msra.mxu0 0
    %3180 = vmatprep.subr.bf16.mxu0 0
    %3181 = vmatpush1.bf16.msra.mxu0 0
    %3182 = vmatprep.subr.bf16.mxu0 0
    %3183 = vmatpush1.bf16.msra.mxu0 0
    %3184 = vmatprep.subr.bf16.mxu0 0
    %3185 = vmatpush1.bf16.msra.mxu0 0
    %3186 = vmatprep.subr.bf16.mxu0 0
    %3187 = vmatpush1.bf16.msra.mxu0 0
    %3188 = vmatprep.subr.bf16.mxu0 0
    %3189 = vmatpush1.bf16.msra.mxu0 0
    %3190 = vmatprep.subr.bf16.mxu0 0
    %3191 = vmatpush1.bf16.msra.mxu0 0
    %3192 = vmatprep.mubr.bf16.mxu0 0
    %3193 = vmatmul.mubr.bf16.gmra.mrb[0].mxu0 %v2924
    %v3194 = vpop.f32.mrb[0].mxu0
    %v3195 = vadd.f32 0.0, %v3194
    %v3196 = vpop.f32.mrb[0].mxu0
    %v3197 = vpop.f32.mrb[0].mxu0
    %v3198 = vpop.f32.mrb[0].mxu0
    %3199 = vdwg.mxu0
    %v3200 = vadd.f32 %v3073, %v3154
    %v3201 = vxor.u32 %v3200, 2147483648
    %v3202 = vmul.f32 %v3201, 1.442695
    %v3203 = vpow.pop %v3202
    %v3204 = vadd.f32 %v3203, 1.0
    %v3205 = vrcp.pop %v3204
    %v3206 = vmul.f32 1.0, %v3205
    %v3207 = vadd.f32 %v3075, %v3156
    %v3208 = vxor.u32 %v3207, 2147483648
    %v3209 = vmul.f32 %v3208, 1.442695
    %v3210 = vpow.pop %v3209
    %v3211 = vadd.f32 %v3210, 1.0
    %v3212 = vrcp.pop %v3211
    %v3213 = vmul.f32 1.0, %v3212
    %v3214 = vadd.f32 %v3195, %v2217
    %v3215 = vmul.f32 %v3206, %v3214
    %v3216 = vadd.f32 %v3114, %v3215
    %v3217 = vtanh.pop %v3216
    %v3218 = vsub.f32 1.0, %v3213
    %v3219 = vmul.f32 %v3218, %v3217
    %v3220 = vmul.f32 %v3213, %v2923
    %v3221 = vadd.f32 %v3219, %v3220
    %v3222 = vpack.c.bf16 %v3221, %v3221
    %3223 = vmatprep.subr.bf16.mxu0 0
    %3224 = vmatpush1.bf16.msra.mxu0 %v2266
    %3225 = vmatprep.subr.bf16.mxu0 0
    %3226 = vmatpush1.bf16.msra.mxu0 %v2267
    %3227 = vmatprep.subr.bf16.mxu0 0
    %3228 = vmatpush1.bf16.msra.mxu0 %v2268
    %3229 = vmatprep.subr.bf16.mxu0 0
    %3230 = vmatpush1.bf16.msra.mxu0 %v2269
    %3231 = vmatprep.subr.bf16.mxu0 0
    %3232 = vmatpush1.bf16.msra.mxu0 %v2270
    %3233 = vmatprep.subr.bf16.mxu0 0
    %3234 = vmatpush1.bf16.msra.mxu0 %v2271
    %3235 = vmatprep.subr.bf16.mxu0 0
    %3236 = vmatpush1.bf16.msra.mxu0 %v2272
    %3237 = vmatprep.subr.bf16.mxu0 0
    %3238 = vmatpush1.bf16.msra.mxu0 %v2273
    %3239 = vmatprep.subr.bf16.mxu0 0
    %3240 = vmatpush1.bf16.msra.mxu0 0
    %3241 = vmatprep.subr.bf16.mxu0 0
    %3242 = vmatpush1.bf16.msra.mxu0 0
    %3243 = vmatprep.subr.bf16.mxu0 0
    %3244 = vmatpush1.bf16.msra.mxu0 0
    %3245 = vmatprep.subr.bf16.mxu0 0
    %3246 = vmatpush1.bf16.msra.mxu0 0
    %3247 = vmatprep.subr.bf16.mxu0 0
    %3248 = vmatpush1.bf16.msra.mxu0 0
    %3249 = vmatprep.subr.bf16.mxu0 0
    %3250 = vmatpush1.bf16.msra.mxu0 0
    %3251 = vmatprep.subr.bf16.mxu0 0
    %3252 = vmatpush1.bf16.msra.mxu0 0
    %3253 = vmatprep.subr.bf16.mxu0 0
    %3254 = vmatpush1.bf16.msra.mxu0 0
    %3255 = vmatprep.mubr.bf16.mxu0 0
    %3256 = vmatmul.mubr.bf16.gmra.mrb[0].mxu0 %v3222
    %v3257 = vpop.f32.mrb[0].mxu0
    %v3258 = vadd.f32 %v2232, %v3257
    %v3259 = vpop.f32.mrb[0].mxu0
    %v3260 = vpop.f32.mrb[0].mxu0
    %v3261 = vpop.f32.mrb[0].mxu0
    %3262 = vdwg.mxu0
    %3263 = vmax.xlane.f32.xlu0 %v3258
    %v3264 = vpop.xlane.xlu0 %3263
    %v3265 = vsub.f32 %v3258, %v3264
    %v3266 = vmul.f32 %v3265, 1.442695
    %v3267 = vpow.pop %v3266
    %3268 = vadd.xlane.f32.xlu0 %v3267
    %v3269 = vpop.xlane.xlu0 %3268
    %v3270 = vlog2.pop %v3269
    %v3271 = vmul.f32 %v3270, 0.6931472
    %v3272 = vsub.f32 %v3265, %v3271
    %s3273 = scalar_lea.vmem %s13, 24
    %3274 = vst [vmem:[%s3273] sm:$0xff] %v3272
    %vm3275 = vcmp.ge.f32.partialorder %v3258, %v3264
    %v3276 = vsel %vm3275, %v151, 128
    %v3277 = vand.u32 %v3276, 65535
    %v3278 = vshra.s32 %v3276, 16
    %v3279 = vcvt.s32.f32 %v3277
    %v3280 = vcvt.s32.f32 %v3278
    %3281 = vmin.xlane.f32.xlu0 %v3280
    %v3282 = vpop.xlane.xlu0 %3281
    %vm3283 = vcmp.eq.f32.partialorder %v3280, %v3282
    %v3284 = vsel %vm3283, %v3279, inf
    %3285 = vmin.xlane.f32.xlu0 %v3284
    %v3286 = vpop.xlane.xlu0 %3285
    %v3287 = vcvt.f32.s32 %v3286
    %v3288 = vcvt.f32.s32 %v3282
    %v3289 = vshll.u32 %v3288, 16
    %v3290 = vadd.s32 %v3289, %v3287
    %vm3291 = vcmp.eq.s32.totalorder %v151, %v3290
    %v3292 = vsel %vm3291, 1, 0
    %v3293 = vcvt.s32.f32 %v3292
    %v3294 = vpack.c.bf16 %v3293, %v3293
    %3295 = vmatprep.subr.bf16.mxu0 0
    %3296 = vmatpush1.bf16.msra.mxu0 %v2385
    %3297 = vmatprep.subr.bf16.mxu0 0
    %3298 = vmatpush1.bf16.msra.mxu0 %v2386
    %3299 = vmatprep.subr.bf16.mxu0 0
    %3300 = vmatpush1.bf16.msra.mxu0 %v2387
    %3301 = vmatprep.subr.bf16.mxu0 0
    %3302 = vmatpush1.bf16.msra.mxu0 %v2388
    %3303 = vmatprep.subr.bf16.mxu0 0
    %3304 = vmatpush1.bf16.msra.mxu0 %v2389
    %3305 = vmatprep.subr.bf16.mxu0 0
    %3306 = vmatpush1.bf16.msra.mxu0 %v2390
    %3307 = vmatprep.subr.bf16.mxu0 0
    %3308 = vmatpush1.bf16.msra.mxu0 %v2391
    %3309 = vmatprep.subr.bf16.mxu0 0
    %3310 = vmatpush1.bf16.msra.mxu0 %v2392
    %3311 = vmatprep.subr.bf16.mxu0 0
    %3312 = vmatpush1.bf16.msra.mxu0 0
    %3313 = vmatprep.subr.bf16.mxu0 0
    %3314 = vmatpush1.bf16.msra.mxu0 0
    %3315 = vmatprep.subr.bf16.mxu0 0
    %3316 = vmatpush1.bf16.msra.mxu0 0
    %3317 = vmatprep.subr.bf16.mxu0 0
    %3318 = vmatpush1.bf16.msra.mxu0 0
    %3319 = vmatprep.subr.bf16.mxu0 0
    %3320 = vmatpush1.bf16.msra.mxu0 0
    %3321 = vmatprep.subr.bf16.mxu0 0
    %3322 = vmatpush1.bf16.msra.mxu0 0
    %3323 = vmatprep.subr.bf16.mxu0 0
    %3324 = vmatpush1.bf16.msra.mxu0 0
    %3325 = vmatprep.subr.bf16.mxu0 0
    %3326 = vmatpush1.bf16.msra.mxu0 0
    %3327 = vmatprep.mubr.bf16.mxu0 0
    %3328 = vmatmul.mubr.bf16.gmra.mrb[0].mxu0 %v3294
    %v3329 = vpop.f32.mrb[0].mxu0
    %v3330 = vadd.f32 0.0, %v3329
    %v3331 = vpop.f32.mrb[0].mxu0
    %v3332 = vpop.f32.mrb[0].mxu0
    %v3333 = vpop.f32.mrb[0].mxu0
    %3334 = vdwg.mxu0
    %v3335 = vpack.c.bf16 %v3330, %v3330
    %3336 = vmatprep.subr.bf16.mxu0 %v1861
    %3337 = vmatpush1.bf16.msra.mxu0 %v1860
    %3338 = vmatprep.subr.bf16.mxu0 %v1864
    %3339 = vmatpush1.bf16.msra.mxu0 %v1863
    %3340 = vmatprep.subr.bf16.mxu0 %v1867
    %3341 = vmatpush1.bf16.msra.mxu0 %v1866
    %3342 = vmatprep.subr.bf16.mxu0 %v1870
    %3343 = vmatpush1.bf16.msra.mxu0 %v1869
    %3344 = vmatprep.subr.bf16.mxu0 %v1873
    %3345 = vmatpush1.bf16.msra.mxu0 %v1872
    %3346 = vmatprep.subr.bf16.mxu0 %v1876
    %3347 = vmatpush1.bf16.msra.mxu0 %v1875
    %3348 = vmatprep.subr.bf16.mxu0 %v1879
    %3349 = vmatpush1.bf16.msra.mxu0 %v1878
    %3350 = vmatprep.subr.bf16.mxu0 %v1882
    %3351 = vmatpush1.bf16.msra.mxu0 %v1881
    %3352 = vmatprep.subr.bf16.mxu0 0
    %3353 = vmatpush1.bf16.msra.mxu0 0
    %3354 = vmatprep.subr.bf16.mxu0 0
    %3355 = vmatpush1.bf16.msra.mxu0 0
    %3356 = vmatprep.subr.bf16.mxu0 0
    %3357 = vmatpush1.bf16.msra.mxu0 0
    %3358 = vmatprep.subr.bf16.mxu0 0
    %3359 = vmatpush1.bf16.msra.mxu0 0
    %3360 = vmatprep.subr.bf16.mxu0 0
    %3361 = vmatpush1.bf16.msra.mxu0 0
    %3362 = vmatprep.subr.bf16.mxu0 0
    %3363 = vmatpush1.bf16.msra.mxu0 0
    %3364 = vmatprep.subr.bf16.mxu0 0
    %3365 = vmatpush1.bf16.msra.mxu0 0
    %3366 = vmatprep.subr.bf16.mxu0 0
    %3367 = vmatpush1.bf16.msra.mxu0 0
    %3368 = vmatprep.mubr.bf16.mxu0 0
    %3369 = vmatmul.mubr.bf16.gmra.mrb[0].mxu0 %v3335
    %v3370 = vpop.f32.mrb[0].mxu0
    %v3371 = vadd.f32 %v1768, %v3370
    %v3372 = vpop.f32.mrb[0].mxu0
    %v3373 = vadd.f32 %v1772, %v3372
    %v3374 = vpop.f32.mrb[0].mxu0
    %v3375 = vpop.f32.mrb[0].mxu0
    %3376 = vdwg.mxu0
    %3377 = vmatprep.subr.bf16.mxu0 0
    %3378 = vmatpush1.bf16.msra.mxu0 %v1862
    %3379 = vmatprep.subr.bf16.mxu0 0
    %3380 = vmatpush1.bf16.msra.mxu0 %v1865
    %3381 = vmatprep.subr.bf16.mxu0 0
    %3382 = vmatpush1.bf16.msra.mxu0 %v1868
    %3383 = vmatprep.subr.bf16.mxu0 0
    %3384 = vmatpush1.bf16.msra.mxu0 %v1871
    %3385 = vmatprep.subr.bf16.mxu0 0
    %3386 = vmatpush1.bf16.msra.mxu0 %v1874
    %3387 = vmatprep.subr.bf16.mxu0 0
    %3388 = vmatpush1.bf16.msra.mxu0 %v1877
    %3389 = vmatprep.subr.bf16.mxu0 0
    %3390 = vmatpush1.bf16.msra.mxu0 %v1880
    %3391 = vmatprep.subr.bf16.mxu0 0
    %3392 = vmatpush1.bf16.msra.mxu0 %v1883
    %3393 = vmatprep.subr.bf16.mxu0 0
    %3394 = vmatpush1.bf16.msra.mxu0 0
    %3395 = vmatprep.subr.bf16.mxu0 0
    %3396 = vmatpush1.bf16.msra.mxu0 0
    %3397 = vmatprep.subr.bf16.mxu0 0
    %3398 = vmatpush1.bf16.msra.mxu0 0
    %3399 = vmatprep.subr.bf16.mxu0 0
    %3400 = vmatpush1.bf16.msra.mxu0 0
    %3401 = vmatprep.subr.bf16.mxu0 0
    %3402 = vmatpush1.bf16.msra.mxu0 0
    %3403 = vmatprep.subr.bf16.mxu0 0
    %3404 = vmatpush1.bf16.msra.mxu0 0
    %3405 = vmatprep.subr.bf16.mxu0 0
    %3406 = vmatpush1.bf16.msra.mxu0 0
    %3407 = vmatprep.subr.bf16.mxu0 0
    %3408 = vmatpush1.bf16.msra.mxu0 0
    %3409 = vmatprep.mubr.bf16.mxu0 0
    %3410 = vmatmul.mubr.bf16.gmra.mrb[0].mxu0 %v3335
    %v3411 = vpop.f32.mrb[0].mxu0
    %v3412 = vadd.f32 %v1776, %v3411
    %v3413 = vpop.f32.mrb[0].mxu0
    %v3414 = vpop.f32.mrb[0].mxu0
    %v3415 = vpop.f32.mrb[0].mxu0
    %3416 = vdwg.mxu0
    %3417 = vmatprep.subr.bf16.mxu0 %v2071
    %3418 = vmatpush1.bf16.msra.mxu0 %v2070
    %3419 = vmatprep.subr.bf16.mxu0 %v2074
    %3420 = vmatpush1.bf16.msra.mxu0 %v2073
    %3421 = vmatprep.subr.bf16.mxu0 %v2077
    %3422 = vmatpush1.bf16.msra.mxu0 %v2076
    %3423 = vmatprep.subr.bf16.mxu0 %v2080
    %3424 = vmatpush1.bf16.msra.mxu0 %v2079
    %3425 = vmatprep.subr.bf16.mxu0 %v2083
    %3426 = vmatpush1.bf16.msra.mxu0 %v2082
    %3427 = vmatprep.subr.bf16.mxu0 %v2086
    %3428 = vmatpush1.bf16.msra.mxu0 %v2085
    %3429 = vmatprep.subr.bf16.mxu0 %v2089
    %3430 = vmatpush1.bf16.msra.mxu0 %v2088
    %3431 = vmatprep.subr.bf16.mxu0 %v2092
    %3432 = vmatpush1.bf16.msra.mxu0 %v2091
    %3433 = vmatprep.subr.bf16.mxu0 0
    %3434 = vmatpush1.bf16.msra.mxu0 0
    %3435 = vmatprep.subr.bf16.mxu0 0
    %3436 = vmatpush1.bf16.msra.mxu0 0
    %3437 = vmatprep.subr.bf16.mxu0 0
    %3438 = vmatpush1.bf16.msra.mxu0 0
    %3439 = vmatprep.subr.bf16.mxu0 0
    %3440 = vmatpush1.bf16.msra.mxu0 0
    %3441 = vmatprep.subr.bf16.mxu0 0
    %3442 = vmatpush1.bf16.msra.mxu0 0
    %3443 = vmatprep.subr.bf16.mxu0 0
    %3444 = vmatpush1.bf16.msra.mxu0 0
    %3445 = vmatprep.subr.bf16.mxu0 0
    %3446 = vmatpush1.bf16.msra.mxu0 0
    %3447 = vmatprep.subr.bf16.mxu0 0
    %3448 = vmatpush1.bf16.msra.mxu0 0
    %3449 = vmatprep.mubr.bf16.mxu0 0
    %3450 = vmatmul.mubr.bf16.gmra.mrb[0].mxu0 %v3222
    %v3451 = vpop.f32.mrb[0].mxu0
    %v3452 = vadd.f32 0.0, %v3451
    %v3453 = vpop.f32.mrb[0].mxu0
    %v3454 = vadd.f32 0.0, %v3453
    %v3455 = vpop.f32.mrb[0].mxu0
    %v3456 = vpop.f32.mrb[0].mxu0
    %3457 = vdwg.mxu0
    %3458 = vmatprep.subr.bf16.mxu0 0
    %3459 = vmatpush1.bf16.msra.mxu0 %v2072
    %3460 = vmatprep.subr.bf16.mxu0 0
    %3461 = vmatpush1.bf16.msra.mxu0 %v2075
    %3462 = vmatprep.subr.bf16.mxu0 0
    %3463 = vmatpush1.bf16.msra.mxu0 %v2078
    %3464 = vmatprep.subr.bf16.mxu0 0
    %3465 = vmatpush1.bf16.msra.mxu0 %v2081
    %3466 = vmatprep.subr.bf16.mxu0 0
    %3467 = vmatpush1.bf16.msra.mxu0 %v2084
    %3468 = vmatprep.subr.bf16.mxu0 0
    %3469 = vmatpush1.bf16.msra.mxu0 %v2087
    %3470 = vmatprep.subr.bf16.mxu0 0
    %3471 = vmatpush1.bf16.msra.mxu0 %v2090
    %3472 = vmatprep.subr.bf16.mxu0 0
    %3473 = vmatpush1.bf16.msra.mxu0 %v2093
    %3474 = vmatprep.subr.bf16.mxu0 0
    %3475 = vmatpush1.bf16.msra.mxu0 0
    %3476 = vmatprep.subr.bf16.mxu0 0
    %3477 = vmatpush1.bf16.msra.mxu0 0
    %3478 = vmatprep.subr.bf16.mxu0 0
    %3479 = vmatpush1.bf16.msra.mxu0 0
    %3480 = vmatprep.subr.bf16.mxu0 0
    %3481 = vmatpush1.bf16.msra.mxu0 0
    %3482 = vmatprep.subr.bf16.mxu0 0
    %3483 = vmatpush1.bf16.msra.mxu0 0
    %3484 = vmatprep.subr.bf16.mxu0 0
    %3485 = vmatpush1.bf16.msra.mxu0 0
    %3486 = vmatprep.subr.bf16.mxu0 0
    %3487 = vmatpush1.bf16.msra.mxu0 0
    %3488 = vmatprep.subr.bf16.mxu0 0
    %3489 = vmatpush1.bf16.msra.mxu0 0
    %3490 = vmatprep.mubr.bf16.mxu0 0
    %3491 = vmatmul.mubr.bf16.gmra.mrb[0].mxu0 %v3222
    %v3492 = vpop.f32.mrb[0].mxu0
    %v3493 = vadd.f32 0.0, %v3492
    %v3494 = vpop.f32.mrb[0].mxu0
    %v3495 = vpop.f32.mrb[0].mxu0
    %v3496 = vpop.f32.mrb[0].mxu0
    %3497 = vdwg.mxu0
    %v3498 = vadd.f32 %v3371, %v3452
    %v3499 = vxor.u32 %v3498, 2147483648
    %v3500 = vmul.f32 %v3499, 1.442695
    %v3501 = vpow.pop %v3500
    %v3502 = vadd.f32 %v3501, 1.0
    %v3503 = vrcp.pop %v3502
    %v3504 = vmul.f32 1.0, %v3503
    %v3505 = vadd.f32 %v3373, %v3454
    %v3506 = vxor.u32 %v3505, 2147483648
    %v3507 = vmul.f32 %v3506, 1.442695
    %v3508 = vpow.pop %v3507
    %v3509 = vadd.f32 %v3508, 1.0
    %v3510 = vrcp.pop %v3509
    %v3511 = vmul.f32 1.0, %v3510
    %v3512 = vadd.f32 %v3493, %v2217
    %v3513 = vmul.f32 %v3504, %v3512
    %v3514 = vadd.f32 %v3412, %v3513
    %v3515 = vtanh.pop %v3514
    %v3516 = vsub.f32 1.0, %v3511
    %v3517 = vmul.f32 %v3516, %v3515
    %v3518 = vmul.f32 %v3511, %v3221
    %v3519 = vadd.f32 %v3517, %v3518
    %v3520 = vpack.c.bf16 %v3519, %v3519
    %3521 = vmatprep.subr.bf16.mxu0 0
    %3522 = vmatpush1.bf16.msra.mxu0 %v2266
    %3523 = vmatprep.subr.bf16.mxu0 0
    %3524 = vmatpush1.bf16.msra.mxu0 %v2267
    %3525 = vmatprep.subr.bf16.mxu0 0
    %3526 = vmatpush1.bf16.msra.mxu0 %v2268
    %3527 = vmatprep.subr.bf16.mxu0 0
    %3528 = vmatpush1.bf16.msra.mxu0 %v2269
    %3529 = vmatprep.subr.bf16.mxu0 0
    %3530 = vmatpush1.bf16.msra.mxu0 %v2270
    %3531 = vmatprep.subr.bf16.mxu0 0
    %3532 = vmatpush1.bf16.msra.mxu0 %v2271
    %3533 = vmatprep.subr.bf16.mxu0 0
    %3534 = vmatpush1.bf16.msra.mxu0 %v2272
    %3535 = vmatprep.subr.bf16.mxu0 0
    %3536 = vmatpush1.bf16.msra.mxu0 %v2273
    %3537 = vmatprep.subr.bf16.mxu0 0
    %3538 = vmatpush1.bf16.msra.mxu0 0
    %3539 = vmatprep.subr.bf16.mxu0 0
    %3540 = vmatpush1.bf16.msra.mxu0 0
    %3541 = vmatprep.subr.bf16.mxu0 0
    %3542 = vmatpush1.bf16.msra.mxu0 0
    %3543 = vmatprep.subr.bf16.mxu0 0
    %3544 = vmatpush1.bf16.msra.mxu0 0
    %3545 = vmatprep.subr.bf16.mxu0 0
    %3546 = vmatpush1.bf16.msra.mxu0 0
    %3547 = vmatprep.subr.bf16.mxu0 0
    %3548 = vmatpush1.bf16.msra.mxu0 0
    %3549 = vmatprep.subr.bf16.mxu0 0
    %3550 = vmatpush1.bf16.msra.mxu0 0
    %3551 = vmatprep.subr.bf16.mxu0 0
    %3552 = vmatpush1.bf16.msra.mxu0 0
    %3553 = vmatprep.mubr.bf16.mxu0 0
    %3554 = vmatmul.mubr.bf16.gmra.mrb[0].mxu0 %v3520
    %v3555 = vpop.f32.mrb[0].mxu0
    %v3556 = vadd.f32 %v2232, %v3555
    %v3557 = vpop.f32.mrb[0].mxu0
    %v3558 = vpop.f32.mrb[0].mxu0
    %v3559 = vpop.f32.mrb[0].mxu0
    %3560 = vdwg.mxu0
    %3561 = vmax.xlane.f32.xlu0 %v3556
    %v3562 = vpop.xlane.xlu0 %3561
    %v3563 = vsub.f32 %v3556, %v3562
    %v3564 = vmul.f32 %v3563, 1.442695
    %v3565 = vpow.pop %v3564
    %3566 = vadd.xlane.f32.xlu0 %v3565
    %v3567 = vpop.xlane.xlu0 %3566
    %v3568 = vlog2.pop %v3567
    %v3569 = vmul.f32 %v3568, 0.6931472
    %v3570 = vsub.f32 %v3563, %v3569
    %s3571 = scalar_lea.vmem %s13, 32
    %3572 = vst [vmem:[%s3571] sm:$0xff] %v3570
    %vm3573 = vcmp.ge.f32.partialorder %v3556, %v3562
    %v3574 = vsel %vm3573, %v151, 128
    %v3575 = vand.u32 %v3574, 65535
    %v3576 = vshra.s32 %v3574, 16
    %v3577 = vcvt.s32.f32 %v3575
    %v3578 = vcvt.s32.f32 %v3576
    %3579 = vmin.xlane.f32.xlu0 %v3578
    %v3580 = vpop.xlane.xlu0 %3579
    %vm3581 = vcmp.eq.f32.partialorder %v3578, %v3580
    %v3582 = vsel %vm3581, %v3577, inf
    %3583 = vmin.xlane.f32.xlu0 %v3582
    %v3584 = vpop.xlane.xlu0 %3583
    %v3585 = vcvt.f32.s32 %v3584
    %v3586 = vcvt.f32.s32 %v3580
    %v3587 = vshll.u32 %v3586, 16
    %v3588 = vadd.s32 %v3587, %v3585
    %vm3589 = vcmp.eq.s32.totalorder %v151, %v3588
    %v3590 = vsel %vm3589, 1, 0
    %v3591 = vcvt.s32.f32 %v3590
    %v3592 = vpack.c.bf16 %v3591, %v3591
    %3593 = vmatprep.subr.bf16.mxu0 0
    %3594 = vmatpush1.bf16.msra.mxu0 %v2385
    %3595 = vmatprep.subr.bf16.mxu0 0
    %3596 = vmatpush1.bf16.msra.mxu0 %v2386
    %3597 = vmatprep.subr.bf16.mxu0 0
    %3598 = vmatpush1.bf16.msra.mxu0 %v2387
    %3599 = vmatprep.subr.bf16.mxu0 0
    %3600 = vmatpush1.bf16.msra.mxu0 %v2388
    %3601 = vmatprep.subr.bf16.mxu0 0
    %3602 = vmatpush1.bf16.msra.mxu0 %v2389
    %3603 = vmatprep.subr.bf16.mxu0 0
    %3604 = vmatpush1.bf16.msra.mxu0 %v2390
    %3605 = vmatprep.subr.bf16.mxu0 0
    %3606 = vmatpush1.bf16.msra.mxu0 %v2391
    %3607 = vmatprep.subr.bf16.mxu0 0
    %3608 = vmatpush1.bf16.msra.mxu0 %v2392
    %3609 = vmatprep.subr.bf16.mxu0 0
    %3610 = vmatpush1.bf16.msra.mxu0 0
    %3611 = vmatprep.subr.bf16.mxu0 0
    %3612 = vmatpush1.bf16.msra.mxu0 0
    %3613 = vmatprep.subr.bf16.mxu0 0
    %3614 = vmatpush1.bf16.msra.mxu0 0
    %3615 = vmatprep.subr.bf16.mxu0 0
    %3616 = vmatpush1.bf16.msra.mxu0 0
    %3617 = vmatprep.subr.bf16.mxu0 0
    %3618 = vmatpush1.bf16.msra.mxu0 0
    %3619 = vmatprep.subr.bf16.mxu0 0
    %3620 = vmatpush1.bf16.msra.mxu0 0
    %3621 = vmatprep.subr.bf16.mxu0 0
    %3622 = vmatpush1.bf16.msra.mxu0 0
    %3623 = vmatprep.subr.bf16.mxu0 0
    %3624 = vmatpush1.bf16.msra.mxu0 0
    %3625 = vmatprep.mubr.bf16.mxu0 0
    %3626 = vmatmul.mubr.bf16.gmra.mrb[0].mxu0 %v3592
    %v3627 = vpop.f32.mrb[0].mxu0
    %v3628 = vadd.f32 0.0, %v3627
    %v3629 = vpop.f32.mrb[0].mxu0
    %v3630 = vpop.f32.mrb[0].mxu0
    %v3631 = vpop.f32.mrb[0].mxu0
    %3632 = vdwg.mxu0
    %v3633 = vpack.c.bf16 %v3628, %v3628
    %3634 = vmatprep.subr.bf16.mxu0 %v1861
    %3635 = vmatpush1.bf16.msra.mxu0 %v1860
    %3636 = vmatprep.subr.bf16.mxu0 %v1864
    %3637 = vmatpush1.bf16.msra.mxu0 %v1863
    %3638 = vmatprep.subr.bf16.mxu0 %v1867
    %3639 = vmatpush1.bf16.msra.mxu0 %v1866
    %3640 = vmatprep.subr.bf16.mxu0 %v1870
    %3641 = vmatpush1.bf16.msra.mxu0 %v1869
    %3642 = vmatprep.subr.bf16.mxu0 %v1873
    %3643 = vmatpush1.bf16.msra.mxu0 %v1872
    %3644 = vmatprep.subr.bf16.mxu0 %v1876
    %3645 = vmatpush1.bf16.msra.mxu0 %v1875
    %3646 = vmatprep.subr.bf16.mxu0 %v1879
    %3647 = vmatpush1.bf16.msra.mxu0 %v1878
    %3648 = vmatprep.subr.bf16.mxu0 %v1882
    %3649 = vmatpush1.bf16.msra.mxu0 %v1881
    %3650 = vmatprep.subr.bf16.mxu0 0
    %3651 = vmatpush1.bf16.msra.mxu0 0
    %3652 = vmatprep.subr.bf16.mxu0 0
    %3653 = vmatpush1.bf16.msra.mxu0 0
    %3654 = vmatprep.subr.bf16.mxu0 0
    %3655 = vmatpush1.bf16.msra.mxu0 0
    %3656 = vmatprep.subr.bf16.mxu0 0
    %3657 = vmatpush1.bf16.msra.mxu0 0
    %3658 = vmatprep.subr.bf16.mxu0 0
    %3659 = vmatpush1.bf16.msra.mxu0 0
    %3660 = vmatprep.subr.bf16.mxu0 0
    %3661 = vmatpush1.bf16.msra.mxu0 0
    %3662 = vmatprep.subr.bf16.mxu0 0
    %3663 = vmatpush1.bf16.msra.mxu0 0
    %3664 = vmatprep.subr.bf16.mxu0 0
    %3665 = vmatpush1.bf16.msra.mxu0 0
    %3666 = vmatprep.mubr.bf16.mxu0 0
    %3667 = vmatmul.mubr.bf16.gmra.mrb[0].mxu0 %v3633
    %v3668 = vpop.f32.mrb[0].mxu0
    %v3669 = vadd.f32 %v1768, %v3668
    %v3670 = vpop.f32.mrb[0].mxu0
    %v3671 = vadd.f32 %v1772, %v3670
    %v3672 = vpop.f32.mrb[0].mxu0
    %v3673 = vpop.f32.mrb[0].mxu0
    %3674 = vdwg.mxu0
    %3675 = vmatprep.subr.bf16.mxu0 0
    %3676 = vmatpush1.bf16.msra.mxu0 %v1862
    %3677 = vmatprep.subr.bf16.mxu0 0
    %3678 = vmatpush1.bf16.msra.mxu0 %v1865
    %3679 = vmatprep.subr.bf16.mxu0 0
    %3680 = vmatpush1.bf16.msra.mxu0 %v1868
    %3681 = vmatprep.subr.bf16.mxu0 0
    %3682 = vmatpush1.bf16.msra.mxu0 %v1871
    %3683 = vmatprep.subr.bf16.mxu0 0
    %3684 = vmatpush1.bf16.msra.mxu0 %v1874
    %3685 = vmatprep.subr.bf16.mxu0 0
    %3686 = vmatpush1.bf16.msra.mxu0 %v1877
    %3687 = vmatprep.subr.bf16.mxu0 0
    %3688 = vmatpush1.bf16.msra.mxu0 %v1880
    %3689 = vmatprep.subr.bf16.mxu0 0
    %3690 = vmatpush1.bf16.msra.mxu0 %v1883
    %3691 = vmatprep.subr.bf16.mxu0 0
    %3692 = vmatpush1.bf16.msra.mxu0 0
    %3693 = vmatprep.subr.bf16.mxu0 0
    %3694 = vmatpush1.bf16.msra.mxu0 0
    %3695 = vmatprep.subr.bf16.mxu0 0
    %3696 = vmatpush1.bf16.msra.mxu0 0
    %3697 = vmatprep.subr.bf16.mxu0 0
    %3698 = vmatpush1.bf16.msra.mxu0 0
    %3699 = vmatprep.subr.bf16.mxu0 0
    %3700 = vmatpush1.bf16.msra.mxu0 0
    %3701 = vmatprep.subr.bf16.mxu0 0
    %3702 = vmatpush1.bf16.msra.mxu0 0
    %3703 = vmatprep.subr.bf16.mxu0 0
    %3704 = vmatpush1.bf16.msra.mxu0 0
    %3705 = vmatprep.subr.bf16.mxu0 0
    %3706 = vmatpush1.bf16.msra.mxu0 0
    %3707 = vmatprep.mubr.bf16.mxu0 0
    %3708 = vmatmul.mubr.bf16.gmra.mrb[0].mxu0 %v3633
    %v3709 = vpop.f32.mrb[0].mxu0
    %v3710 = vadd.f32 %v1776, %v3709
    %v3711 = vpop.f32.mrb[0].mxu0
    %v3712 = vpop.f32.mrb[0].mxu0
    %v3713 = vpop.f32.mrb[0].mxu0
    %3714 = vdwg.mxu0
    %3715 = vmatprep.subr.bf16.mxu0 %v2071
    %3716 = vmatpush1.bf16.msra.mxu0 %v2070
    %3717 = vmatprep.subr.bf16.mxu0 %v2074
    %3718 = vmatpush1.bf16.msra.mxu0 %v2073
    %3719 = vmatprep.subr.bf16.mxu0 %v2077
    %3720 = vmatpush1.bf16.msra.mxu0 %v2076
    %3721 = vmatprep.subr.bf16.mxu0 %v2080
    %3722 = vmatpush1.bf16.msra.mxu0 %v2079
    %3723 = vmatprep.subr.bf16.mxu0 %v2083
    %3724 = vmatpush1.bf16.msra.mxu0 %v2082
    %3725 = vmatprep.subr.bf16.mxu0 %v2086
    %3726 = vmatpush1.bf16.msra.mxu0 %v2085
    %3727 = vmatprep.subr.bf16.mxu0 %v2089
    %3728 = vmatpush1.bf16.msra.mxu0 %v2088
    %3729 = vmatprep.subr.bf16.mxu0 %v2092
    %3730 = vmatpush1.bf16.msra.mxu0 %v2091
    %3731 = vmatprep.subr.bf16.mxu0 0
    %3732 = vmatpush1.bf16.msra.mxu0 0
    %3733 = vmatprep.subr.bf16.mxu0 0
    %3734 = vmatpush1.bf16.msra.mxu0 0
    %3735 = vmatprep.subr.bf16.mxu0 0
    %3736 = vmatpush1.bf16.msra.mxu0 0
    %3737 = vmatprep.subr.bf16.mxu0 0
    %3738 = vmatpush1.bf16.msra.mxu0 0
    %3739 = vmatprep.subr.bf16.mxu0 0
    %3740 = vmatpush1.bf16.msra.mxu0 0
    %3741 = vmatprep.subr.bf16.mxu0 0
    %3742 = vmatpush1.bf16.msra.mxu0 0
    %3743 = vmatprep.subr.bf16.mxu0 0
    %3744 = vmatpush1.bf16.msra.mxu0 0
    %3745 = vmatprep.subr.bf16.mxu0 0
    %3746 = vmatpush1.bf16.msra.mxu0 0
    %3747 = vmatprep.mubr.bf16.mxu0 0
    %3748 = vmatmul.mubr.bf16.gmra.mrb[0].mxu0 %v3520
    %v3749 = vpop.f32.mrb[0].mxu0
    %v3750 = vadd.f32 0.0, %v3749
    %v3751 = vpop.f32.mrb[0].mxu0
    %v3752 = vadd.f32 0.0, %v3751
    %v3753 = vpop.f32.mrb[0].mxu0
    %v3754 = vpop.f32.mrb[0].mxu0
    %3755 = vdwg.mxu0
    %3756 = vmatprep.subr.bf16.mxu0 0
    %3757 = vmatpush1.bf16.msra.mxu0 %v2072
    %3758 = vmatprep.subr.bf16.mxu0 0
    %3759 = vmatpush1.bf16.msra.mxu0 %v2075
    %3760 = vmatprep.subr.bf16.mxu0 0
    %3761 = vmatpush1.bf16.msra.mxu0 %v2078
    %3762 = vmatprep.subr.bf16.mxu0 0
    %3763 = vmatpush1.bf16.msra.mxu0 %v2081
    %3764 = vmatprep.subr.bf16.mxu0 0
    %3765 = vmatpush1.bf16.msra.mxu0 %v2084
    %3766 = vmatprep.subr.bf16.mxu0 0
    %3767 = vmatpush1.bf16.msra.mxu0 %v2087
    %3768 = vmatprep.subr.bf16.mxu0 0
    %3769 = vmatpush1.bf16.msra.mxu0 %v2090
    %3770 = vmatprep.subr.bf16.mxu0 0
    %3771 = vmatpush1.bf16.msra.mxu0 %v2093
    %3772 = vmatprep.subr.bf16.mxu0 0
    %3773 = vmatpush1.bf16.msra.mxu0 0
    %3774 = vmatprep.subr.bf16.mxu0 0
    %3775 = vmatpush1.bf16.msra.mxu0 0
    %3776 = vmatprep.subr.bf16.mxu0 0
    %3777 = vmatpush1.bf16.msra.mxu0 0
    %3778 = vmatprep.subr.bf16.mxu0 0
    %3779 = vmatpush1.bf16.msra.mxu0 0
    %3780 = vmatprep.subr.bf16.mxu0 0
    %3781 = vmatpush1.bf16.msra.mxu0 0
    %3782 = vmatprep.subr.bf16.mxu0 0
    %3783 = vmatpush1.bf16.msra.mxu0 0
    %3784 = vmatprep.subr.bf16.mxu0 0
    %3785 = vmatpush1.bf16.msra.mxu0 0
    %3786 = vmatprep.subr.bf16.mxu0 0
    %3787 = vmatpush1.bf16.msra.mxu0 0
    %3788 = vmatprep.mubr.bf16.mxu0 0
    %3789 = vmatmul.mubr.bf16.gmra.mrb[0].mxu0 %v3520
    %v3790 = vpop.f32.mrb[0].mxu0
    %v3791 = vadd.f32 0.0, %v3790
    %v3792 = vpop.f32.mrb[0].mxu0
    %v3793 = vpop.f32.mrb[0].mxu0
    %v3794 = vpop.f32.mrb[0].mxu0
    %3795 = vdwg.mxu0
    %v3796 = vadd.f32 %v3669, %v3750
    %v3797 = vxor.u32 %v3796, 2147483648
    %v3798 = vmul.f32 %v3797, 1.442695
    %v3799 = vpow.pop %v3798
    %v3800 = vadd.f32 %v3799, 1.0
    %v3801 = vrcp.pop %v3800
    %v3802 = vmul.f32 1.0, %v3801
    %v3803 = vadd.f32 %v3671, %v3752
    %v3804 = vxor.u32 %v3803, 2147483648
    %v3805 = vmul.f32 %v3804, 1.442695
    %v3806 = vpow.pop %v3805
    %v3807 = vadd.f32 %v3806, 1.0
    %v3808 = vrcp.pop %v3807
    %v3809 = vmul.f32 1.0, %v3808
    %v3810 = vadd.f32 %v3791, %v2217
    %v3811 = vmul.f32 %v3802, %v3810
    %v3812 = vadd.f32 %v3710, %v3811
    %v3813 = vtanh.pop %v3812
    %v3814 = vsub.f32 1.0, %v3809
    %v3815 = vmul.f32 %v3814, %v3813
    %v3816 = vmul.f32 %v3809, %v3519
    %v3817 = vadd.f32 %v3815, %v3816
    %v3818 = vpack.c.bf16 %v3817, %v3817
    %3819 = vmatprep.subr.bf16.mxu0 0
    %3820 = vmatpush1.bf16.msra.mxu0 %v2266
    %3821 = vmatprep.subr.bf16.mxu0 0
    %3822 = vmatpush1.bf16.msra.mxu0 %v2267
    %3823 = vmatprep.subr.bf16.mxu0 0
    %3824 = vmatpush1.bf16.msra.mxu0 %v2268
    %3825 = vmatprep.subr.bf16.mxu0 0
    %3826 = vmatpush1.bf16.msra.mxu0 %v2269
    %3827 = vmatprep.subr.bf16.mxu0 0
    %3828 = vmatpush1.bf16.msra.mxu0 %v2270
    %3829 = vmatprep.subr.bf16.mxu0 0
    %3830 = vmatpush1.bf16.msra.mxu0 %v2271
    %3831 = vmatprep.subr.bf16.mxu0 0
    %3832 = vmatpush1.bf16.msra.mxu0 %v2272
    %3833 = vmatprep.subr.bf16.mxu0 0
    %3834 = vmatpush1.bf16.msra.mxu0 %v2273
    %3835 = vmatprep.subr.bf16.mxu0 0
    %3836 = vmatpush1.bf16.msra.mxu0 0
    %3837 = vmatprep.subr.bf16.mxu0 0
    %3838 = vmatpush1.bf16.msra.mxu0 0
    %3839 = vmatprep.subr.bf16.mxu0 0
    %3840 = vmatpush1.bf16.msra.mxu0 0
    %3841 = vmatprep.subr.bf16.mxu0 0
    %3842 = vmatpush1.bf16.msra.mxu0 0
    %3843 = vmatprep.subr.bf16.mxu0 0
    %3844 = vmatpush1.bf16.msra.mxu0 0
    %3845 = vmatprep.subr.bf16.mxu0 0
    %3846 = vmatpush1.bf16.msra.mxu0 0
    %3847 = vmatprep.subr.bf16.mxu0 0
    %3848 = vmatpush1.bf16.msra.mxu0 0
    %3849 = vmatprep.subr.bf16.mxu0 0
    %3850 = vmatpush1.bf16.msra.mxu0 0
    %3851 = vmatprep.mubr.bf16.mxu0 0
    %3852 = vmatmul.mubr.bf16.gmra.mrb[0].mxu0 %v3818
    %v3853 = vpop.f32.mrb[0].mxu0
    %v3854 = vadd.f32 %v2232, %v3853
    %v3855 = vpop.f32.mrb[0].mxu0
    %v3856 = vpop.f32.mrb[0].mxu0
    %v3857 = vpop.f32.mrb[0].mxu0
    %3858 = vdwg.mxu0
    %3859 = vmax.xlane.f32.xlu0 %v3854
    %v3860 = vpop.xlane.xlu0 %3859
    %v3861 = vsub.f32 %v3854, %v3860
    %v3862 = vmul.f32 %v3861, 1.442695
    %v3863 = vpow.pop %v3862
    %3864 = vadd.xlane.f32.xlu0 %v3863
    %v3865 = vpop.xlane.xlu0 %3864
    %v3866 = vlog2.pop %v3865
    %v3867 = vmul.f32 %v3866, 0.6931472
    %v3868 = vsub.f32 %v3861, %v3867
    %s3869 = scalar_lea.vmem %s13, 40
    %3870 = vst [vmem:[%s3869] sm:$0xff] %v3868
    %vm3871 = vcmp.ge.f32.partialorder %v3854, %v3860
    %v3872 = vsel %vm3871, %v151, 128
    %v3873 = vand.u32 %v3872, 65535
    %v3874 = vshra.s32 %v3872, 16
    %v3875 = vcvt.s32.f32 %v3873
    %v3876 = vcvt.s32.f32 %v3874
    %3877 = vmin.xlane.f32.xlu0 %v3876
    %v3878 = vpop.xlane.xlu0 %3877
    %vm3879 = vcmp.eq.f32.partialorder %v3876, %v3878
    %v3880 = vsel %vm3879, %v3875, inf
    %3881 = vmin.xlane.f32.xlu0 %v3880
    %v3882 = vpop.xlane.xlu0 %3881
    %v3883 = vcvt.f32.s32 %v3882
    %v3884 = vcvt.f32.s32 %v3878
    %v3885 = vshll.u32 %v3884, 16
    %v3886 = vadd.s32 %v3885, %v3883
    %vm3887 = vcmp.eq.s32.totalorder %v151, %v3886
    %v3888 = vsel %vm3887, 1, 0
    %v3889 = vcvt.s32.f32 %v3888
    %v3890 = vpack.c.bf16 %v3889, %v3889
    %3891 = vmatprep.subr.bf16.mxu0 0
    %3892 = vmatpush1.bf16.msra.mxu0 %v2385
    %3893 = vmatprep.subr.bf16.mxu0 0
    %3894 = vmatpush1.bf16.msra.mxu0 %v2386
    %3895 = vmatprep.subr.bf16.mxu0 0
    %3896 = vmatpush1.bf16.msra.mxu0 %v2387
    %3897 = vmatprep.subr.bf16.mxu0 0
    %3898 = vmatpush1.bf16.msra.mxu0 %v2388
    %3899 = vmatprep.subr.bf16.mxu0 0
    %3900 = vmatpush1.bf16.msra.mxu0 %v2389
    %3901 = vmatprep.subr.bf16.mxu0 0
    %3902 = vmatpush1.bf16.msra.mxu0 %v2390
    %3903 = vmatprep.subr.bf16.mxu0 0
    %3904 = vmatpush1.bf16.msra.mxu0 %v2391
    %3905 = vmatprep.subr.bf16.mxu0 0
    %3906 = vmatpush1.bf16.msra.mxu0 %v2392
    %3907 = vmatprep.subr.bf16.mxu0 0
    %3908 = vmatpush1.bf16.msra.mxu0 0
    %3909 = vmatprep.subr.bf16.mxu0 0
    %3910 = vmatpush1.bf16.msra.mxu0 0
    %3911 = vmatprep.subr.bf16.mxu0 0
    %3912 = vmatpush1.bf16.msra.mxu0 0
    %3913 = vmatprep.subr.bf16.mxu0 0
    %3914 = vmatpush1.bf16.msra.mxu0 0
    %3915 = vmatprep.subr.bf16.mxu0 0
    %3916 = vmatpush1.bf16.msra.mxu0 0
    %3917 = vmatprep.subr.bf16.mxu0 0
    %3918 = vmatpush1.bf16.msra.mxu0 0
    %3919 = vmatprep.subr.bf16.mxu0 0
    %3920 = vmatpush1.bf16.msra.mxu0 0
    %3921 = vmatprep.subr.bf16.mxu0 0
    %3922 = vmatpush1.bf16.msra.mxu0 0
    %3923 = vmatprep.mubr.bf16.mxu0 0
    %3924 = vmatmul.mubr.bf16.gmra.mrb[0].mxu0 %v3890
    %v3925 = vpop.f32.mrb[0].mxu0
    %v3926 = vadd.f32 0.0, %v3925
    %v3927 = vpop.f32.mrb[0].mxu0
    %v3928 = vpop.f32.mrb[0].mxu0
    %v3929 = vpop.f32.mrb[0].mxu0
    %3930 = vdwg.mxu0
    %v3931 = vpack.c.bf16 %v3926, %v3926
    %3932 = vmatprep.subr.bf16.mxu0 %v1861
    %3933 = vmatpush1.bf16.msra.mxu0 %v1860
    %3934 = vmatprep.subr.bf16.mxu0 %v1864
    %3935 = vmatpush1.bf16.msra.mxu0 %v1863
    %3936 = vmatprep.subr.bf16.mxu0 %v1867
    %3937 = vmatpush1.bf16.msra.mxu0 %v1866
    %3938 = vmatprep.subr.bf16.mxu0 %v1870
    %3939 = vmatpush1.bf16.msra.mxu0 %v1869
    %3940 = vmatprep.subr.bf16.mxu0 %v1873
    %3941 = vmatpush1.bf16.msra.mxu0 %v1872
    %3942 = vmatprep.subr.bf16.mxu0 %v1876
    %3943 = vmatpush1.bf16.msra.mxu0 %v1875
    %3944 = vmatprep.subr.bf16.mxu0 %v1879
    %3945 = vmatpush1.bf16.msra.mxu0 %v1878
    %3946 = vmatprep.subr.bf16.mxu0 %v1882
    %3947 = vmatpush1.bf16.msra.mxu0 %v1881
    %3948 = vmatprep.subr.bf16.mxu0 0
    %3949 = vmatpush1.bf16.msra.mxu0 0
    %3950 = vmatprep.subr.bf16.mxu0 0
    %3951 = vmatpush1.bf16.msra.mxu0 0
    %3952 = vmatprep.subr.bf16.mxu0 0
    %3953 = vmatpush1.bf16.msra.mxu0 0
    %3954 = vmatprep.subr.bf16.mxu0 0
    %3955 = vmatpush1.bf16.msra.mxu0 0
    %3956 = vmatprep.subr.bf16.mxu0 0
    %3957 = vmatpush1.bf16.msra.mxu0 0
    %3958 = vmatprep.subr.bf16.mxu0 0
    %3959 = vmatpush1.bf16.msra.mxu0 0
    %3960 = vmatprep.subr.bf16.mxu0 0
    %3961 = vmatpush1.bf16.msra.mxu0 0
    %3962 = vmatprep.subr.bf16.mxu0 0
    %3963 = vmatpush1.bf16.msra.mxu0 0
    %3964 = vmatprep.mubr.bf16.mxu0 0
    %3965 = vmatmul.mubr.bf16.gmra.mrb[0].mxu0 %v3931
    %v3966 = vpop.f32.mrb[0].mxu0
    %v3967 = vadd.f32 %v1768, %v3966
    %v3968 = vpop.f32.mrb[0].mxu0
    %v3969 = vadd.f32 %v1772, %v3968
    %v3970 = vpop.f32.mrb[0].mxu0
    %v3971 = vpop.f32.mrb[0].mxu0
    %3972 = vdwg.mxu0
    %3973 = vmatprep.subr.bf16.mxu0 0
    %3974 = vmatpush1.bf16.msra.mxu0 %v1862
    %3975 = vmatprep.subr.bf16.mxu0 0
    %3976 = vmatpush1.bf16.msra.mxu0 %v1865
    %3977 = vmatprep.subr.bf16.mxu0 0
    %3978 = vmatpush1.bf16.msra.mxu0 %v1868
    %3979 = vmatprep.subr.bf16.mxu0 0
    %3980 = vmatpush1.bf16.msra.mxu0 %v1871
    %3981 = vmatprep.subr.bf16.mxu0 0
    %3982 = vmatpush1.bf16.msra.mxu0 %v1874
    %3983 = vmatprep.subr.bf16.mxu0 0
    %3984 = vmatpush1.bf16.msra.mxu0 %v1877
    %3985 = vmatprep.subr.bf16.mxu0 0
    %3986 = vmatpush1.bf16.msra.mxu0 %v1880
    %3987 = vmatprep.subr.bf16.mxu0 0
    %3988 = vmatpush1.bf16.msra.mxu0 %v1883
    %3989 = vmatprep.subr.bf16.mxu0 0
    %3990 = vmatpush1.bf16.msra.mxu0 0
    %3991 = vmatprep.subr.bf16.mxu0 0
    %3992 = vmatpush1.bf16.msra.mxu0 0
    %3993 = vmatprep.subr.bf16.mxu0 0
    %3994 = vmatpush1.bf16.msra.mxu0 0
    %3995 = vmatprep.subr.bf16.mxu0 0
    %3996 = vmatpush1.bf16.msra.mxu0 0
    %3997 = vmatprep.subr.bf16.mxu0 0
    %3998 = vmatpush1.bf16.msra.mxu0 0
    %3999 = vmatprep.subr.bf16.mxu0 0
    %4000 = vmatpush1.bf16.msra.mxu0 0
    %4001 = vmatprep.subr.bf16.mxu0 0
    %4002 = vmatpush1.bf16.msra.mxu0 0
    %4003 = vmatprep.subr.bf16.mxu0 0
    %4004 = vmatpush1.bf16.msra.mxu0 0
    %4005 = vmatprep.mubr.bf16.mxu0 0
    %4006 = vmatmul.mubr.bf16.gmra.mrb[0].mxu0 %v3931
    %v4007 = vpop.f32.mrb[0].mxu0
    %v4008 = vadd.f32 %v1776, %v4007
    %v4009 = vpop.f32.mrb[0].mxu0
    %v4010 = vpop.f32.mrb[0].mxu0
    %v4011 = vpop.f32.mrb[0].mxu0
    %4012 = vdwg.mxu0
    %4013 = vmatprep.subr.bf16.mxu0 %v2071
    %4014 = vmatpush1.bf16.msra.mxu0 %v2070
    %4015 = vmatprep.subr.bf16.mxu0 %v2074
    %4016 = vmatpush1.bf16.msra.mxu0 %v2073
    %4017 = vmatprep.subr.bf16.mxu0 %v2077
    %4018 = vmatpush1.bf16.msra.mxu0 %v2076
    %4019 = vmatprep.subr.bf16.mxu0 %v2080
    %4020 = vmatpush1.bf16.msra.mxu0 %v2079
    %4021 = vmatprep.subr.bf16.mxu0 %v2083
    %4022 = vmatpush1.bf16.msra.mxu0 %v2082
    %4023 = vmatprep.subr.bf16.mxu0 %v2086
    %4024 = vmatpush1.bf16.msra.mxu0 %v2085
    %4025 = vmatprep.subr.bf16.mxu0 %v2089
    %4026 = vmatpush1.bf16.msra.mxu0 %v2088
    %4027 = vmatprep.subr.bf16.mxu0 %v2092
    %4028 = vmatpush1.bf16.msra.mxu0 %v2091
    %4029 = vmatprep.subr.bf16.mxu0 0
    %4030 = vmatpush1.bf16.msra.mxu0 0
    %4031 = vmatprep.subr.bf16.mxu0 0
    %4032 = vmatpush1.bf16.msra.mxu0 0
    %4033 = vmatprep.subr.bf16.mxu0 0
    %4034 = vmatpush1.bf16.msra.mxu0 0
    %4035 = vmatprep.subr.bf16.mxu0 0
    %4036 = vmatpush1.bf16.msra.mxu0 0
    %4037 = vmatprep.subr.bf16.mxu0 0
    %4038 = vmatpush1.bf16.msra.mxu0 0
    %4039 = vmatprep.subr.bf16.mxu0 0
    %4040 = vmatpush1.bf16.msra.mxu0 0
    %4041 = vmatprep.subr.bf16.mxu0 0
    %4042 = vmatpush1.bf16.msra.mxu0 0
    %4043 = vmatprep.subr.bf16.mxu0 0
    %4044 = vmatpush1.bf16.msra.mxu0 0
    %4045 = vmatprep.mubr.bf16.mxu0 0
    %4046 = vmatmul.mubr.bf16.gmra.mrb[0].mxu0 %v3818
    %v4047 = vpop.f32.mrb[0].mxu0
    %v4048 = vadd.f32 0.0, %v4047
    %v4049 = vpop.f32.mrb[0].mxu0
    %v4050 = vadd.f32 0.0, %v4049
    %v4051 = vpop.f32.mrb[0].mxu0
    %v4052 = vpop.f32.mrb[0].mxu0
    %4053 = vdwg.mxu0
    %4054 = vmatprep.subr.bf16.mxu0 0
    %4055 = vmatpush1.bf16.msra.mxu0 %v2072
    %4056 = vmatprep.subr.bf16.mxu0 0
    %4057 = vmatpush1.bf16.msra.mxu0 %v2075
    %4058 = vmatprep.subr.bf16.mxu0 0
    %4059 = vmatpush1.bf16.msra.mxu0 %v2078
    %4060 = vmatprep.subr.bf16.mxu0 0
    %4061 = vmatpush1.bf16.msra.mxu0 %v2081
    %4062 = vmatprep.subr.bf16.mxu0 0
    %4063 = vmatpush1.bf16.msra.mxu0 %v2084
    %4064 = vmatprep.subr.bf16.mxu0 0
    %4065 = vmatpush1.bf16.msra.mxu0 %v2087
    %4066 = vmatprep.subr.bf16.mxu0 0
    %4067 = vmatpush1.bf16.msra.mxu0 %v2090
    %4068 = vmatprep.subr.bf16.mxu0 0
    %4069 = vmatpush1.bf16.msra.mxu0 %v2093
    %4070 = vmatprep.subr.bf16.mxu0 0
    %4071 = vmatpush1.bf16.msra.mxu0 0
    %4072 = vmatprep.subr.bf16.mxu0 0
    %4073 = vmatpush1.bf16.msra.mxu0 0
    %4074 = vmatprep.subr.bf16.mxu0 0
    %4075 = vmatpush1.bf16.msra.mxu0 0
    %4076 = vmatprep.subr.bf16.mxu0 0
    %4077 = vmatpush1.bf16.msra.mxu0 0
    %4078 = vmatprep.subr.bf16.mxu0 0
    %4079 = vmatpush1.bf16.msra.mxu0 0
    %4080 = vmatprep.subr.bf16.mxu0 0
    %4081 = vmatpush1.bf16.msra.mxu0 0
    %4082 = vmatprep.subr.bf16.mxu0 0
    %4083 = vmatpush1.bf16.msra.mxu0 0
    %4084 = vmatprep.subr.bf16.mxu0 0
    %4085 = vmatpush1.bf16.msra.mxu0 0
    %4086 = vmatprep.mubr.bf16.mxu0 0
    %4087 = vmatmul.mubr.bf16.gmra.mrb[0].mxu0 %v3818
    %v4088 = vpop.f32.mrb[0].mxu0
    %v4089 = vadd.f32 0.0, %v4088
    %v4090 = vpop.f32.mrb[0].mxu0
    %v4091 = vpop.f32.mrb[0].mxu0
    %v4092 = vpop.f32.mrb[0].mxu0
    %4093 = vdwg.mxu0
    %v4094 = vadd.f32 %v3967, %v4048
    %v4095 = vxor.u32 %v4094, 2147483648
    %v4096 = vmul.f32 %v4095, 1.442695
    %v4097 = vpow.pop %v4096
    %v4098 = vadd.f32 %v4097, 1.0
    %v4099 = vrcp.pop %v4098
    %v4100 = vmul.f32 1.0, %v4099
    %v4101 = vadd.f32 %v3969, %v4050
    %v4102 = vxor.u32 %v4101, 2147483648
    %v4103 = vmul.f32 %v4102, 1.442695
    %v4104 = vpow.pop %v4103
    %v4105 = vadd.f32 %v4104, 1.0
    %v4106 = vrcp.pop %v4105
    %v4107 = vmul.f32 1.0, %v4106
    %v4108 = vadd.f32 %v4089, %v2217
    %v4109 = vmul.f32 %v4100, %v4108
    %v4110 = vadd.f32 %v4008, %v4109
    %v4111 = vtanh.pop %v4110
    %v4112 = vsub.f32 1.0, %v4107
    %v4113 = vmul.f32 %v4112, %v4111
    %v4114 = vmul.f32 %v4107, %v3817
    %v4115 = vadd.f32 %v4113, %v4114
    %v4116 = vpack.c.bf16 %v4115, %v4115
    %4117 = vmatprep.subr.bf16.mxu0 0
    %4118 = vmatpush1.bf16.msra.mxu0 %v2266
    %4119 = vmatprep.subr.bf16.mxu0 0
    %4120 = vmatpush1.bf16.msra.mxu0 %v2267
    %4121 = vmatprep.subr.bf16.mxu0 0
    %4122 = vmatpush1.bf16.msra.mxu0 %v2268
    %4123 = vmatprep.subr.bf16.mxu0 0
    %4124 = vmatpush1.bf16.msra.mxu0 %v2269
    %4125 = vmatprep.subr.bf16.mxu0 0
    %4126 = vmatpush1.bf16.msra.mxu0 %v2270
    %4127 = vmatprep.subr.bf16.mxu0 0
    %4128 = vmatpush1.bf16.msra.mxu0 %v2271
    %4129 = vmatprep.subr.bf16.mxu0 0
    %4130 = vmatpush1.bf16.msra.mxu0 %v2272
    %4131 = vmatprep.subr.bf16.mxu0 0
    %4132 = vmatpush1.bf16.msra.mxu0 %v2273
    %4133 = vmatprep.subr.bf16.mxu0 0
    %4134 = vmatpush1.bf16.msra.mxu0 0
    %4135 = vmatprep.subr.bf16.mxu0 0
    %4136 = vmatpush1.bf16.msra.mxu0 0
    %4137 = vmatprep.subr.bf16.mxu0 0
    %4138 = vmatpush1.bf16.msra.mxu0 0
    %4139 = vmatprep.subr.bf16.mxu0 0
    %4140 = vmatpush1.bf16.msra.mxu0 0
    %4141 = vmatprep.subr.bf16.mxu0 0
    %4142 = vmatpush1.bf16.msra.mxu0 0
    %4143 = vmatprep.subr.bf16.mxu0 0
    %4144 = vmatpush1.bf16.msra.mxu0 0
    %4145 = vmatprep.subr.bf16.mxu0 0
    %4146 = vmatpush1.bf16.msra.mxu0 0
    %4147 = vmatprep.subr.bf16.mxu0 0
    %4148 = vmatpush1.bf16.msra.mxu0 0
    %4149 = vmatprep.mubr.bf16.mxu0 0
    %4150 = vmatmul.mubr.bf16.gmra.mrb[0].mxu0 %v4116
    %v4151 = vpop.f32.mrb[0].mxu0
    %v4152 = vadd.f32 %v2232, %v4151
    %v4153 = vpop.f32.mrb[0].mxu0
    %v4154 = vpop.f32.mrb[0].mxu0
    %v4155 = vpop.f32.mrb[0].mxu0
    %4156 = vdwg.mxu0
    %4157 = vmax.xlane.f32.xlu0 %v4152
    %v4158 = vpop.xlane.xlu0 %4157
    %v4159 = vsub.f32 %v4152, %v4158
    %v4160 = vmul.f32 %v4159, 1.442695
    %v4161 = vpow.pop %v4160
    %4162 = vadd.xlane.f32.xlu0 %v4161
    %v4163 = vpop.xlane.xlu0 %4162
    %v4164 = vlog2.pop %v4163
    %v4165 = vmul.f32 %v4164, 0.6931472
    %v4166 = vsub.f32 %v4159, %v4165
    %s4167 = scalar_lea.vmem %s13, 48
    %4168 = vst [vmem:[%s4167] sm:$0xff] %v4166
    %vm4169 = vcmp.ge.f32.partialorder %v4152, %v4158
    %v4170 = vsel %vm4169, %v151, 128
    %v4171 = vand.u32 %v4170, 65535
    %v4172 = vshra.s32 %v4170, 16
    %v4173 = vcvt.s32.f32 %v4171
    %v4174 = vcvt.s32.f32 %v4172
    %4175 = vmin.xlane.f32.xlu0 %v4174
    %v4176 = vpop.xlane.xlu0 %4175
    %vm4177 = vcmp.eq.f32.partialorder %v4174, %v4176
    %v4178 = vsel %vm4177, %v4173, inf
    %4179 = vmin.xlane.f32.xlu0 %v4178
    %v4180 = vpop.xlane.xlu0 %4179
    %v4181 = vcvt.f32.s32 %v4180
    %v4182 = vcvt.f32.s32 %v4176
    %v4183 = vshll.u32 %v4182, 16
    %v4184 = vadd.s32 %v4183, %v4181
    %vm4185 = vcmp.eq.s32.totalorder %v151, %v4184
    %v4186 = vsel %vm4185, 1, 0
    %v4187 = vcvt.s32.f32 %v4186
    %v4188 = vpack.c.bf16 %v4187, %v4187
    %4189 = vmatprep.subr.bf16.mxu0 0
    %4190 = vmatpush1.bf16.msra.mxu0 %v2385
    %4191 = vmatprep.subr.bf16.mxu0 0
    %4192 = vmatpush1.bf16.msra.mxu0 %v2386
    %4193 = vmatprep.subr.bf16.mxu0 0
    %4194 = vmatpush1.bf16.msra.mxu0 %v2387
    %4195 = vmatprep.subr.bf16.mxu0 0
    %4196 = vmatpush1.bf16.msra.mxu0 %v2388
    %4197 = vmatprep.subr.bf16.mxu0 0
    %4198 = vmatpush1.bf16.msra.mxu0 %v2389
    %4199 = vmatprep.subr.bf16.mxu0 0
    %4200 = vmatpush1.bf16.msra.mxu0 %v2390
    %4201 = vmatprep.subr.bf16.mxu0 0
    %4202 = vmatpush1.bf16.msra.mxu0 %v2391
    %4203 = vmatprep.subr.bf16.mxu0 0
    %4204 = vmatpush1.bf16.msra.mxu0 %v2392
    %4205 = vmatprep.subr.bf16.mxu0 0
    %4206 = vmatpush1.bf16.msra.mxu0 0
    %4207 = vmatprep.subr.bf16.mxu0 0
    %4208 = vmatpush1.bf16.msra.mxu0 0
    %4209 = vmatprep.subr.bf16.mxu0 0
    %4210 = vmatpush1.bf16.msra.mxu0 0
    %4211 = vmatprep.subr.bf16.mxu0 0
    %4212 = vmatpush1.bf16.msra.mxu0 0
    %4213 = vmatprep.subr.bf16.mxu0 0
    %4214 = vmatpush1.bf16.msra.mxu0 0
    %4215 = vmatprep.subr.bf16.mxu0 0
    %4216 = vmatpush1.bf16.msra.mxu0 0
    %4217 = vmatprep.subr.bf16.mxu0 0
    %4218 = vmatpush1.bf16.msra.mxu0 0
    %4219 = vmatprep.subr.bf16.mxu0 0
    %4220 = vmatpush1.bf16.msra.mxu0 0
    %4221 = vmatprep.mubr.bf16.mxu0 0
    %4222 = vmatmul.mubr.bf16.gmra.mrb[0].mxu0 %v4188
    %v4223 = vpop.f32.mrb[0].mxu0
    %v4224 = vadd.f32 0.0, %v4223
    %v4225 = vpop.f32.mrb[0].mxu0
    %v4226 = vpop.f32.mrb[0].mxu0
    %v4227 = vpop.f32.mrb[0].mxu0
    %4228 = vdwg.mxu0
    %v4229 = vpack.c.bf16 %v4224, %v4224
    %4230 = vmatprep.subr.bf16.mxu0 %v1861
    %4231 = vmatpush1.bf16.msra.mxu0 %v1860
    %4232 = vmatprep.subr.bf16.mxu0 %v1864
    %4233 = vmatpush1.bf16.msra.mxu0 %v1863
    %4234 = vmatprep.subr.bf16.mxu0 %v1867
    %4235 = vmatpush1.bf16.msra.mxu0 %v1866
    %4236 = vmatprep.subr.bf16.mxu0 %v1870
    %4237 = vmatpush1.bf16.msra.mxu0 %v1869
    %4238 = vmatprep.subr.bf16.mxu0 %v1873
    %4239 = vmatpush1.bf16.msra.mxu0 %v1872
    %4240 = vmatprep.subr.bf16.mxu0 %v1876
    %4241 = vmatpush1.bf16.msra.mxu0 %v1875
    %4242 = vmatprep.subr.bf16.mxu0 %v1879
    %4243 = vmatpush1.bf16.msra.mxu0 %v1878
    %4244 = vmatprep.subr.bf16.mxu0 %v1882
    %4245 = vmatpush1.bf16.msra.mxu0 %v1881
    %4246 = vmatprep.subr.bf16.mxu0 0
    %4247 = vmatpush1.bf16.msra.mxu0 0
    %4248 = vmatprep.subr.bf16.mxu0 0
    %4249 = vmatpush1.bf16.msra.mxu0 0
    %4250 = vmatprep.subr.bf16.mxu0 0
    %4251 = vmatpush1.bf16.msra.mxu0 0
    %4252 = vmatprep.subr.bf16.mxu0 0
    %4253 = vmatpush1.bf16.msra.mxu0 0
    %4254 = vmatprep.subr.bf16.mxu0 0
    %4255 = vmatpush1.bf16.msra.mxu0 0
    %4256 = vmatprep.subr.bf16.mxu0 0
    %4257 = vmatpush1.bf16.msra.mxu0 0
    %4258 = vmatprep.subr.bf16.mxu0 0
    %4259 = vmatpush1.bf16.msra.mxu0 0
    %4260 = vmatprep.subr.bf16.mxu0 0
    %4261 = vmatpush1.bf16.msra.mxu0 0
    %4262 = vmatprep.mubr.bf16.mxu0 0
    %4263 = vmatmul.mubr.bf16.gmra.mrb[0].mxu0 %v4229
    %v4264 = vpop.f32.mrb[0].mxu0
    %v4265 = vadd.f32 %v1768, %v4264
    %v4266 = vpop.f32.mrb[0].mxu0
    %v4267 = vadd.f32 %v1772, %v4266
    %v4268 = vpop.f32.mrb[0].mxu0
    %v4269 = vpop.f32.mrb[0].mxu0
    %4270 = vdwg.mxu0
    %4271 = vmatprep.subr.bf16.mxu0 0
    %4272 = vmatpush1.bf16.msra.mxu0 %v1862
    %4273 = vmatprep.subr.bf16.mxu0 0
    %4274 = vmatpush1.bf16.msra.mxu0 %v1865
    %4275 = vmatprep.subr.bf16.mxu0 0
    %4276 = vmatpush1.bf16.msra.mxu0 %v1868
    %4277 = vmatprep.subr.bf16.mxu0 0
    %4278 = vmatpush1.bf16.msra.mxu0 %v1871
    %4279 = vmatprep.subr.bf16.mxu0 0
    %4280 = vmatpush1.bf16.msra.mxu0 %v1874
    %4281 = vmatprep.subr.bf16.mxu0 0
    %4282 = vmatpush1.bf16.msra.mxu0 %v1877
    %4283 = vmatprep.subr.bf16.mxu0 0
    %4284 = vmatpush1.bf16.msra.mxu0 %v1880
    %4285 = vmatprep.subr.bf16.mxu0 0
    %4286 = vmatpush1.bf16.msra.mxu0 %v1883
    %4287 = vmatprep.subr.bf16.mxu0 0
    %4288 = vmatpush1.bf16.msra.mxu0 0
    %4289 = vmatprep.subr.bf16.mxu0 0
    %4290 = vmatpush1.bf16.msra.mxu0 0
    %4291 = vmatprep.subr.bf16.mxu0 0
    %4292 = vmatpush1.bf16.msra.mxu0 0
    %4293 = vmatprep.subr.bf16.mxu0 0
    %4294 = vmatpush1.bf16.msra.mxu0 0
    %4295 = vmatprep.subr.bf16.mxu0 0
    %4296 = vmatpush1.bf16.msra.mxu0 0
    %4297 = vmatprep.subr.bf16.mxu0 0
    %4298 = vmatpush1.bf16.msra.mxu0 0
    %4299 = vmatprep.subr.bf16.mxu0 0
    %4300 = vmatpush1.bf16.msra.mxu0 0
    %4301 = vmatprep.subr.bf16.mxu0 0
    %4302 = vmatpush1.bf16.msra.mxu0 0
    %4303 = vmatprep.mubr.bf16.mxu0 0
    %4304 = vmatmul.mubr.bf16.gmra.mrb[0].mxu0 %v4229
    %v4305 = vpop.f32.mrb[0].mxu0
    %v4306 = vadd.f32 %v1776, %v4305
    %v4307 = vpop.f32.mrb[0].mxu0
    %v4308 = vpop.f32.mrb[0].mxu0
    %v4309 = vpop.f32.mrb[0].mxu0
    %4310 = vdwg.mxu0
    %4311 = vmatprep.subr.bf16.mxu0 %v2071
    %4312 = vmatpush1.bf16.msra.mxu0 %v2070
    %4313 = vmatprep.subr.bf16.mxu0 %v2074
    %4314 = vmatpush1.bf16.msra.mxu0 %v2073
    %4315 = vmatprep.subr.bf16.mxu0 %v2077
    %4316 = vmatpush1.bf16.msra.mxu0 %v2076
    %4317 = vmatprep.subr.bf16.mxu0 %v2080
    %4318 = vmatpush1.bf16.msra.mxu0 %v2079
    %4319 = vmatprep.subr.bf16.mxu0 %v2083
    %4320 = vmatpush1.bf16.msra.mxu0 %v2082
    %4321 = vmatprep.subr.bf16.mxu0 %v2086
    %4322 = vmatpush1.bf16.msra.mxu0 %v2085
    %4323 = vmatprep.subr.bf16.mxu0 %v2089
    %4324 = vmatpush1.bf16.msra.mxu0 %v2088
    %4325 = vmatprep.subr.bf16.mxu0 %v2092
    %4326 = vmatpush1.bf16.msra.mxu0 %v2091
    %4327 = vmatprep.subr.bf16.mxu0 0
    %4328 = vmatpush1.bf16.msra.mxu0 0
    %4329 = vmatprep.subr.bf16.mxu0 0
    %4330 = vmatpush1.bf16.msra.mxu0 0
    %4331 = vmatprep.subr.bf16.mxu0 0
    %4332 = vmatpush1.bf16.msra.mxu0 0
    %4333 = vmatprep.subr.bf16.mxu0 0
    %4334 = vmatpush1.bf16.msra.mxu0 0
    %4335 = vmatprep.subr.bf16.mxu0 0
    %4336 = vmatpush1.bf16.msra.mxu0 0
    %4337 = vmatprep.subr.bf16.mxu0 0
    %4338 = vmatpush1.bf16.msra.mxu0 0
    %4339 = vmatprep.subr.bf16.mxu0 0
    %4340 = vmatpush1.bf16.msra.mxu0 0
    %4341 = vmatprep.subr.bf16.mxu0 0
    %4342 = vmatpush1.bf16.msra.mxu0 0
    %4343 = vmatprep.mubr.bf16.mxu0 0
    %4344 = vmatmul.mubr.bf16.gmra.mrb[0].mxu0 %v4116
    %v4345 = vpop.f32.mrb[0].mxu0
    %v4346 = vadd.f32 0.0, %v4345
    %v4347 = vpop.f32.mrb[0].mxu0
    %v4348 = vadd.f32 0.0, %v4347
    %v4349 = vpop.f32.mrb[0].mxu0
    %v4350 = vpop.f32.mrb[0].mxu0
    %4351 = vdwg.mxu0
    %4352 = vmatprep.subr.bf16.mxu0 0
    %4353 = vmatpush1.bf16.msra.mxu0 %v2072
    %4354 = vmatprep.subr.bf16.mxu0 0
    %4355 = vmatpush1.bf16.msra.mxu0 %v2075
    %4356 = vmatprep.subr.bf16.mxu0 0
    %4357 = vmatpush1.bf16.msra.mxu0 %v2078
    %4358 = vmatprep.subr.bf16.mxu0 0
    %4359 = vmatpush1.bf16.msra.mxu0 %v2081
    %4360 = vmatprep.subr.bf16.mxu0 0
    %4361 = vmatpush1.bf16.msra.mxu0 %v2084
    %4362 = vmatprep.subr.bf16.mxu0 0
    %4363 = vmatpush1.bf16.msra.mxu0 %v2087
    %4364 = vmatprep.subr.bf16.mxu0 0
    %4365 = vmatpush1.bf16.msra.mxu0 %v2090
    %4366 = vmatprep.subr.bf16.mxu0 0
    %4367 = vmatpush1.bf16.msra.mxu0 %v2093
    %4368 = vmatprep.subr.bf16.mxu0 0
    %4369 = vmatpush1.bf16.msra.mxu0 0
    %4370 = vmatprep.subr.bf16.mxu0 0
    %4371 = vmatpush1.bf16.msra.mxu0 0
    %4372 = vmatprep.subr.bf16.mxu0 0
    %4373 = vmatpush1.bf16.msra.mxu0 0
    %4374 = vmatprep.subr.bf16.mxu0 0
    %4375 = vmatpush1.bf16.msra.mxu0 0
    %4376 = vmatprep.subr.bf16.mxu0 0
    %4377 = vmatpush1.bf16.msra.mxu0 0
    %4378 = vmatprep.subr.bf16.mxu0 0
    %4379 = vmatpush1.bf16.msra.mxu0 0
    %4380 = vmatprep.subr.bf16.mxu0 0
    %4381 = vmatpush1.bf16.msra.mxu0 0
    %4382 = vmatprep.subr.bf16.mxu0 0
    %4383 = vmatpush1.bf16.msra.mxu0 0
    %4384 = vmatprep.mubr.bf16.mxu0 0
    %4385 = vmatmul.mubr.bf16.gmra.mrb[0].mxu0 %v4116
    %v4386 = vpop.f32.mrb[0].mxu0
    %v4387 = vadd.f32 0.0, %v4386
    %v4388 = vpop.f32.mrb[0].mxu0
    %v4389 = vpop.f32.mrb[0].mxu0
    %v4390 = vpop.f32.mrb[0].mxu0
    %4391 = vdwg.mxu0
    %v4392 = vadd.f32 %v4265, %v4346
    %v4393 = vxor.u32 %v4392, 2147483648
    %v4394 = vmul.f32 %v4393, 1.442695
    %v4395 = vpow.pop %v4394
    %v4396 = vadd.f32 %v4395, 1.0
    %v4397 = vrcp.pop %v4396
    %v4398 = vmul.f32 1.0, %v4397
    %v4399 = vadd.f32 %v4267, %v4348
    %v4400 = vxor.u32 %v4399, 2147483648
    %v4401 = vmul.f32 %v4400, 1.442695
    %v4402 = vpow.pop %v4401
    %v4403 = vadd.f32 %v4402, 1.0
    %v4404 = vrcp.pop %v4403
    %v4405 = vmul.f32 1.0, %v4404
    %v4406 = vadd.f32 %v4387, %v2217
    %v4407 = vmul.f32 %v4398, %v4406
    %v4408 = vadd.f32 %v4306, %v4407
    %v4409 = vtanh.pop %v4408
    %v4410 = vsub.f32 1.0, %v4405
    %v4411 = vmul.f32 %v4410, %v4409
    %v4412 = vmul.f32 %v4405, %v4115
    %v4413 = vadd.f32 %v4411, %v4412
    %v4414 = vpack.c.bf16 %v4413, %v4413
    %4415 = vmatprep.subr.bf16.mxu0 0
    %4416 = vmatpush1.bf16.msra.mxu0 %v2266
    %4417 = vmatprep.subr.bf16.mxu0 0
    %4418 = vmatpush1.bf16.msra.mxu0 %v2267
    %4419 = vmatprep.subr.bf16.mxu0 0
    %4420 = vmatpush1.bf16.msra.mxu0 %v2268
    %4421 = vmatprep.subr.bf16.mxu0 0
    %4422 = vmatpush1.bf16.msra.mxu0 %v2269
    %4423 = vmatprep.subr.bf16.mxu0 0
    %4424 = vmatpush1.bf16.msra.mxu0 %v2270
    %4425 = vmatprep.subr.bf16.mxu0 0
    %4426 = vmatpush1.bf16.msra.mxu0 %v2271
    %4427 = vmatprep.subr.bf16.mxu0 0
    %4428 = vmatpush1.bf16.msra.mxu0 %v2272
    %4429 = vmatprep.subr.bf16.mxu0 0
    %4430 = vmatpush1.bf16.msra.mxu0 %v2273
    %4431 = vmatprep.subr.bf16.mxu0 0
    %4432 = vmatpush1.bf16.msra.mxu0 0
    %4433 = vmatprep.subr.bf16.mxu0 0
    %4434 = vmatpush1.bf16.msra.mxu0 0
    %4435 = vmatprep.subr.bf16.mxu0 0
    %4436 = vmatpush1.bf16.msra.mxu0 0
    %4437 = vmatprep.subr.bf16.mxu0 0
    %4438 = vmatpush1.bf16.msra.mxu0 0
    %4439 = vmatprep.subr.bf16.mxu0 0
    %4440 = vmatpush1.bf16.msra.mxu0 0
    %4441 = vmatprep.subr.bf16.mxu0 0
    %4442 = vmatpush1.bf16.msra.mxu0 0
    %4443 = vmatprep.subr.bf16.mxu0 0
    %4444 = vmatpush1.bf16.msra.mxu0 0
    %4445 = vmatprep.subr.bf16.mxu0 0
    %4446 = vmatpush1.bf16.msra.mxu0 0
    %4447 = vmatprep.mubr.bf16.mxu0 0
    %4448 = vmatmul.mubr.bf16.gmra.mrb[0].mxu0 %v4414
    %v4449 = vpop.f32.mrb[0].mxu0
    %v4450 = vadd.f32 %v2232, %v4449
    %v4451 = vpop.f32.mrb[0].mxu0
    %v4452 = vpop.f32.mrb[0].mxu0
    %v4453 = vpop.f32.mrb[0].mxu0
    %4454 = vdwg.mxu0
    %4455 = vmax.xlane.f32.xlu0 %v4450
    %v4456 = vpop.xlane.xlu0 %4455
    %v4457 = vsub.f32 %v4450, %v4456
    %v4458 = vmul.f32 %v4457, 1.442695
    %v4459 = vpow.pop %v4458
    %4460 = vadd.xlane.f32.xlu0 %v4459
    %v4461 = vpop.xlane.xlu0 %4460
    %v4462 = vlog2.pop %v4461
    %v4463 = vmul.f32 %v4462, 0.6931472
    %v4464 = vsub.f32 %v4457, %v4463
    %s4465 = scalar_lea.vmem %s13, 56
    %4466 = vst [vmem:[%s4465] sm:$0xff] %v4464
    %4467 = vst [vmem:[%s14] sm:$0xff] %v4413
    // Predicated region
    $region86: #{model_forward.1} parent=1 // pred_check
      _
    $region87: #{model_forward.1} parent=1 // pred_check_branch
      %4469 = sbr.rel (0) target = $region89
    $region88: #{model_forward.1} parent=1 // pred_region
      _
    $region89: #{model_forward.1} parent=1 // pred_fallthru
      _
    // Predicated region
    $region90: #{model_forward.1} parent=1 // pred_check
      _
    $region91: #{model_forward.1} parent=1 // pred_check_branch
      %4471 = sbr.rel (0) target = $region93
    $region92: #{model_forward.1} parent=1 // pred_region
      _
    $region93: #{model_forward.1} parent=1 // pred_fallthru
      _
    // Predicated region
    $region94: #{model_forward.1} parent=1 // pred_check
      _
    $region95: #{model_forward.1} parent=1 // pred_check_branch
      %4473 = sbr.rel (0) target = $region97
    $region96: #{model_forward.1} parent=1 // pred_region
      _
    $region97: #{model_forward.1} parent=1 // pred_fallthru
      _
    // Predicated region
    $region98: #{model_forward.1} parent=1 // pred_check
      _
    $region99: #{model_forward.1} parent=1 // pred_check_branch
      %4475 = sbr.rel (0) target = $region101
    $region100: #{model_forward.1} parent=1 // pred_region
      _
    $region101: #{model_forward.1} parent=1 // pred_fallthru
      _
    %4476 = vsyncpa [#allocation3], 1
    %4477 = vsyncpa [#allocation5], 1
    %4478 = vsyncpa [#allocation8], 1
    %4479 = vsyncpa [#allocation11], 1
    %4480 = vsyncpa [#allocation14], 1

</llo_original>
